<compile_context>
chip_gen: v7x
topology: tpu7x:2x2x1
jax: 0.10.0
libtpu: 0.0.40
codegen_flags: <defaults>
</compile_context>

<pallas_src>
import numpy as np

import jax
import jax.numpy as jnp
from jax import lax
from jax.experimental import pallas as pl
from jax.experimental.pallas import tpu as pltpu

BN_EPS = 1e-5  # PyTorch BatchNorm2d default eps

# ---------------------------------------------------------------------------
# Static module configuration
# ---------------------------------------------------------------------------
N_BATCH = 2
C0, H0, W0 = 4, 16, 16            # branch 0 (high resolution)
C1, H1, W1 = 8, 8, 8              # branch 1 (low resolution)
P0 = H0 * W0                      # 256 spatial positions per image (branch 0)
P1 = H1 * W1                      # 64
M0 = N_BATCH * P0                 # 512 lane width, branch-0 activations
M1 = N_BATCH * P1                 # 128 lane width, branch-1 activations

K0 = 9 * C0 + 1                   # 37  conv contraction depth (+1 bias row)
K1 = 9 * C1 + 1                   # 73
KF01 = C1 + 1                     # 9   1x1 fuse conv (C1 -> C0) + bias
KF10 = 9 * C0 + 1                 # 37  3x3 stride-2 fuse conv (C0 -> C1)

# Weight slab layout (bf16, (128, 256)); row offsets are static.
WSLAB_R, WSLAB_C = 128, 256
R_B0 = (0, 4, 8, 12)              # branch-0: blk0.conv1, blk0.conv2, blk1.conv1, blk1.conv2
R_B1 = (16, 24, 32, 40)           # branch-1: same order
R_F01 = 48                        # fuse_layers[0][1] conv1x1
R_F10 = 52                        # fuse_layers[1][0] conv3x3 stride2
R_UP = 64                         # rows 64..127: (64, 256) nearest-2x upsample matrix

MSLAB_C = M0 + M1                 # 640: mask slab lanes [0:512]=branch0, [512:640]=branch1


# ---------------------------------------------------------------------------
# Host-side constants (masks, selection matrices) -- plain numpy, built once
# ---------------------------------------------------------------------------
def _tap_masks_image(h, w):
    """(9, h*w) 0/1 masks: tap t=(kh*3+kw) valid at p=hh*w+ww iff the shifted
    source (hh+kh-1, ww+kw-1) lies inside the image (conv zero padding)."""
    m = np.zeros((9, h * w), np.float32)
    for kh in range(3):
        for kw in range(3):
            t = kh * 3 + kw
            for hh in range(h):
                for ww in range(w):
                    if 0 <= hh + kh - 1 < h and 0 <= ww + kw - 1 < w:
                        m[t, hh * w + ww] = 1.0
    return m


def _build_mask_slab():
    m = np.zeros((9, MSLAB_C), np.float32)
    m0 = _tap_masks_image(H0, W0)
    m1 = _tap_masks_image(H1, W1)
    for n in range(N_BATCH):
        m[:, n * P0:(n + 1) * P0] = m0
        m[:, M0 + n * P1:M0 + (n + 1) * P1] = m1
    return m


def _build_up64():
    """(P1, P0) 0/1 matrix: low(8x8) @ U == nearest-2x upsample to (16x16)."""
    u = np.zeros((P1, P0), np.float32)
    for h in range(H0):
        for w in range(W0):
            u[(h // 2) * W1 + (w // 2), h * W0 + w] = 1.0
    return u


def _build_down256():
    """(P0, P1) 0/1 matrix: full(16x16) @ D picks even (h, w) == stride-2."""
    d = np.zeros((P0, P1), np.float32)
    for ho in range(H1):
        for wo in range(W1):
            d[(2 * ho) * W0 + (2 * wo), ho * W1 + wo] = 1.0
    return d


_MASK_SLAB = _build_mask_slab()
_UP64 = _build_up64()
_DOWN256 = _build_down256()


# ---------------------------------------------------------------------------
# The fused HighResolutionModule kernel
# ---------------------------------------------------------------------------
def _hr_module_kernel(x0_ref, x1_ref, w_ref, down_ref, m_ref, y0_ref, y1_ref):
    # Assemble lane-dense activations (C, N*H*W); lane = n*(H*W) + h*W + w.
    x0 = jnp.concatenate([x0_ref[0], x0_ref[1]], axis=-1)        # (C0, 512) f32
    x1 = jnp.concatenate([x1_ref[0], x1_ref[1]], axis=-1)        # (C1, 128) f32

    ones0 = jnp.ones((1, M0), jnp.float32)                       # bias rows (hoisted)
    ones1 = jnp.ones((1, M1), jnp.float32)

    def conv3x3(x, row, cout, k, w_img, m_off, ones_row):
        """3x3 'same' conv + folded BN + bias == ONE bf16 MXU matmul against an
        im2col stack of 9 rolled+masked copies + a ones (bias) row."""
        m = x.shape[-1]
        w = w_ref[row:row + cout, :k]                            # (cout, k) bf16
        pieces = []
        for kh in range(3):
            for kw in range(3):
                t = kh * 3 + kw
                off = (kh - 1) * w_img + (kw - 1)                # lane shift of the tap
                xs = x if off == 0 else pltpu.roll(x, shift=(-off) % m, axis=1)
                if t != 4:                                       # center mask is all ones
                    xs = xs * m_ref[t:t + 1, m_off:m_off + m]    # zero the padding taps
                pieces.append(xs)
        pieces.append(ones_row)                                  # bias via ones row
        stack = jnp.concatenate(pieces, axis=0).astype(jnp.bfloat16)
        return jnp.dot(w, stack, preferred_element_type=jnp.float32)

    def basic_block(x, r1, r2, cout, k, w_img, m_off, ones_row):
        out = jnp.maximum(conv3x3(x, r1, cout, k, w_img, m_off, ones_row), 0.0)
        out = conv3x3(out, r2, cout, k, w_img, m_off, ones_row) + x
        return jnp.maximum(out, 0.0)

    # ----- branch 0: two BasicBlocks at (C0, 16x16), all in VMEM/vregs -----
    z0 = basic_block(x0, R_B0[0], R_B0[1], C0, K0, W0, 0, ones0)
    z0 = basic_block(z0, R_B0[2], R_B0[3], C0, K0, W0, 0, ones0)

    # ----- branch 1: two BasicBlocks at (C1, 8x8) -----
    z1 = basic_block(x1, R_B1[0], R_B1[1], C1, K1, W1, M0, ones1)
    z1 = basic_block(z1, R_B1[2], R_B1[3], C1, K1, W1, M0, ones1)

    # ----- fuse row 0: y0 = relu(z0 + Upsample2x(BN(Conv1x1(z1)))) -----
    w01 = w_ref[R_F01:R_F01 + C0, :KF01]                         # (C0, 9) bf16
    s01 = jnp.concatenate([z1, ones1], axis=0).astype(jnp.bfloat16)
    u_lo = jnp.dot(w01, s01, preferred_element_type=jnp.float32)  # (C0, 128) f32
    up = w_ref[R_UP:R_UP + P1, :P0]                              # (64, 256) bf16
    u_hi = [jnp.dot(u_lo[:, n * P1:(n + 1) * P1].astype(jnp.bfloat16), up,
                    preferred_element_type=jnp.float32)          # (C0, 256) per image
            for n in range(N_BATCH)]
    y0 = jnp.maximum(z0 + jnp.concatenate(u_hi, axis=-1), 0.0)   # (C0, 512)
    y0_ref[0] = y0[:, :P0]
    y0_ref[1] = y0[:, P0:]

    # ----- fuse row 1: y1 = relu(BN(Conv3x3 stride2(z0)) + z1) -----
    # stride-2 conv == stride-1 'same' conv sampled at even positions; the
    # subsample is a tiny per-image 0/1 selection matmul (down_ref).
    d_full = conv3x3(z0, R_F10, C1, KF10, W0, 0, ones0)          # (C1, 512) f32
    down = down_ref[...]                                         # (256, 64) bf16
    d_lo = [jnp.dot(d_full[:, n * P0:(n + 1) * P0].astype(jnp.bfloat16), down,
                    preferred_element_type=jnp.float32)          # (C1, 64) per image
            for n in range(N_BATCH)]
    y1 = jnp.maximum(jnp.concatenate(d_lo, axis=-1) + z1, 0.0)   # (C1, 128)
    y1_ref[0] = y1[:, :P1]
    y1_ref[1] = y1[:, P1:]


# ---------------------------------------------------------------------------
# Host-side parameter folding / packing (done once, outside the hot path)
# ---------------------------------------------------------------------------
def _bn_fold(bn):
    gamma, beta, mean, var = bn
    scale = gamma / jnp.sqrt(var + BN_EPS)
    return scale, beta - mean * scale


def _fold_conv3x3(w, bn):
    """(Cout, Cin, 3, 3) conv + BN -> (Cout, 9*Cin+1): tap-major columns
    (t = kh*3 + kw) with the BN scale folded in, last column = bias."""
    scale, bias = _bn_fold(bn)
    cout, cin = w.shape[0], w.shape[1]
    wf = jnp.transpose(w, (0, 2, 3, 1)).reshape(cout, 9 * cin) * scale[:, None]
    return jnp.concatenate([wf, bias[:, None]], axis=1)


def _fold_conv1x1(w, bn):
    scale, bias = _bn_fold(bn)
    return jnp.concatenate([w[:, :, 0, 0] * scale[:, None], bias[:, None]], axis=1)


def prepare_params(params):
    """Fold BN into the conv weights and pack everything into one bf16 slab
    (+ the stride-2 selection matrix + the f32 mask slab)."""
    slab = jnp.zeros((WSLAB_R, WSLAB_C), jnp.float32)

    def put(s, row, mat):
        return s.at[row:row + mat.shape[0], :mat.shape[1]].set(mat)

    for bi, rows in ((0, R_B0), (1, R_B1)):
        blocks = params["branches"][bi]
        for blk in range(2):
            slab = put(slab, rows[2 * blk],
                       _fold_conv3x3(blocks[blk]["conv1_w"], blocks[blk]["bn1"]))
            slab = put(slab, rows[2 * blk + 1],
                       _fold_conv3x3(blocks[blk]["conv2_w"], blocks[blk]["bn2"]))
    slab = put(slab, R_F01, _fold_conv1x1(params["fuse01"]["w"], params["fuse01"]["bn"]))
    slab = put(slab, R_F10, _fold_conv3x3(params["fuse10"]["w"], params["fuse10"]["bn"]))
    slab = put(slab, R_UP, jnp.asarray(_UP64))

    return {
        "wslab": slab.astype(jnp.bfloat16),                       # 64 KiB
        "down": jnp.asarray(_DOWN256).astype(jnp.bfloat16),       # 32 KiB
        "masks": jnp.asarray(_MASK_SLAB),                         # 22.5 KiB f32
    }


def hr_module_forward(xs_nchw, packed):
    """HighResolutionModule forward.  Takes / returns a list of NCHW tensors.
    Only free reshapes on the host; one fused grid-less pallas_call."""
    x0 = xs_nchw[0].reshape(N_BATCH, C0, P0)
    x1 = xs_nchw[1].reshape(N_BATCH, C1, P1)
    y0, y1 = pl.pallas_call(
        _hr_module_kernel,
        out_shape=(jax.ShapeDtypeStruct((N_BATCH, C0, P0), jnp.float32),
                   jax.ShapeDtypeStruct((N_BATCH, C1, P1), jnp.float32)),
    )(x0, x1, packed["wslab"], packed["down"], packed["masks"])
    return [y0.reshape(N_BATCH, C0, H0, W0), y1.reshape(N_BATCH, C1, H1, W1)]


# ---------------------------------------------------------------------------
# Deterministic parameter init (shapes follow the module's __init__)
# ---------------------------------------------------------------------------
def _init_bn(key, c):
    k1, k2, k3, k4 = jax.random.split(key, 4)
    gamma = jax.random.uniform(k1, (c,), minval=0.5, maxval=1.5)
    beta = jax.random.normal(k2, (c,)) * 0.1
    mean = jax.random.normal(k3, (c,)) * 0.1
    var = jax.random.uniform(k4, (c,), minval=0.5, maxval=1.5)
    return (gamma, beta, mean, var)


def _init_conv(key, cout, cin, k):
    return jax.random.normal(key, (cout, cin, k, k), dtype=jnp.float32) * 0.1


def init_params(key, num_inchannels=(C0, C1), num_blocks=(2, 2)):
    branches = []
    for bi, c in enumerate(num_inchannels):
        blocks = []
        for _ in range(num_blocks[bi]):
            key, k1, k2, k3, k4 = jax.random.split(key, 5)
            blocks.append({
                "conv1_w": _init_conv(k1, c, c, 3),
                "bn1": _init_bn(k2, c),
                "conv2_w": _init_conv(k3, c, c, 3),
                "bn2": _init_bn(k4, c),
            })
        branches.append(blocks)
    key, k1, k2, k3, k4 = jax.random.split(key, 5)
    # fuse_layers[0][1]: Conv1x1(C1 -> C0) + BN(C0) + Upsample(2x nearest)
    fuse01 = {"w": _init_conv(k1, num_inchannels[0], num_inchannels[1], 1),
              "bn": _init_bn(k2, num_inchannels[0])}
    # fuse_layers[1][0]: Conv3x3 stride2 (C0 -> C1) + BN(C1)  (no ReLU inside)
    fuse10 = {"w": _init_conv(k3, num_inchannels[1], num_inchannels[0], 3),
              "bn": _init_bn(k4, num_inchannels[1])}
    return {"branches": branches, "fuse01": fuse01, "fuse10": fuse10}


# ---------------------------------------------------------------------------
# Pure-JAX (XLA) reference of the same module, for a numerical sanity check
# ---------------------------------------------------------------------------
def _ref_conv_bn(x, w, bn, stride):
    pad = 1 if w.shape[-1] == 3 else 0
    y = lax.conv_general_dilated(
        x, w, window_strides=(stride, stride),
        padding=((pad, pad), (pad, pad)),
        dimension_numbers=("NCHW", "OIHW", "NCHW"),
        precision=lax.Precision.HIGHEST)
    gamma, beta, mean, var = bn
    scale = gamma / jnp.sqrt(var + BN_EPS)
    return y * scale[None, :, None, None] + (beta - mean * scale)[None, :, None, None]


def _ref_forward(xs_nchw, params):
    def block(x, p):
        out = jax.nn.relu(_ref_conv_bn(x, p["conv1_w"], p["bn1"], 1))
        out = _ref_conv_bn(out, p["conv2_w"], p["bn2"], 1) + x
        return jax.nn.relu(out)

    z0, z1 = xs_nchw
    for p in params["branches"][0]:
        z0 = block(z0, p)
    for p in params["branches"][1]:
        z1 = block(z1, p)

    up = _ref_conv_bn(z1, params["fuse01"]["w"], params["fuse01"]["bn"], 1)
    up = jnp.repeat(jnp.repeat(up, 2, axis=2), 2, axis=3)     # nearest 2x (NCHW)
    y0 = jax.nn.relu(z0 + up)

    down = _ref_conv_bn(z0, params["fuse10"]["w"], params["fuse10"]["bn"], 2)
    y1 = jax.nn.relu(down + z1)
    return y0, y1


# ---------------------------------------------------------------------------
if __name__ == "__main__":
    key = jax.random.PRNGKey(0)
    kx0, kx1, kp = jax.random.split(key, 3)

    # x is a list of per-branch feature maps (NCHW, like PyTorch)
    x0 = jax.random.normal(kx0, (N_BATCH, C0, H0, W0), dtype=jnp.float32)
    x1 = jax.random.normal(kx1, (N_BATCH, C1, H1, W1), dtype=jnp.float32)
    params = init_params(kp)
    packed = prepare_params(params)     # one-time BN folding / slab packing

    fwd = jax.jit(lambda a, b: hr_module_forward([a, b], packed))
    y0, y1 = fwd(x0, x1)
    jax.block_until_ready((y0, y1))

    assert y0.shape == (N_BATCH, C0, H0, W0) and y0.dtype == jnp.float32
    assert y1.shape == (N_BATCH, C1, H1, W1) and y1.dtype == jnp.float32

    # Numerical sanity check against the f32 XLA reference (tolerance absorbs
    # the bf16 MXU operands; semantic bugs would be O(1) off).
    r0, r1 = _ref_forward([x0, x1], params)
    for got, want in ((y0, r0), (y1, r1)):
        err = float(jnp.max(jnp.abs(got - want)))
        scale = float(jnp.maximum(1.0, jnp.max(jnp.abs(want))))
        assert err <= 5e-2 * scale, (err, scale)

    print("KERNEL_OK")
</pallas_src>

<mosaic_0001>
module attributes {stable_mosaic.version = 11 : i64} {
  func.func @_hr_module_kernel(%arg0: memref<2x4x256xf32, #tpu.memory_space<vmem>>, %arg1: memref<2x8x64xf32, #tpu.memory_space<vmem>>, %arg2: memref<128x256xbf16, #tpu.memory_space<vmem>>, %arg3: memref<256x64xbf16, #tpu.memory_space<vmem>>, %arg4: memref<9x640xf32, #tpu.memory_space<vmem>>, %arg5: memref<2x4x256xf32, #tpu.memory_space<vmem>>, %arg6: memref<2x8x64xf32, #tpu.memory_space<vmem>>) attributes {dimension_semantics = [], scalar_prefetch = 0 : i64, scratch_operands = 0 : i64, tpu.core_type = #tpu.core_type<tc>} {
    %c0 = arith.constant 0 : index
    %c0_0 = arith.constant 0 : index
    %c0_1 = arith.constant 0 : index
    %0 = vector.load %arg0[%c0, %c0_0, %c0_1] : memref<2x4x256xf32, #tpu.memory_space<vmem>>, vector<1x4x256xf32>
    %1 = vector.shape_cast %0 : vector<1x4x256xf32> to vector<4x256xf32>
    %c1 = arith.constant 1 : index
    %c0_2 = arith.constant 0 : index
    %c0_3 = arith.constant 0 : index
    %2 = vector.load %arg0[%c1, %c0_2, %c0_3] : memref<2x4x256xf32, #tpu.memory_space<vmem>>, vector<1x4x256xf32>
    %3 = vector.shape_cast %2 : vector<1x4x256xf32> to vector<4x256xf32>
    %4 = tpu.concatenate %1, %3 in 1 : vector<4x256xf32>, vector<4x256xf32> -> vector<4x512xf32>
    %c0_4 = arith.constant 0 : index
    %c0_5 = arith.constant 0 : index
    %c0_6 = arith.constant 0 : index
    %5 = vector.load %arg1[%c0_4, %c0_5, %c0_6] : memref<2x8x64xf32, #tpu.memory_space<vmem>>, vector<1x8x64xf32>
    %6 = vector.shape_cast %5 : vector<1x8x64xf32> to vector<8x64xf32>
    %c1_7 = arith.constant 1 : index
    %c0_8 = arith.constant 0 : index
    %c0_9 = arith.constant 0 : index
    %7 = vector.load %arg1[%c1_7, %c0_8, %c0_9] : memref<2x8x64xf32, #tpu.memory_space<vmem>>, vector<1x8x64xf32>
    %8 = vector.shape_cast %7 : vector<1x8x64xf32> to vector<8x64xf32>
    %9 = tpu.concatenate %6, %8 in 1 : vector<8x64xf32>, vector<8x64xf32> -> vector<8x128xf32>
    %cst = arith.constant 1.000000e+00 : f32
    %10 = vector.broadcast %cst : f32 to vector<1x512xf32>
    %cst_10 = arith.constant 1.000000e+00 : f32
    %11 = vector.broadcast %cst_10 : f32 to vector<1x128xf32>
    %c0_11 = arith.constant 0 : index
    %c0_12 = arith.constant 0 : index
    %12 = vector.load %arg2[%c0_11, %c0_12] : memref<128x256xbf16, #tpu.memory_space<vmem>>, vector<4x37xbf16>
    %c17_i32 = arith.constant 17 : i32
    %13 = tpu.dynamic_rotate %4 by %c17_i32 dim 1 : vector<4x512xf32>, i32 -> vector<4x512xf32>
    %c0_13 = arith.constant 0 : index
    %c0_14 = arith.constant 0 : index
    %14 = vector.load %arg4[%c0_13, %c0_14] : memref<9x640xf32, #tpu.memory_space<vmem>>, vector<1x512xf32>
    %15 = vector.broadcast %14 : vector<1x512xf32> to vector<4x512xf32>
    %16 = arith.mulf %13, %15 : vector<4x512xf32>
    %c16_i32 = arith.constant 16 : i32
    %17 = tpu.dynamic_rotate %4 by %c16_i32 dim 1 : vector<4x512xf32>, i32 -> vector<4x512xf32>
    %c1_15 = arith.constant 1 : index
    %c0_16 = arith.constant 0 : index
    %18 = vector.load %arg4[%c1_15, %c0_16] : memref<9x640xf32, #tpu.memory_space<vmem>>, vector<1x512xf32>
    %19 = vector.broadcast %18 : vector<1x512xf32> to vector<4x512xf32>
    %20 = arith.mulf %17, %19 : vector<4x512xf32>
    %c15_i32 = arith.constant 15 : i32
    %21 = tpu.dynamic_rotate %4 by %c15_i32 dim 1 : vector<4x512xf32>, i32 -> vector<4x512xf32>
    %c2 = arith.constant 2 : index
    %c0_17 = arith.constant 0 : index
    %22 = vector.load %arg4[%c2, %c0_17] : memref<9x640xf32, #tpu.memory_space<vmem>>, vector<1x512xf32>
    %23 = vector.broadcast %22 : vector<1x512xf32> to vector<4x512xf32>
    %24 = arith.mulf %21, %23 : vector<4x512xf32>
    %c1_i32 = arith.constant 1 : i32
    %25 = tpu.dynamic_rotate %4 by %c1_i32 dim 1 : vector<4x512xf32>, i32 -> vector<4x512xf32>
    %c3 = arith.constant 3 : index
    %c0_18 = arith.constant 0 : index
    %26 = vector.load %arg4[%c3, %c0_18] : memref<9x640xf32, #tpu.memory_space<vmem>>, vector<1x512xf32>
    %27 = vector.broadcast %26 : vector<1x512xf32> to vector<4x512xf32>
    %28 = arith.mulf %25, %27 : vector<4x512xf32>
    %c511_i32 = arith.constant 511 : i32
    %29 = tpu.dynamic_rotate %4 by %c511_i32 dim 1 : vector<4x512xf32>, i32 -> vector<4x512xf32>
    %c5 = arith.constant 5 : index
    %c0_19 = arith.constant 0 : index
    %30 = vector.load %arg4[%c5, %c0_19] : memref<9x640xf32, #tpu.memory_space<vmem>>, vector<1x512xf32>
    %31 = vector.broadcast %30 : vector<1x512xf32> to vector<4x512xf32>
    %32 = arith.mulf %29, %31 : vector<4x512xf32>
    %c497_i32 = arith.constant 497 : i32
    %33 = tpu.dynamic_rotate %4 by %c497_i32 dim 1 : vector<4x512xf32>, i32 -> vector<4x512xf32>
    %c6 = arith.constant 6 : index
    %c0_20 = arith.constant 0 : index
    %34 = vector.load %arg4[%c6, %c0_20] : memref<9x640xf32, #tpu.memory_space<vmem>>, vector<1x512xf32>
    %35 = vector.broadcast %34 : vector<1x512xf32> to vector<4x512xf32>
    %36 = arith.mulf %33, %35 : vector<4x512xf32>
    %c496_i32 = arith.constant 496 : i32
    %37 = tpu.dynamic_rotate %4 by %c496_i32 dim 1 : vector<4x512xf32>, i32 -> vector<4x512xf32>
    %c7 = arith.constant 7 : index
    %c0_21 = arith.constant 0 : index
    %38 = vector.load %arg4[%c7, %c0_21] : memref<9x640xf32, #tpu.memory_space<vmem>>, vector<1x512xf32>
    %39 = vector.broadcast %38 : vector<1x512xf32> to vector<4x512xf32>
    %40 = arith.mulf %37, %39 : vector<4x512xf32>
    %c495_i32 = arith.constant 495 : i32
    %41 = tpu.dynamic_rotate %4 by %c495_i32 dim 1 : vector<4x512xf32>, i32 -> vector<4x512xf32>
    %c8 = arith.constant 8 : index
    %c0_22 = arith.constant 0 : index
    %42 = vector.load %arg4[%c8, %c0_22] : memref<9x640xf32, #tpu.memory_space<vmem>>, vector<1x512xf32>
    %43 = vector.broadcast %42 : vector<1x512xf32> to vector<4x512xf32>
    %44 = arith.mulf %41, %43 : vector<4x512xf32>
    %45 = tpu.concatenate %16, %20, %24, %28, %4, %32, %36, %40, %44, %10 in 0 : vector<4x512xf32>, vector<4x512xf32>, vector<4x512xf32>, vector<4x512xf32>, vector<4x512xf32>, vector<4x512xf32>, vector<4x512xf32>, vector<4x512xf32>, vector<4x512xf32>, vector<1x512xf32> -> vector<37x512xf32>
    %46 = arith.truncf %45 : vector<37x512xf32> to vector<37x512xbf16>
    %cst_23 = arith.constant dense<0.000000e+00> : vector<4x512xf32>
    %47 = tpu.matmul %12, %46, %cst_23 {dimension_numbers = #tpu.dot_dimension_numbers<[1], [0], [0], [1], [0, 0, 1, 1], [], []>} : vector<4x37xbf16>, vector<37x512xbf16>, vector<4x512xf32> -> vector<4x512xf32>
    %cst_24 = arith.constant 0.000000e+00 : f32
    %48 = vector.broadcast %cst_24 : f32 to vector<4x512xf32>
    %49 = arith.maximumf %47, %48 : vector<4x512xf32>
    %c4 = arith.constant 4 : index
    %c0_25 = arith.constant 0 : index
    %50 = vector.load %arg2[%c4, %c0_25] : memref<128x256xbf16, #tpu.memory_space<vmem>>, vector<4x37xbf16>
    %c17_i32_26 = arith.constant 17 : i32
    %51 = tpu.dynamic_rotate %49 by %c17_i32_26 dim 1 : vector<4x512xf32>, i32 -> vector<4x512xf32>
    %c0_27 = arith.constant 0 : index
    %c0_28 = arith.constant 0 : index
    %52 = vector.load %arg4[%c0_27, %c0_28] : memref<9x640xf32, #tpu.memory_space<vmem>>, vector<1x512xf32>
    %53 = vector.broadcast %52 : vector<1x512xf32> to vector<4x512xf32>
    %54 = arith.mulf %51, %53 : vector<4x512xf32>
    %c16_i32_29 = arith.constant 16 : i32
    %55 = tpu.dynamic_rotate %49 by %c16_i32_29 dim 1 : vector<4x512xf32>, i32 -> vector<4x512xf32>
    %c1_30 = arith.constant 1 : index
    %c0_31 = arith.constant 0 : index
    %56 = vector.load %arg4[%c1_30, %c0_31] : memref<9x640xf32, #tpu.memory_space<vmem>>, vector<1x512xf32>
    %57 = vector.broadcast %56 : vector<1x512xf32> to vector<4x512xf32>
    %58 = arith.mulf %55, %57 : vector<4x512xf32>
    %c15_i32_32 = arith.constant 15 : i32
    %59 = tpu.dynamic_rotate %49 by %c15_i32_32 dim 1 : vector<4x512xf32>, i32 -> vector<4x512xf32>
    %c2_33 = arith.constant 2 : index
    %c0_34 = arith.constant 0 : index
    %60 = vector.load %arg4[%c2_33, %c0_34] : memref<9x640xf32, #tpu.memory_space<vmem>>, vector<1x512xf32>
    %61 = vector.broadcast %60 : vector<1x512xf32> to vector<4x512xf32>
    %62 = arith.mulf %59, %61 : vector<4x512xf32>
    %c1_i32_35 = arith.constant 1 : i32
    %63 = tpu.dynamic_rotate %49 by %c1_i32_35 dim 1 : vector<4x512xf32>, i32 -> vector<4x512xf32>
    %c3_36 = arith.constant 3 : index
    %c0_37 = arith.constant 0 : index
    %64 = vector.load %arg4[%c3_36, %c0_37] : memref<9x640xf32, #tpu.memory_space<vmem>>, vector<1x512xf32>
    %65 = vector.broadcast %64 : vector<1x512xf32> to vector<4x512xf32>
    %66 = arith.mulf %63, %65 : vector<4x512xf32>
    %c511_i32_38 = arith.constant 511 : i32
    %67 = tpu.dynamic_rotate %49 by %c511_i32_38 dim 1 : vector<4x512xf32>, i32 -> vector<4x512xf32>
    %c5_39 = arith.constant 5 : index
    %c0_40 = arith.constant 0 : index
    %68 = vector.load %arg4[%c5_39, %c0_40] : memref<9x640xf32, #tpu.memory_space<vmem>>, vector<1x512xf32>
    %69 = vector.broadcast %68 : vector<1x512xf32> to vector<4x512xf32>
    %70 = arith.mulf %67, %69 : vector<4x512xf32>
    %c497_i32_41 = arith.constant 497 : i32
    %71 = tpu.dynamic_rotate %49 by %c497_i32_41 dim 1 : vector<4x512xf32>, i32 -> vector<4x512xf32>
    %c6_42 = arith.constant 6 : index
    %c0_43 = arith.constant 0 : index
    %72 = vector.load %arg4[%c6_42, %c0_43] : memref<9x640xf32, #tpu.memory_space<vmem>>, vector<1x512xf32>
    %73 = vector.broadcast %72 : vector<1x512xf32> to vector<4x512xf32>
    %74 = arith.mulf %71, %73 : vector<4x512xf32>
    %c496_i32_44 = arith.constant 496 : i32
    %75 = tpu.dynamic_rotate %49 by %c496_i32_44 dim 1 : vector<4x512xf32>, i32 -> vector<4x512xf32>
    %c7_45 = arith.constant 7 : index
    %c0_46 = arith.constant 0 : index
    %76 = vector.load %arg4[%c7_45, %c0_46] : memref<9x640xf32, #tpu.memory_space<vmem>>, vector<1x512xf32>
    %77 = vector.broadcast %76 : vector<1x512xf32> to vector<4x512xf32>
    %78 = arith.mulf %75, %77 : vector<4x512xf32>
    %c495_i32_47 = arith.constant 495 : i32
    %79 = tpu.dynamic_rotate %49 by %c495_i32_47 dim 1 : vector<4x512xf32>, i32 -> vector<4x512xf32>
    %c8_48 = arith.constant 8 : index
    %c0_49 = arith.constant 0 : index
    %80 = vector.load %arg4[%c8_48, %c0_49] : memref<9x640xf32, #tpu.memory_space<vmem>>, vector<1x512xf32>
    %81 = vector.broadcast %80 : vector<1x512xf32> to vector<4x512xf32>
    %82 = arith.mulf %79, %81 : vector<4x512xf32>
    %83 = tpu.concatenate %54, %58, %62, %66, %49, %70, %74, %78, %82, %10 in 0 : vector<4x512xf32>, vector<4x512xf32>, vector<4x512xf32>, vector<4x512xf32>, vector<4x512xf32>, vector<4x512xf32>, vector<4x512xf32>, vector<4x512xf32>, vector<4x512xf32>, vector<1x512xf32> -> vector<37x512xf32>
    %84 = arith.truncf %83 : vector<37x512xf32> to vector<37x512xbf16>
    %cst_50 = arith.constant dense<0.000000e+00> : vector<4x512xf32>
    %85 = tpu.matmul %50, %84, %cst_50 {dimension_numbers = #tpu.dot_dimension_numbers<[1], [0], [0], [1], [0, 0, 1, 1], [], []>} : vector<4x37xbf16>, vector<37x512xbf16>, vector<4x512xf32> -> vector<4x512xf32>
    %86 = arith.addf %85, %4 : vector<4x512xf32>
    %cst_51 = arith.constant 0.000000e+00 : f32
    %87 = vector.broadcast %cst_51 : f32 to vector<4x512xf32>
    %88 = arith.maximumf %86, %87 : vector<4x512xf32>
    %c8_52 = arith.constant 8 : index
    %c0_53 = arith.constant 0 : index
    %89 = vector.load %arg2[%c8_52, %c0_53] : memref<128x256xbf16, #tpu.memory_space<vmem>>, vector<4x37xbf16>
    %c17_i32_54 = arith.constant 17 : i32
    %90 = tpu.dynamic_rotate %88 by %c17_i32_54 dim 1 : vector<4x512xf32>, i32 -> vector<4x512xf32>
    %c0_55 = arith.constant 0 : index
    %c0_56 = arith.constant 0 : index
    %91 = vector.load %arg4[%c0_55, %c0_56] : memref<9x640xf32, #tpu.memory_space<vmem>>, vector<1x512xf32>
    %92 = vector.broadcast %91 : vector<1x512xf32> to vector<4x512xf32>
    %93 = arith.mulf %90, %92 : vector<4x512xf32>
    %c16_i32_57 = arith.constant 16 : i32
    %94 = tpu.dynamic_rotate %88 by %c16_i32_57 dim 1 : vector<4x512xf32>, i32 -> vector<4x512xf32>
    %c1_58 = arith.constant 1 : index
    %c0_59 = arith.constant 0 : index
    %95 = vector.load %arg4[%c1_58, %c0_59] : memref<9x640xf32, #tpu.memory_space<vmem>>, vector<1x512xf32>
    %96 = vector.broadcast %95 : vector<1x512xf32> to vector<4x512xf32>
    %97 = arith.mulf %94, %96 : vector<4x512xf32>
    %c15_i32_60 = arith.constant 15 : i32
    %98 = tpu.dynamic_rotate %88 by %c15_i32_60 dim 1 : vector<4x512xf32>, i32 -> vector<4x512xf32>
    %c2_61 = arith.constant 2 : index
    %c0_62 = arith.constant 0 : index
    %99 = vector.load %arg4[%c2_61, %c0_62] : memref<9x640xf32, #tpu.memory_space<vmem>>, vector<1x512xf32>
    %100 = vector.broadcast %99 : vector<1x512xf32> to vector<4x512xf32>
    %101 = arith.mulf %98, %100 : vector<4x512xf32>
    %c1_i32_63 = arith.constant 1 : i32
    %102 = tpu.dynamic_rotate %88 by %c1_i32_63 dim 1 : vector<4x512xf32>, i32 -> vector<4x512xf32>
    %c3_64 = arith.constant 3 : index
    %c0_65 = arith.constant 0 : index
    %103 = vector.load %arg4[%c3_64, %c0_65] : memref<9x640xf32, #tpu.memory_space<vmem>>, vector<1x512xf32>
    %104 = vector.broadcast %103 : vector<1x512xf32> to vector<4x512xf32>
    %105 = arith.mulf %102, %104 : vector<4x512xf32>
    %c511_i32_66 = arith.constant 511 : i32
    %106 = tpu.dynamic_rotate %88 by %c511_i32_66 dim 1 : vector<4x512xf32>, i32 -> vector<4x512xf32>
    %c5_67 = arith.constant 5 : index
    %c0_68 = arith.constant 0 : index
    %107 = vector.load %arg4[%c5_67, %c0_68] : memref<9x640xf32, #tpu.memory_space<vmem>>, vector<1x512xf32>
    %108 = vector.broadcast %107 : vector<1x512xf32> to vector<4x512xf32>
    %109 = arith.mulf %106, %108 : vector<4x512xf32>
    %c497_i32_69 = arith.constant 497 : i32
    %110 = tpu.dynamic_rotate %88 by %c497_i32_69 dim 1 : vector<4x512xf32>, i32 -> vector<4x512xf32>
    %c6_70 = arith.constant 6 : index
    %c0_71 = arith.constant 0 : index
    %111 = vector.load %arg4[%c6_70, %c0_71] : memref<9x640xf32, #tpu.memory_space<vmem>>, vector<1x512xf32>
    %112 = vector.broadcast %111 : vector<1x512xf32> to vector<4x512xf32>
    %113 = arith.mulf %110, %112 : vector<4x512xf32>
    %c496_i32_72 = arith.constant 496 : i32
    %114 = tpu.dynamic_rotate %88 by %c496_i32_72 dim 1 : vector<4x512xf32>, i32 -> vector<4x512xf32>
    %c7_73 = arith.constant 7 : index
    %c0_74 = arith.constant 0 : index
    %115 = vector.load %arg4[%c7_73, %c0_74] : memref<9x640xf32, #tpu.memory_space<vmem>>, vector<1x512xf32>
    %116 = vector.broadcast %115 : vector<1x512xf32> to vector<4x512xf32>
    %117 = arith.mulf %114, %116 : vector<4x512xf32>
    %c495_i32_75 = arith.constant 495 : i32
    %118 = tpu.dynamic_rotate %88 by %c495_i32_75 dim 1 : vector<4x512xf32>, i32 -> vector<4x512xf32>
    %c8_76 = arith.constant 8 : index
    %c0_77 = arith.constant 0 : index
    %119 = vector.load %arg4[%c8_76, %c0_77] : memref<9x640xf32, #tpu.memory_space<vmem>>, vector<1x512xf32>
    %120 = vector.broadcast %119 : vector<1x512xf32> to vector<4x512xf32>
    %121 = arith.mulf %118, %120 : vector<4x512xf32>
    %122 = tpu.concatenate %93, %97, %101, %105, %88, %109, %113, %117, %121, %10 in 0 : vector<4x512xf32>, vector<4x512xf32>, vector<4x512xf32>, vector<4x512xf32>, vector<4x512xf32>, vector<4x512xf32>, vector<4x512xf32>, vector<4x512xf32>, vector<4x512xf32>, vector<1x512xf32> -> vector<37x512xf32>
    %123 = arith.truncf %122 : vector<37x512xf32> to vector<37x512xbf16>
    %cst_78 = arith.constant dense<0.000000e+00> : vector<4x512xf32>
    %124 = tpu.matmul %89, %123, %cst_78 {dimension_numbers = #tpu.dot_dimension_numbers<[1], [0], [0], [1], [0, 0, 1, 1], [], []>} : vector<4x37xbf16>, vector<37x512xbf16>, vector<4x512xf32> -> vector<4x512xf32>
    %cst_79 = arith.constant 0.000000e+00 : f32
    %125 = vector.broadcast %cst_79 : f32 to vector<4x512xf32>
    %126 = arith.maximumf %124, %125 : vector<4x512xf32>
    %c12 = arith.constant 12 : index
    %c0_80 = arith.constant 0 : index
    %127 = vector.load %arg2[%c12, %c0_80] : memref<128x256xbf16, #tpu.memory_space<vmem>>, vector<4x37xbf16>
    %c17_i32_81 = arith.constant 17 : i32
    %128 = tpu.dynamic_rotate %126 by %c17_i32_81 dim 1 : vector<4x512xf32>, i32 -> vector<4x512xf32>
    %c0_82 = arith.constant 0 : index
    %c0_83 = arith.constant 0 : index
    %129 = vector.load %arg4[%c0_82, %c0_83] : memref<9x640xf32, #tpu.memory_space<vmem>>, vector<1x512xf32>
    %130 = vector.broadcast %129 : vector<1x512xf32> to vector<4x512xf32>
    %131 = arith.mulf %128, %130 : vector<4x512xf32>
    %c16_i32_84 = arith.constant 16 : i32
    %132 = tpu.dynamic_rotate %126 by %c16_i32_84 dim 1 : vector<4x512xf32>, i32 -> vector<4x512xf32>
    %c1_85 = arith.constant 1 : index
    %c0_86 = arith.constant 0 : index
    %133 = vector.load %arg4[%c1_85, %c0_86] : memref<9x640xf32, #tpu.memory_space<vmem>>, vector<1x512xf32>
    %134 = vector.broadcast %133 : vector<1x512xf32> to vector<4x512xf32>
    %135 = arith.mulf %132, %134 : vector<4x512xf32>
    %c15_i32_87 = arith.constant 15 : i32
    %136 = tpu.dynamic_rotate %126 by %c15_i32_87 dim 1 : vector<4x512xf32>, i32 -> vector<4x512xf32>
    %c2_88 = arith.constant 2 : index
    %c0_89 = arith.constant 0 : index
    %137 = vector.load %arg4[%c2_88, %c0_89] : memref<9x640xf32, #tpu.memory_space<vmem>>, vector<1x512xf32>
    %138 = vector.broadcast %137 : vector<1x512xf32> to vector<4x512xf32>
    %139 = arith.mulf %136, %138 : vector<4x512xf32>
    %c1_i32_90 = arith.constant 1 : i32
    %140 = tpu.dynamic_rotate %126 by %c1_i32_90 dim 1 : vector<4x512xf32>, i32 -> vector<4x512xf32>
    %c3_91 = arith.constant 3 : index
    %c0_92 = arith.constant 0 : index
    %141 = vector.load %arg4[%c3_91, %c0_92] : memref<9x640xf32, #tpu.memory_space<vmem>>, vector<1x512xf32>
    %142 = vector.broadcast %141 : vector<1x512xf32> to vector<4x512xf32>
    %143 = arith.mulf %140, %142 : vector<4x512xf32>
    %c511_i32_93 = arith.constant 511 : i32
    %144 = tpu.dynamic_rotate %126 by %c511_i32_93 dim 1 : vector<4x512xf32>, i32 -> vector<4x512xf32>
    %c5_94 = arith.constant 5 : index
    %c0_95 = arith.constant 0 : index
    %145 = vector.load %arg4[%c5_94, %c0_95] : memref<9x640xf32, #tpu.memory_space<vmem>>, vector<1x512xf32>
    %146 = vector.broadcast %145 : vector<1x512xf32> to vector<4x512xf32>
    %147 = arith.mulf %144, %146 : vector<4x512xf32>
    %c497_i32_96 = arith.constant 497 : i32
    %148 = tpu.dynamic_rotate %126 by %c497_i32_96 dim 1 : vector<4x512xf32>, i32 -> vector<4x512xf32>
    %c6_97 = arith.constant 6 : index
    %c0_98 = arith.constant 0 : index
    %149 = vector.load %arg4[%c6_97, %c0_98] : memref<9x640xf32, #tpu.memory_space<vmem>>, vector<1x512xf32>
    %150 = vector.broadcast %149 : vector<1x512xf32> to vector<4x512xf32>
    %151 = arith.mulf %148, %150 : vector<4x512xf32>
    %c496_i32_99 = arith.constant 496 : i32
    %152 = tpu.dynamic_rotate %126 by %c496_i32_99 dim 1 : vector<4x512xf32>, i32 -> vector<4x512xf32>
    %c7_100 = arith.constant 7 : index
    %c0_101 = arith.constant 0 : index
    %153 = vector.load %arg4[%c7_100, %c0_101] : memref<9x640xf32, #tpu.memory_space<vmem>>, vector<1x512xf32>
    %154 = vector.broadcast %153 : vector<1x512xf32> to vector<4x512xf32>
    %155 = arith.mulf %152, %154 : vector<4x512xf32>
    %c495_i32_102 = arith.constant 495 : i32
    %156 = tpu.dynamic_rotate %126 by %c495_i32_102 dim 1 : vector<4x512xf32>, i32 -> vector<4x512xf32>
    %c8_103 = arith.constant 8 : index
    %c0_104 = arith.constant 0 : index
    %157 = vector.load %arg4[%c8_103, %c0_104] : memref<9x640xf32, #tpu.memory_space<vmem>>, vector<1x512xf32>
    %158 = vector.broadcast %157 : vector<1x512xf32> to vector<4x512xf32>
    %159 = arith.mulf %156, %158 : vector<4x512xf32>
    %160 = tpu.concatenate %131, %135, %139, %143, %126, %147, %151, %155, %159, %10 in 0 : vector<4x512xf32>, vector<4x512xf32>, vector<4x512xf32>, vector<4x512xf32>, vector<4x512xf32>, vector<4x512xf32>, vector<4x512xf32>, vector<4x512xf32>, vector<4x512xf32>, vector<1x512xf32> -> vector<37x512xf32>
    %161 = arith.truncf %160 : vector<37x512xf32> to vector<37x512xbf16>
    %cst_105 = arith.constant dense<0.000000e+00> : vector<4x512xf32>
    %162 = tpu.matmul %127, %161, %cst_105 {dimension_numbers = #tpu.dot_dimension_numbers<[1], [0], [0], [1], [0, 0, 1, 1], [], []>} : vector<4x37xbf16>, vector<37x512xbf16>, vector<4x512xf32> -> vector<4x512xf32>
    %163 = arith.addf %162, %88 : vector<4x512xf32>
    %cst_106 = arith.constant 0.000000e+00 : f32
    %164 = vector.broadcast %cst_106 : f32 to vector<4x512xf32>
    %165 = arith.maximumf %163, %164 : vector<4x512xf32>
    %c16 = arith.constant 16 : index
    %c0_107 = arith.constant 0 : index
    %166 = vector.load %arg2[%c16, %c0_107] : memref<128x256xbf16, #tpu.memory_space<vmem>>, vector<8x73xbf16>
    %c9_i32 = arith.constant 9 : i32
    %167 = tpu.dynamic_rotate %9 by %c9_i32 dim 1 : vector<8x128xf32>, i32 -> vector<8x128xf32>
    %c0_108 = arith.constant 0 : index
    %c512 = arith.constant 512 : index
    %168 = vector.load %arg4[%c0_108, %c512] : memref<9x640xf32, #tpu.memory_space<vmem>>, vector<1x128xf32>
    %169 = vector.broadcast %168 : vector<1x128xf32> to vector<8x128xf32>
    %170 = arith.mulf %167, %169 : vector<8x128xf32>
    %c8_i32 = arith.constant 8 : i32
    %171 = tpu.dynamic_rotate %9 by %c8_i32 dim 1 : vector<8x128xf32>, i32 -> vector<8x128xf32>
    %c1_109 = arith.constant 1 : index
    %c512_110 = arith.constant 512 : index
    %172 = vector.load %arg4[%c1_109, %c512_110] : memref<9x640xf32, #tpu.memory_space<vmem>>, vector<1x128xf32>
    %173 = vector.broadcast %172 : vector<1x128xf32> to vector<8x128xf32>
    %174 = arith.mulf %171, %173 : vector<8x128xf32>
    %c7_i32 = arith.constant 7 : i32
    %175 = tpu.dynamic_rotate %9 by %c7_i32 dim 1 : vector<8x128xf32>, i32 -> vector<8x128xf32>
    %c2_111 = arith.constant 2 : index
    %c512_112 = arith.constant 512 : index
    %176 = vector.load %arg4[%c2_111, %c512_112] : memref<9x640xf32, #tpu.memory_space<vmem>>, vector<1x128xf32>
    %177 = vector.broadcast %176 : vector<1x128xf32> to vector<8x128xf32>
    %178 = arith.mulf %175, %177 : vector<8x128xf32>
    %c1_i32_113 = arith.constant 1 : i32
    %179 = tpu.dynamic_rotate %9 by %c1_i32_113 dim 1 : vector<8x128xf32>, i32 -> vector<8x128xf32>
    %c3_114 = arith.constant 3 : index
    %c512_115 = arith.constant 512 : index
    %180 = vector.load %arg4[%c3_114, %c512_115] : memref<9x640xf32, #tpu.memory_space<vmem>>, vector<1x128xf32>
    %181 = vector.broadcast %180 : vector<1x128xf32> to vector<8x128xf32>
    %182 = arith.mulf %179, %181 : vector<8x128xf32>
    %c127_i32 = arith.constant 127 : i32
    %183 = tpu.dynamic_rotate %9 by %c127_i32 dim 1 : vector<8x128xf32>, i32 -> vector<8x128xf32>
    %c5_116 = arith.constant 5 : index
    %c512_117 = arith.constant 512 : index
    %184 = vector.load %arg4[%c5_116, %c512_117] : memref<9x640xf32, #tpu.memory_space<vmem>>, vector<1x128xf32>
    %185 = vector.broadcast %184 : vector<1x128xf32> to vector<8x128xf32>
    %186 = arith.mulf %183, %185 : vector<8x128xf32>
    %c121_i32 = arith.constant 121 : i32
    %187 = tpu.dynamic_rotate %9 by %c121_i32 dim 1 : vector<8x128xf32>, i32 -> vector<8x128xf32>
    %c6_118 = arith.constant 6 : index
    %c512_119 = arith.constant 512 : index
    %188 = vector.load %arg4[%c6_118, %c512_119] : memref<9x640xf32, #tpu.memory_space<vmem>>, vector<1x128xf32>
    %189 = vector.broadcast %188 : vector<1x128xf32> to vector<8x128xf32>
    %190 = arith.mulf %187, %189 : vector<8x128xf32>
    %c120_i32 = arith.constant 120 : i32
    %191 = tpu.dynamic_rotate %9 by %c120_i32 dim 1 : vector<8x128xf32>, i32 -> vector<8x128xf32>
    %c7_120 = arith.constant 7 : index
    %c512_121 = arith.constant 512 : index
    %192 = vector.load %arg4[%c7_120, %c512_121] : memref<9x640xf32, #tpu.memory_space<vmem>>, vector<1x128xf32>
    %193 = vector.broadcast %192 : vector<1x128xf32> to vector<8x128xf32>
    %194 = arith.mulf %191, %193 : vector<8x128xf32>
    %c119_i32 = arith.constant 119 : i32
    %195 = tpu.dynamic_rotate %9 by %c119_i32 dim 1 : vector<8x128xf32>, i32 -> vector<8x128xf32>
    %c8_122 = arith.constant 8 : index
    %c512_123 = arith.constant 512 : index
    %196 = vector.load %arg4[%c8_122, %c512_123] : memref<9x640xf32, #tpu.memory_space<vmem>>, vector<1x128xf32>
    %197 = vector.broadcast %196 : vector<1x128xf32> to vector<8x128xf32>
    %198 = arith.mulf %195, %197 : vector<8x128xf32>
    %199 = tpu.concatenate %170, %174, %178, %182, %9, %186, %190, %194, %198, %11 in 0 : vector<8x128xf32>, vector<8x128xf32>, vector<8x128xf32>, vector<8x128xf32>, vector<8x128xf32>, vector<8x128xf32>, vector<8x128xf32>, vector<8x128xf32>, vector<8x128xf32>, vector<1x128xf32> -> vector<73x128xf32>
    %200 = arith.truncf %199 : vector<73x128xf32> to vector<73x128xbf16>
    %cst_124 = arith.constant dense<0.000000e+00> : vector<8x128xf32>
    %201 = tpu.matmul %166, %200, %cst_124 {dimension_numbers = #tpu.dot_dimension_numbers<[1], [0], [0], [1], [0, 0, 1, 1], [], []>} : vector<8x73xbf16>, vector<73x128xbf16>, vector<8x128xf32> -> vector<8x128xf32>
    %cst_125 = arith.constant 0.000000e+00 : f32
    %202 = vector.broadcast %cst_125 : f32 to vector<8x128xf32>
    %203 = arith.maximumf %201, %202 : vector<8x128xf32>
    %c24 = arith.constant 24 : index
    %c0_126 = arith.constant 0 : index
    %204 = vector.load %arg2[%c24, %c0_126] : memref<128x256xbf16, #tpu.memory_space<vmem>>, vector<8x73xbf16>
    %c9_i32_127 = arith.constant 9 : i32
    %205 = tpu.dynamic_rotate %203 by %c9_i32_127 dim 1 : vector<8x128xf32>, i32 -> vector<8x128xf32>
    %c0_128 = arith.constant 0 : index
    %c512_129 = arith.constant 512 : index
    %206 = vector.load %arg4[%c0_128, %c512_129] : memref<9x640xf32, #tpu.memory_space<vmem>>, vector<1x128xf32>
    %207 = vector.broadcast %206 : vector<1x128xf32> to vector<8x128xf32>
    %208 = arith.mulf %205, %207 : vector<8x128xf32>
    %c8_i32_130 = arith.constant 8 : i32
    %209 = tpu.dynamic_rotate %203 by %c8_i32_130 dim 1 : vector<8x128xf32>, i32 -> vector<8x128xf32>
    %c1_131 = arith.constant 1 : index
    %c512_132 = arith.constant 512 : index
    %210 = vector.load %arg4[%c1_131, %c512_132] : memref<9x640xf32, #tpu.memory_space<vmem>>, vector<1x128xf32>
    %211 = vector.broadcast %210 : vector<1x128xf32> to vector<8x128xf32>
    %212 = arith.mulf %209, %211 : vector<8x128xf32>
    %c7_i32_133 = arith.constant 7 : i32
    %213 = tpu.dynamic_rotate %203 by %c7_i32_133 dim 1 : vector<8x128xf32>, i32 -> vector<8x128xf32>
    %c2_134 = arith.constant 2 : index
    %c512_135 = arith.constant 512 : index
    %214 = vector.load %arg4[%c2_134, %c512_135] : memref<9x640xf32, #tpu.memory_space<vmem>>, vector<1x128xf32>
    %215 = vector.broadcast %214 : vector<1x128xf32> to vector<8x128xf32>
    %216 = arith.mulf %213, %215 : vector<8x128xf32>
    %c1_i32_136 = arith.constant 1 : i32
    %217 = tpu.dynamic_rotate %203 by %c1_i32_136 dim 1 : vector<8x128xf32>, i32 -> vector<8x128xf32>
    %c3_137 = arith.constant 3 : index
    %c512_138 = arith.constant 512 : index
    %218 = vector.load %arg4[%c3_137, %c512_138] : memref<9x640xf32, #tpu.memory_space<vmem>>, vector<1x128xf32>
    %219 = vector.broadcast %218 : vector<1x128xf32> to vector<8x128xf32>
    %220 = arith.mulf %217, %219 : vector<8x128xf32>
    %c127_i32_139 = arith.constant 127 : i32
    %221 = tpu.dynamic_rotate %203 by %c127_i32_139 dim 1 : vector<8x128xf32>, i32 -> vector<8x128xf32>
    %c5_140 = arith.constant 5 : index
    %c512_141 = arith.constant 512 : index
    %222 = vector.load %arg4[%c5_140, %c512_141] : memref<9x640xf32, #tpu.memory_space<vmem>>, vector<1x128xf32>
    %223 = vector.broadcast %222 : vector<1x128xf32> to vector<8x128xf32>
    %224 = arith.mulf %221, %223 : vector<8x128xf32>
    %c121_i32_142 = arith.constant 121 : i32
    %225 = tpu.dynamic_rotate %203 by %c121_i32_142 dim 1 : vector<8x128xf32>, i32 -> vector<8x128xf32>
    %c6_143 = arith.constant 6 : index
    %c512_144 = arith.constant 512 : index
    %226 = vector.load %arg4[%c6_143, %c512_144] : memref<9x640xf32, #tpu.memory_space<vmem>>, vector<1x128xf32>
    %227 = vector.broadcast %226 : vector<1x128xf32> to vector<8x128xf32>
    %228 = arith.mulf %225, %227 : vector<8x128xf32>
    %c120_i32_145 = arith.constant 120 : i32
    %229 = tpu.dynamic_rotate %203 by %c120_i32_145 dim 1 : vector<8x128xf32>, i32 -> vector<8x128xf32>
    %c7_146 = arith.constant 7 : index
    %c512_147 = arith.constant 512 : index
    %230 = vector.load %arg4[%c7_146, %c512_147] : memref<9x640xf32, #tpu.memory_space<vmem>>, vector<1x128xf32>
    %231 = vector.broadcast %230 : vector<1x128xf32> to vector<8x128xf32>
    %232 = arith.mulf %229, %231 : vector<8x128xf32>
    %c119_i32_148 = arith.constant 119 : i32
    %233 = tpu.dynamic_rotate %203 by %c119_i32_148 dim 1 : vector<8x128xf32>, i32 -> vector<8x128xf32>
    %c8_149 = arith.constant 8 : index
    %c512_150 = arith.constant 512 : index
    %234 = vector.load %arg4[%c8_149, %c512_150] : memref<9x640xf32, #tpu.memory_space<vmem>>, vector<1x128xf32>
    %235 = vector.broadcast %234 : vector<1x128xf32> to vector<8x128xf32>
    %236 = arith.mulf %233, %235 : vector<8x128xf32>
    %237 = tpu.concatenate %208, %212, %216, %220, %203, %224, %228, %232, %236, %11 in 0 : vector<8x128xf32>, vector<8x128xf32>, vector<8x128xf32>, vector<8x128xf32>, vector<8x128xf32>, vector<8x128xf32>, vector<8x128xf32>, vector<8x128xf32>, vector<8x128xf32>, vector<1x128xf32> -> vector<73x128xf32>
    %238 = arith.truncf %237 : vector<73x128xf32> to vector<73x128xbf16>
    %cst_151 = arith.constant dense<0.000000e+00> : vector<8x128xf32>
    %239 = tpu.matmul %204, %238, %cst_151 {dimension_numbers = #tpu.dot_dimension_numbers<[1], [0], [0], [1], [0, 0, 1, 1], [], []>} : vector<8x73xbf16>, vector<73x128xbf16>, vector<8x128xf32> -> vector<8x128xf32>
    %240 = arith.addf %239, %9 : vector<8x128xf32>
    %cst_152 = arith.constant 0.000000e+00 : f32
    %241 = vector.broadcast %cst_152 : f32 to vector<8x128xf32>
    %242 = arith.maximumf %240, %241 : vector<8x128xf32>
    %c32 = arith.constant 32 : index
    %c0_153 = arith.constant 0 : index
    %243 = vector.load %arg2[%c32, %c0_153] : memref<128x256xbf16, #tpu.memory_space<vmem>>, vector<8x73xbf16>
    %c9_i32_154 = arith.constant 9 : i32
    %244 = tpu.dynamic_rotate %242 by %c9_i32_154 dim 1 : vector<8x128xf32>, i32 -> vector<8x128xf32>
    %c0_155 = arith.constant 0 : index
    %c512_156 = arith.constant 512 : index
    %245 = vector.load %arg4[%c0_155, %c512_156] : memref<9x640xf32, #tpu.memory_space<vmem>>, vector<1x128xf32>
    %246 = vector.broadcast %245 : vector<1x128xf32> to vector<8x128xf32>
    %247 = arith.mulf %244, %246 : vector<8x128xf32>
    %c8_i32_157 = arith.constant 8 : i32
    %248 = tpu.dynamic_rotate %242 by %c8_i32_157 dim 1 : vector<8x128xf32>, i32 -> vector<8x128xf32>
    %c1_158 = arith.constant 1 : index
    %c512_159 = arith.constant 512 : index
    %249 = vector.load %arg4[%c1_158, %c512_159] : memref<9x640xf32, #tpu.memory_space<vmem>>, vector<1x128xf32>
    %250 = vector.broadcast %249 : vector<1x128xf32> to vector<8x128xf32>
    %251 = arith.mulf %248, %250 : vector<8x128xf32>
    %c7_i32_160 = arith.constant 7 : i32
    %252 = tpu.dynamic_rotate %242 by %c7_i32_160 dim 1 : vector<8x128xf32>, i32 -> vector<8x128xf32>
    %c2_161 = arith.constant 2 : index
    %c512_162 = arith.constant 512 : index
    %253 = vector.load %arg4[%c2_161, %c512_162] : memref<9x640xf32, #tpu.memory_space<vmem>>, vector<1x128xf32>
    %254 = vector.broadcast %253 : vector<1x128xf32> to vector<8x128xf32>
    %255 = arith.mulf %252, %254 : vector<8x128xf32>
    %c1_i32_163 = arith.constant 1 : i32
    %256 = tpu.dynamic_rotate %242 by %c1_i32_163 dim 1 : vector<8x128xf32>, i32 -> vector<8x128xf32>
    %c3_164 = arith.constant 3 : index
    %c512_165 = arith.constant 512 : index
    %257 = vector.load %arg4[%c3_164, %c512_165] : memref<9x640xf32, #tpu.memory_space<vmem>>, vector<1x128xf32>
    %258 = vector.broadcast %257 : vector<1x128xf32> to vector<8x128xf32>
    %259 = arith.mulf %256, %258 : vector<8x128xf32>
    %c127_i32_166 = arith.constant 127 : i32
    %260 = tpu.dynamic_rotate %242 by %c127_i32_166 dim 1 : vector<8x128xf32>, i32 -> vector<8x128xf32>
    %c5_167 = arith.constant 5 : index
    %c512_168 = arith.constant 512 : index
    %261 = vector.load %arg4[%c5_167, %c512_168] : memref<9x640xf32, #tpu.memory_space<vmem>>, vector<1x128xf32>
    %262 = vector.broadcast %261 : vector<1x128xf32> to vector<8x128xf32>
    %263 = arith.mulf %260, %262 : vector<8x128xf32>
    %c121_i32_169 = arith.constant 121 : i32
    %264 = tpu.dynamic_rotate %242 by %c121_i32_169 dim 1 : vector<8x128xf32>, i32 -> vector<8x128xf32>
    %c6_170 = arith.constant 6 : index
    %c512_171 = arith.constant 512 : index
    %265 = vector.load %arg4[%c6_170, %c512_171] : memref<9x640xf32, #tpu.memory_space<vmem>>, vector<1x128xf32>
    %266 = vector.broadcast %265 : vector<1x128xf32> to vector<8x128xf32>
    %267 = arith.mulf %264, %266 : vector<8x128xf32>
    %c120_i32_172 = arith.constant 120 : i32
    %268 = tpu.dynamic_rotate %242 by %c120_i32_172 dim 1 : vector<8x128xf32>, i32 -> vector<8x128xf32>
    %c7_173 = arith.constant 7 : index
    %c512_174 = arith.constant 512 : index
    %269 = vector.load %arg4[%c7_173, %c512_174] : memref<9x640xf32, #tpu.memory_space<vmem>>, vector<1x128xf32>
    %270 = vector.broadcast %269 : vector<1x128xf32> to vector<8x128xf32>
    %271 = arith.mulf %268, %270 : vector<8x128xf32>
    %c119_i32_175 = arith.constant 119 : i32
    %272 = tpu.dynamic_rotate %242 by %c119_i32_175 dim 1 : vector<8x128xf32>, i32 -> vector<8x128xf32>
    %c8_176 = arith.constant 8 : index
    %c512_177 = arith.constant 512 : index
    %273 = vector.load %arg4[%c8_176, %c512_177] : memref<9x640xf32, #tpu.memory_space<vmem>>, vector<1x128xf32>
    %274 = vector.broadcast %273 : vector<1x128xf32> to vector<8x128xf32>
    %275 = arith.mulf %272, %274 : vector<8x128xf32>
    %276 = tpu.concatenate %247, %251, %255, %259, %242, %263, %267, %271, %275, %11 in 0 : vector<8x128xf32>, vector<8x128xf32>, vector<8x128xf32>, vector<8x128xf32>, vector<8x128xf32>, vector<8x128xf32>, vector<8x128xf32>, vector<8x128xf32>, vector<8x128xf32>, vector<1x128xf32> -> vector<73x128xf32>
    %277 = arith.truncf %276 : vector<73x128xf32> to vector<73x128xbf16>
    %cst_178 = arith.constant dense<0.000000e+00> : vector<8x128xf32>
    %278 = tpu.matmul %243, %277, %cst_178 {dimension_numbers = #tpu.dot_dimension_numbers<[1], [0], [0], [1], [0, 0, 1, 1], [], []>} : vector<8x73xbf16>, vector<73x128xbf16>, vector<8x128xf32> -> vector<8x128xf32>
    %cst_179 = arith.constant 0.000000e+00 : f32
    %279 = vector.broadcast %cst_179 : f32 to vector<8x128xf32>
    %280 = arith.maximumf %278, %279 : vector<8x128xf32>
    %c40 = arith.constant 40 : index
    %c0_180 = arith.constant 0 : index
    %281 = vector.load %arg2[%c40, %c0_180] : memref<128x256xbf16, #tpu.memory_space<vmem>>, vector<8x73xbf16>
    %c9_i32_181 = arith.constant 9 : i32
    %282 = tpu.dynamic_rotate %280 by %c9_i32_181 dim 1 : vector<8x128xf32>, i32 -> vector<8x128xf32>
    %c0_182 = arith.constant 0 : index
    %c512_183 = arith.constant 512 : index
    %283 = vector.load %arg4[%c0_182, %c512_183] : memref<9x640xf32, #tpu.memory_space<vmem>>, vector<1x128xf32>
    %284 = vector.broadcast %283 : vector<1x128xf32> to vector<8x128xf32>
    %285 = arith.mulf %282, %284 : vector<8x128xf32>
    %c8_i32_184 = arith.constant 8 : i32
    %286 = tpu.dynamic_rotate %280 by %c8_i32_184 dim 1 : vector<8x128xf32>, i32 -> vector<8x128xf32>
    %c1_185 = arith.constant 1 : index
    %c512_186 = arith.constant 512 : index
    %287 = vector.load %arg4[%c1_185, %c512_186] : memref<9x640xf32, #tpu.memory_space<vmem>>, vector<1x128xf32>
    %288 = vector.broadcast %287 : vector<1x128xf32> to vector<8x128xf32>
    %289 = arith.mulf %286, %288 : vector<8x128xf32>
    %c7_i32_187 = arith.constant 7 : i32
    %290 = tpu.dynamic_rotate %280 by %c7_i32_187 dim 1 : vector<8x128xf32>, i32 -> vector<8x128xf32>
    %c2_188 = arith.constant 2 : index
    %c512_189 = arith.constant 512 : index
    %291 = vector.load %arg4[%c2_188, %c512_189] : memref<9x640xf32, #tpu.memory_space<vmem>>, vector<1x128xf32>
    %292 = vector.broadcast %291 : vector<1x128xf32> to vector<8x128xf32>
    %293 = arith.mulf %290, %292 : vector<8x128xf32>
    %c1_i32_190 = arith.constant 1 : i32
    %294 = tpu.dynamic_rotate %280 by %c1_i32_190 dim 1 : vector<8x128xf32>, i32 -> vector<8x128xf32>
    %c3_191 = arith.constant 3 : index
    %c512_192 = arith.constant 512 : index
    %295 = vector.load %arg4[%c3_191, %c512_192] : memref<9x640xf32, #tpu.memory_space<vmem>>, vector<1x128xf32>
    %296 = vector.broadcast %295 : vector<1x128xf32> to vector<8x128xf32>
    %297 = arith.mulf %294, %296 : vector<8x128xf32>
    %c127_i32_193 = arith.constant 127 : i32
    %298 = tpu.dynamic_rotate %280 by %c127_i32_193 dim 1 : vector<8x128xf32>, i32 -> vector<8x128xf32>
    %c5_194 = arith.constant 5 : index
    %c512_195 = arith.constant 512 : index
    %299 = vector.load %arg4[%c5_194, %c512_195] : memref<9x640xf32, #tpu.memory_space<vmem>>, vector<1x128xf32>
    %300 = vector.broadcast %299 : vector<1x128xf32> to vector<8x128xf32>
    %301 = arith.mulf %298, %300 : vector<8x128xf32>
    %c121_i32_196 = arith.constant 121 : i32
    %302 = tpu.dynamic_rotate %280 by %c121_i32_196 dim 1 : vector<8x128xf32>, i32 -> vector<8x128xf32>
    %c6_197 = arith.constant 6 : index
    %c512_198 = arith.constant 512 : index
    %303 = vector.load %arg4[%c6_197, %c512_198] : memref<9x640xf32, #tpu.memory_space<vmem>>, vector<1x128xf32>
    %304 = vector.broadcast %303 : vector<1x128xf32> to vector<8x128xf32>
    %305 = arith.mulf %302, %304 : vector<8x128xf32>
    %c120_i32_199 = arith.constant 120 : i32
    %306 = tpu.dynamic_rotate %280 by %c120_i32_199 dim 1 : vector<8x128xf32>, i32 -> vector<8x128xf32>
    %c7_200 = arith.constant 7 : index
    %c512_201 = arith.constant 512 : index
    %307 = vector.load %arg4[%c7_200, %c512_201] : memref<9x640xf32, #tpu.memory_space<vmem>>, vector<1x128xf32>
    %308 = vector.broadcast %307 : vector<1x128xf32> to vector<8x128xf32>
    %309 = arith.mulf %306, %308 : vector<8x128xf32>
    %c119_i32_202 = arith.constant 119 : i32
    %310 = tpu.dynamic_rotate %280 by %c119_i32_202 dim 1 : vector<8x128xf32>, i32 -> vector<8x128xf32>
    %c8_203 = arith.constant 8 : index
    %c512_204 = arith.constant 512 : index
    %311 = vector.load %arg4[%c8_203, %c512_204] : memref<9x640xf32, #tpu.memory_space<vmem>>, vector<1x128xf32>
    %312 = vector.broadcast %311 : vector<1x128xf32> to vector<8x128xf32>
    %313 = arith.mulf %310, %312 : vector<8x128xf32>
    %314 = tpu.concatenate %285, %289, %293, %297, %280, %301, %305, %309, %313, %11 in 0 : vector<8x128xf32>, vector<8x128xf32>, vector<8x128xf32>, vector<8x128xf32>, vector<8x128xf32>, vector<8x128xf32>, vector<8x128xf32>, vector<8x128xf32>, vector<8x128xf32>, vector<1x128xf32> -> vector<73x128xf32>
    %315 = arith.truncf %314 : vector<73x128xf32> to vector<73x128xbf16>
    %cst_205 = arith.constant dense<0.000000e+00> : vector<8x128xf32>
    %316 = tpu.matmul %281, %315, %cst_205 {dimension_numbers = #tpu.dot_dimension_numbers<[1], [0], [0], [1], [0, 0, 1, 1], [], []>} : vector<8x73xbf16>, vector<73x128xbf16>, vector<8x128xf32> -> vector<8x128xf32>
    %317 = arith.addf %316, %242 : vector<8x128xf32>
    %cst_206 = arith.constant 0.000000e+00 : f32
    %318 = vector.broadcast %cst_206 : f32 to vector<8x128xf32>
    %319 = arith.maximumf %317, %318 : vector<8x128xf32>
    %c48 = arith.constant 48 : index
    %c0_207 = arith.constant 0 : index
    %320 = vector.load %arg2[%c48, %c0_207] : memref<128x256xbf16, #tpu.memory_space<vmem>>, vector<4x9xbf16>
    %321 = tpu.concatenate %319, %11 in 0 : vector<8x128xf32>, vector<1x128xf32> -> vector<9x128xf32>
    %322 = arith.truncf %321 : vector<9x128xf32> to vector<9x128xbf16>
    %cst_208 = arith.constant dense<0.000000e+00> : vector<4x128xf32>
    %323 = tpu.matmul %320, %322, %cst_208 {dimension_numbers = #tpu.dot_dimension_numbers<[1], [0], [0], [1], [0, 0, 1, 1], [], []>} : vector<4x9xbf16>, vector<9x128xbf16>, vector<4x128xf32> -> vector<4x128xf32>
    %c64 = arith.constant 64 : index
    %c0_209 = arith.constant 0 : index
    %324 = vector.load %arg2[%c64, %c0_209] : memref<128x256xbf16, #tpu.memory_space<vmem>>, vector<64x256xbf16>
    %325 = vector.extract_strided_slice %323 {offsets = [0, 0], sizes = [4, 64], strides = [1, 1]} : vector<4x128xf32> to vector<4x64xf32>
    %326 = arith.truncf %325 : vector<4x64xf32> to vector<4x64xbf16>
    %cst_210 = arith.constant dense<0.000000e+00> : vector<4x256xf32>
    %327 = tpu.matmul %326, %324, %cst_210 {dimension_numbers = #tpu.dot_dimension_numbers<[1], [0], [0], [1], [0, 0, 1, 1], [], []>} : vector<4x64xbf16>, vector<64x256xbf16>, vector<4x256xf32> -> vector<4x256xf32>
    %328 = vector.extract_strided_slice %323 {offsets = [0, 64], sizes = [4, 64], strides = [1, 1]} : vector<4x128xf32> to vector<4x64xf32>
    %329 = arith.truncf %328 : vector<4x64xf32> to vector<4x64xbf16>
    %cst_211 = arith.constant dense<0.000000e+00> : vector<4x256xf32>
    %330 = tpu.matmul %329, %324, %cst_211 {dimension_numbers = #tpu.dot_dimension_numbers<[1], [0], [0], [1], [0, 0, 1, 1], [], []>} : vector<4x64xbf16>, vector<64x256xbf16>, vector<4x256xf32> -> vector<4x256xf32>
    %331 = tpu.concatenate %327, %330 in 1 : vector<4x256xf32>, vector<4x256xf32> -> vector<4x512xf32>
    %332 = arith.addf %165, %331 : vector<4x512xf32>
    %cst_212 = arith.constant 0.000000e+00 : f32
    %333 = vector.broadcast %cst_212 : f32 to vector<4x512xf32>
    %334 = arith.maximumf %332, %333 : vector<4x512xf32>
    %335 = vector.extract_strided_slice %334 {offsets = [0, 0], sizes = [4, 256], strides = [1, 1]} : vector<4x512xf32> to vector<4x256xf32>
    %c0_213 = arith.constant 0 : index
    %c0_214 = arith.constant 0 : index
    %c0_215 = arith.constant 0 : index
    %336 = vector.load %arg5[%c0_213, %c0_214, %c0_215] : memref<2x4x256xf32, #tpu.memory_space<vmem>>, vector<1x4x256xf32>
    %337 = vector.shape_cast %336 : vector<1x4x256xf32> to vector<4x256xf32>
    %338 = vector.shape_cast %335 : vector<4x256xf32> to vector<1x4x256xf32>
    tpu.vector_store %arg5[%c0_213, %c0_214, %c0_215], %338 {strides = array<i32>} : memref<2x4x256xf32, #tpu.memory_space<vmem>>, vector<1x4x256xf32>,
    %339 = vector.extract_strided_slice %334 {offsets = [0, 256], sizes = [4, 256], strides = [1, 1]} : vector<4x512xf32> to vector<4x256xf32>
    %c1_216 = arith.constant 1 : index
    %c0_217 = arith.constant 0 : index
    %c0_218 = arith.constant 0 : index
    %340 = vector.load %arg5[%c1_216, %c0_217, %c0_218] : memref<2x4x256xf32, #tpu.memory_space<vmem>>, vector<1x4x256xf32>
    %341 = vector.shape_cast %340 : vector<1x4x256xf32> to vector<4x256xf32>
    %342 = vector.shape_cast %339 : vector<4x256xf32> to vector<1x4x256xf32>
    tpu.vector_store %arg5[%c1_216, %c0_217, %c0_218], %342 {strides = array<i32>} : memref<2x4x256xf32, #tpu.memory_space<vmem>>, vector<1x4x256xf32>,
    %c52 = arith.constant 52 : index
    %c0_219 = arith.constant 0 : index
    %343 = vector.load %arg2[%c52, %c0_219] : memref<128x256xbf16, #tpu.memory_space<vmem>>, vector<8x37xbf16>
    %c17_i32_220 = arith.constant 17 : i32
    %344 = tpu.dynamic_rotate %165 by %c17_i32_220 dim 1 : vector<4x512xf32>, i32 -> vector<4x512xf32>
    %c0_221 = arith.constant 0 : index
    %c0_222 = arith.constant 0 : index
    %345 = vector.load %arg4[%c0_221, %c0_222] : memref<9x640xf32, #tpu.memory_space<vmem>>, vector<1x512xf32>
    %346 = vector.broadcast %345 : vector<1x512xf32> to vector<4x512xf32>
    %347 = arith.mulf %344, %346 : vector<4x512xf32>
    %c16_i32_223 = arith.constant 16 : i32
    %348 = tpu.dynamic_rotate %165 by %c16_i32_223 dim 1 : vector<4x512xf32>, i32 -> vector<4x512xf32>
    %c1_224 = arith.constant 1 : index
    %c0_225 = arith.constant 0 : index
    %349 = vector.load %arg4[%c1_224, %c0_225] : memref<9x640xf32, #tpu.memory_space<vmem>>, vector<1x512xf32>
    %350 = vector.broadcast %349 : vector<1x512xf32> to vector<4x512xf32>
    %351 = arith.mulf %348, %350 : vector<4x512xf32>
    %c15_i32_226 = arith.constant 15 : i32
    %352 = tpu.dynamic_rotate %165 by %c15_i32_226 dim 1 : vector<4x512xf32>, i32 -> vector<4x512xf32>
    %c2_227 = arith.constant 2 : index
    %c0_228 = arith.constant 0 : index
    %353 = vector.load %arg4[%c2_227, %c0_228] : memref<9x640xf32, #tpu.memory_space<vmem>>, vector<1x512xf32>
    %354 = vector.broadcast %353 : vector<1x512xf32> to vector<4x512xf32>
    %355 = arith.mulf %352, %354 : vector<4x512xf32>
    %c1_i32_229 = arith.constant 1 : i32
    %356 = tpu.dynamic_rotate %165 by %c1_i32_229 dim 1 : vector<4x512xf32>, i32 -> vector<4x512xf32>
    %c3_230 = arith.constant 3 : index
    %c0_231 = arith.constant 0 : index
    %357 = vector.load %arg4[%c3_230, %c0_231] : memref<9x640xf32, #tpu.memory_space<vmem>>, vector<1x512xf32>
    %358 = vector.broadcast %357 : vector<1x512xf32> to vector<4x512xf32>
    %359 = arith.mulf %356, %358 : vector<4x512xf32>
    %c511_i32_232 = arith.constant 511 : i32
    %360 = tpu.dynamic_rotate %165 by %c511_i32_232 dim 1 : vector<4x512xf32>, i32 -> vector<4x512xf32>
    %c5_233 = arith.constant 5 : index
    %c0_234 = arith.constant 0 : index
    %361 = vector.load %arg4[%c5_233, %c0_234] : memref<9x640xf32, #tpu.memory_space<vmem>>, vector<1x512xf32>
    %362 = vector.broadcast %361 : vector<1x512xf32> to vector<4x512xf32>
    %363 = arith.mulf %360, %362 : vector<4x512xf32>
    %c497_i32_235 = arith.constant 497 : i32
    %364 = tpu.dynamic_rotate %165 by %c497_i32_235 dim 1 : vector<4x512xf32>, i32 -> vector<4x512xf32>
    %c6_236 = arith.constant 6 : index
    %c0_237 = arith.constant 0 : index
    %365 = vector.load %arg4[%c6_236, %c0_237] : memref<9x640xf32, #tpu.memory_space<vmem>>, vector<1x512xf32>
    %366 = vector.broadcast %365 : vector<1x512xf32> to vector<4x512xf32>
    %367 = arith.mulf %364, %366 : vector<4x512xf32>
    %c496_i32_238 = arith.constant 496 : i32
    %368 = tpu.dynamic_rotate %165 by %c496_i32_238 dim 1 : vector<4x512xf32>, i32 -> vector<4x512xf32>
    %c7_239 = arith.constant 7 : index
    %c0_240 = arith.constant 0 : index
    %369 = vector.load %arg4[%c7_239, %c0_240] : memref<9x640xf32, #tpu.memory_space<vmem>>, vector<1x512xf32>
    %370 = vector.broadcast %369 : vector<1x512xf32> to vector<4x512xf32>
    %371 = arith.mulf %368, %370 : vector<4x512xf32>
    %c495_i32_241 = arith.constant 495 : i32
    %372 = tpu.dynamic_rotate %165 by %c495_i32_241 dim 1 : vector<4x512xf32>, i32 -> vector<4x512xf32>
    %c8_242 = arith.constant 8 : index
    %c0_243 = arith.constant 0 : index
    %373 = vector.load %arg4[%c8_242, %c0_243] : memref<9x640xf32, #tpu.memory_space<vmem>>, vector<1x512xf32>
    %374 = vector.broadcast %373 : vector<1x512xf32> to vector<4x512xf32>
    %375 = arith.mulf %372, %374 : vector<4x512xf32>
    %376 = tpu.concatenate %347, %351, %355, %359, %165, %363, %367, %371, %375, %10 in 0 : vector<4x512xf32>, vector<4x512xf32>, vector<4x512xf32>, vector<4x512xf32>, vector<4x512xf32>, vector<4x512xf32>, vector<4x512xf32>, vector<4x512xf32>, vector<4x512xf32>, vector<1x512xf32> -> vector<37x512xf32>
    %377 = arith.truncf %376 : vector<37x512xf32> to vector<37x512xbf16>
    %cst_244 = arith.constant dense<0.000000e+00> : vector<8x512xf32>
    %378 = tpu.matmul %343, %377, %cst_244 {dimension_numbers = #tpu.dot_dimension_numbers<[1], [0], [0], [1], [0, 0, 1, 1], [], []>} : vector<8x37xbf16>, vector<37x512xbf16>, vector<8x512xf32> -> vector<8x512xf32>
    %c0_245 = arith.constant 0 : index
    %c0_246 = arith.constant 0 : index
    %379 = vector.load %arg3[%c0_245, %c0_246] : memref<256x64xbf16, #tpu.memory_space<vmem>>, vector<256x64xbf16>
    %380 = vector.extract_strided_slice %378 {offsets = [0, 0], sizes = [8, 256], strides = [1, 1]} : vector<8x512xf32> to vector<8x256xf32>
    %381 = arith.truncf %380 : vector<8x256xf32> to vector<8x256xbf16>
    %cst_247 = arith.constant dense<0.000000e+00> : vector<8x64xf32>
    %382 = tpu.matmul %381, %379, %cst_247 {dimension_numbers = #tpu.dot_dimension_numbers<[1], [0], [0], [1], [0, 0, 1, 1], [], []>} : vector<8x256xbf16>, vector<256x64xbf16>, vector<8x64xf32> -> vector<8x64xf32>
    %383 = vector.extract_strided_slice %378 {offsets = [0, 256], sizes = [8, 256], strides = [1, 1]} : vector<8x512xf32> to vector<8x256xf32>
    %384 = arith.truncf %383 : vector<8x256xf32> to vector<8x256xbf16>
    %cst_248 = arith.constant dense<0.000000e+00> : vector<8x64xf32>
    %385 = tpu.matmul %384, %379, %cst_248 {dimension_numbers = #tpu.dot_dimension_numbers<[1], [0], [0], [1], [0, 0, 1, 1], [], []>} : vector<8x256xbf16>, vector<256x64xbf16>, vector<8x64xf32> -> vector<8x64xf32>
    %386 = tpu.concatenate %382, %385 in 1 : vector<8x64xf32>, vector<8x64xf32> -> vector<8x128xf32>
    %387 = arith.addf %386, %319 : vector<8x128xf32>
    %cst_249 = arith.constant 0.000000e+00 : f32
    %388 = vector.broadcast %cst_249 : f32 to vector<8x128xf32>
    %389 = arith.maximumf %387, %388 : vector<8x128xf32>
    %390 = vector.extract_strided_slice %389 {offsets = [0, 0], sizes = [8, 64], strides = [1, 1]} : vector<8x128xf32> to vector<8x64xf32>
    %c0_250 = arith.constant 0 : index
    %c0_251 = arith.constant 0 : index
    %c0_252 = arith.constant 0 : index
    %391 = vector.load %arg6[%c0_250, %c0_251, %c0_252] : memref<2x8x64xf32, #tpu.memory_space<vmem>>, vector<1x8x64xf32>
    %392 = vector.shape_cast %391 : vector<1x8x64xf32> to vector<8x64xf32>
    %393 = vector.shape_cast %390 : vector<8x64xf32> to vector<1x8x64xf32>
    tpu.vector_store %arg6[%c0_250, %c0_251, %c0_252], %393 {strides = array<i32>} : memref<2x8x64xf32, #tpu.memory_space<vmem>>, vector<1x8x64xf32>,
    %394 = vector.extract_strided_slice %389 {offsets = [0, 64], sizes = [8, 64], strides = [1, 1]} : vector<8x128xf32> to vector<8x64xf32>
    %c1_253 = arith.constant 1 : index
    %c0_254 = arith.constant 0 : index
    %c0_255 = arith.constant 0 : index
    %395 = vector.load %arg6[%c1_253, %c0_254, %c0_255] : memref<2x8x64xf32, #tpu.memory_space<vmem>>, vector<1x8x64xf32>
    %396 = vector.shape_cast %395 : vector<1x8x64xf32> to vector<8x64xf32>
    %397 = vector.shape_cast %394 : vector<8x64xf32> to vector<1x8x64xf32>
    tpu.vector_store %arg6[%c1_253, %c0_254, %c0_255], %397 {strides = array<i32>} : memref<2x8x64xf32, #tpu.memory_space<vmem>>, vector<1x8x64xf32>,
    return
  }
}

</mosaic_0001>

<llo_original>
// kernel: _lambda_.1
$region0: #{_lambda_.1}
  #allocation0 [shape = 'u32[]', space=smem, size = 0x4, offset = 0x4, fixed_abs, tag = 'smem constant byte address 0x4 - core index']
  #allocation1 [shape = 'u32[144,128]{1,0:T(1,128)}', space=vmem, size = 0x12000, scoped, tag = 'internal scratch']
  %s0 = inlined_call_operand.vmem [shape: f32[2,4,256], index: 0, kind: input, shape index: {}]
  %s1 = inlined_call_operand.vmem [shape: f32[2,8,64], index: 1, kind: input, shape index: {}]
  %s2 = inlined_call_operand.vmem [shape: bf16[128,256], index: 2, kind: input, shape index: {}]
  %s3 = inlined_call_operand.vmem [shape: bf16[256,64], index: 3, kind: input, shape index: {}]
  %s4 = inlined_call_operand.vmem [shape: f32[9,640], index: 4, kind: input, shape index: {}]
  %s5 = inlined_call_operand.vmem [shape: f32[2,4,256], index: 5, kind: output, shape index: {0}]
  %s6 = inlined_call_operand.vmem [shape: f32[2,8,64], index: 6, kind: output, shape index: {1}]
  %7 = xla_tuple %s5, %s6
  %s8 = sld [smem:[#allocation0]]
  $region38: #{_lambda_.1} parent=0
    _
  %s10 = ssub.s32 1, %s8
  %s11 = scalar_select 0, %s10, %s8
  // Predicated region
  $region2: #{_lambda_.1} parent=0 // pred_check
    _
  $region3: #{_lambda_.1} parent=0 // pred_check_branch
    %13 = sbr.rel (0) target = $region5
  $region4: #{_lambda_.1} parent=0 // pred_region
    _
  $region5: #{_lambda_.1} parent=0 // pred_fallthru
    _
  // Predicated region
  $region6: #{_lambda_.1} parent=0 // pred_check
    _
  $region7: #{_lambda_.1} parent=0 // pred_check_branch
    %15 = sbr.rel (0) target = $region9
  $region8: #{_lambda_.1} parent=0 // pred_region
    _
  $region9: #{_lambda_.1} parent=0 // pred_fallthru
    _
  // Predicated region
  $region10: #{_lambda_.1} parent=0 // pred_check
    _
  $region11: #{_lambda_.1} parent=0 // pred_check_branch
    %17 = sbr.rel (0) target = $region13
  $region12: #{_lambda_.1} parent=0 // pred_region
    _
  $region13: #{_lambda_.1} parent=0 // pred_fallthru
    _
  // Predicated region
  $region14: #{_lambda_.1} parent=0 // pred_check
    _
  $region15: #{_lambda_.1} parent=0 // pred_check_branch
    %19 = sbr.rel (0) target = $region17
  $region16: #{_lambda_.1} parent=0 // pred_region
    _
  $region17: #{_lambda_.1} parent=0 // pred_fallthru
    _
  // Predicated region
  $region18: #{_lambda_.1} parent=0 // pred_check
    _
  $region19: #{_lambda_.1} parent=0 // pred_check_branch
    %21 = sbr.rel (0) target = $region21
  $region20: #{_lambda_.1} parent=0 // pred_region
    _
  $region21: #{_lambda_.1} parent=0 // pred_fallthru
    _
  %v23 = vld [vmem:[%s0] sm:$0xff]
  %s24 = scalar_lea.vmem %s0, 8
  %v25 = vld [vmem:[%s24] sm:$0xff]
  %v27 = vcombine.high %v23, %v23
  %v30 = vcombine.high %v25, %v25
  %v32 = vld [vmem:[%s1] sm:$0xff]
  %s33 = scalar_lea.vmem %s1, 8
  %v34 = vld [vmem:[%s33] sm:$0xff]
  %36 = vrot.lane.b32.xlu0 %v34, 64
  %v37 = vpop.permute.xlu0 %36
  %vm39 = vcmask 523264
  %v40 = vsel %vm39, %v32, %v37
  %v41 = vld [vmem:[%s2] sm:$0x3]
  %42 = vrot.lane.b32.xlu0 %v23, 17
  %v43 = vpop.permute.xlu0 %42
  %44 = vrot.lane.b32.xlu0 %v27, 17
  %v45 = vpop.permute.xlu0 %44
  %46 = vrot.lane.b32.xlu0 %v25, 17
  %v47 = vpop.permute.xlu0 %46
  %48 = vrot.lane.b32.xlu0 %v30, 17
  %v49 = vpop.permute.xlu0 %48
  %v50 = vlaneseq
  %v51 = vand.u32 %v50, 127
  %vm52 = vcmp.lt.s32.totalorder %v51, 17
  %v53 = vsel %vm52, %v47, %v49
  %v54 = vsel %vm52, %v45, %v47
  %v55 = vsel %vm52, %v43, %v45
  %v56 = vsel %vm52, %v49, %v43
  %v57 = vld [vmem:[%s4] ss:$8 sm:$0xf]
  %v59 = vlaneseq
  %v60 = vshrl.u32 %v59, 7
  %v61 = vsub.s32 0, %v60
  %v62 = vrot.slane %v57, %v61
  %v63 = vlaneseq
  %v64 = vshrl.u32 %v63, 7
  %v65 = vsub.s32 1, %v64
  %v66 = vrot.slane %v57, %v65
  %v67 = vlaneseq
  %v68 = vshrl.u32 %v67, 7
  %v69 = vsub.s32 2, %v68
  %v70 = vrot.slane %v57, %v69
  %v71 = vlaneseq
  %v72 = vshrl.u32 %v71, 7
  %v73 = vsub.s32 3, %v72
  %v74 = vrot.slane %v57, %v73
  %v79 = vmul.f32 %v56, %v62
  %v80 = vmul.f32 %v55, %v66
  %v81 = vmul.f32 %v54, %v70
  %v82 = vmul.f32 %v53, %v74
  %83 = vrot.lane.b32.xlu0 %v23, 16
  %v84 = vpop.permute.xlu0 %83
  %85 = vrot.lane.b32.xlu0 %v27, 16
  %v86 = vpop.permute.xlu0 %85
  %87 = vrot.lane.b32.xlu0 %v25, 16
  %v88 = vpop.permute.xlu0 %87
  %89 = vrot.lane.b32.xlu0 %v30, 16
  %v90 = vpop.permute.xlu0 %89
  %vm91 = vcmp.lt.s32.totalorder %v51, 16
  %v92 = vsel %vm91, %v88, %v90
  %v93 = vsel %vm91, %v86, %v88
  %v94 = vsel %vm91, %v84, %v86
  %v95 = vsel %vm91, %v90, %v84
  %s96 = scalar_lea.vmem %s4, 1
  %v97 = vld [vmem:[%s96] ss:$8 sm:$0xf]
  %v99 = vlaneseq
  %v100 = vshrl.u32 %v99, 7
  %v101 = vsub.s32 0, %v100
  %v102 = vrot.slane %v97, %v101
  %v103 = vlaneseq
  %v104 = vshrl.u32 %v103, 7
  %v105 = vsub.s32 1, %v104
  %v106 = vrot.slane %v97, %v105
  %v107 = vlaneseq
  %v108 = vshrl.u32 %v107, 7
  %v109 = vsub.s32 2, %v108
  %v110 = vrot.slane %v97, %v109
  %v111 = vlaneseq
  %v112 = vshrl.u32 %v111, 7
  %v113 = vsub.s32 3, %v112
  %v114 = vrot.slane %v97, %v113
  %v119 = vmul.f32 %v95, %v102
  %v120 = vmul.f32 %v94, %v106
  %v121 = vmul.f32 %v93, %v110
  %v122 = vmul.f32 %v92, %v114
  %123 = vrot.lane.b32.xlu0 %v23, 15
  %v124 = vpop.permute.xlu0 %123
  %125 = vrot.lane.b32.xlu0 %v27, 15
  %v126 = vpop.permute.xlu0 %125
  %127 = vrot.lane.b32.xlu0 %v25, 15
  %v128 = vpop.permute.xlu0 %127
  %129 = vrot.lane.b32.xlu0 %v30, 15
  %v130 = vpop.permute.xlu0 %129
  %vm131 = vcmp.lt.s32.totalorder %v51, 15
  %v132 = vsel %vm131, %v128, %v130
  %v133 = vsel %vm131, %v126, %v128
  %v134 = vsel %vm131, %v124, %v126
  %v135 = vsel %vm131, %v130, %v124
  %s136 = scalar_lea.vmem %s4, 2
  %v137 = vld [vmem:[%s136] ss:$8 sm:$0xf]
  %v139 = vlaneseq
  %v140 = vshrl.u32 %v139, 7
  %v141 = vsub.s32 0, %v140
  %v142 = vrot.slane %v137, %v141
  %v143 = vlaneseq
  %v144 = vshrl.u32 %v143, 7
  %v145 = vsub.s32 1, %v144
  %v146 = vrot.slane %v137, %v145
  %v147 = vlaneseq
  %v148 = vshrl.u32 %v147, 7
  %v149 = vsub.s32 2, %v148
  %v150 = vrot.slane %v137, %v149
  %v151 = vlaneseq
  %v152 = vshrl.u32 %v151, 7
  %v153 = vsub.s32 3, %v152
  %v154 = vrot.slane %v137, %v153
  %v159 = vmul.f32 %v135, %v142
  %v160 = vmul.f32 %v134, %v146
  %v161 = vmul.f32 %v133, %v150
  %v162 = vmul.f32 %v132, %v154
  %163 = vrot.lane.b32.xlu0 %v23, 1
  %v164 = vpop.permute.xlu0 %163
  %165 = vrot.lane.b32.xlu0 %v27, 1
  %v166 = vpop.permute.xlu0 %165
  %167 = vrot.lane.b32.xlu0 %v25, 1
  %v168 = vpop.permute.xlu0 %167
  %169 = vrot.lane.b32.xlu0 %v30, 1
  %v170 = vpop.permute.xlu0 %169
  %vm171 = vcmp.lt.s32.totalorder %v51, 1
  %v172 = vsel %vm171, %v168, %v170
  %v173 = vsel %vm171, %v166, %v168
  %v174 = vsel %vm171, %v164, %v166
  %v175 = vsel %vm171, %v170, %v164
  %s176 = scalar_lea.vmem %s4, 3
  %v177 = vld [vmem:[%s176] ss:$8 sm:$0xf]
  %v179 = vlaneseq
  %v180 = vshrl.u32 %v179, 7
  %v181 = vsub.s32 0, %v180
  %v182 = vrot.slane %v177, %v181
  %v183 = vlaneseq
  %v184 = vshrl.u32 %v183, 7
  %v185 = vsub.s32 1, %v184
  %v186 = vrot.slane %v177, %v185
  %v187 = vlaneseq
  %v188 = vshrl.u32 %v187, 7
  %v189 = vsub.s32 2, %v188
  %v190 = vrot.slane %v177, %v189
  %v191 = vlaneseq
  %v192 = vshrl.u32 %v191, 7
  %v193 = vsub.s32 3, %v192
  %v194 = vrot.slane %v177, %v193
  %v199 = vmul.f32 %v175, %v182
  %v200 = vmul.f32 %v174, %v186
  %v201 = vmul.f32 %v173, %v190
  %v202 = vmul.f32 %v172, %v194
  %203 = vrot.lane.b32.xlu0 %v23, 127
  %v204 = vpop.permute.xlu0 %203
  %205 = vrot.lane.b32.xlu0 %v27, 127
  %v206 = vpop.permute.xlu0 %205
  %207 = vrot.lane.b32.xlu0 %v25, 127
  %v208 = vpop.permute.xlu0 %207
  %209 = vrot.lane.b32.xlu0 %v30, 127
  %v210 = vpop.permute.xlu0 %209
  %vm211 = vcmp.lt.s32.totalorder %v51, 127
  %v212 = vsel %vm211, %v208, %v210
  %v213 = vsel %vm211, %v206, %v208
  %v214 = vsel %vm211, %v204, %v206
  %v215 = vsel %vm211, %v210, %v204
  %s216 = scalar_lea.vmem %s4, 5
  %v217 = vld [vmem:[%s216] ss:$8 sm:$0xf]
  %v219 = vlaneseq
  %v220 = vshrl.u32 %v219, 7
  %v221 = vsub.s32 0, %v220
  %v222 = vrot.slane %v217, %v221
  %v223 = vlaneseq
  %v224 = vshrl.u32 %v223, 7
  %v225 = vsub.s32 1, %v224
  %v226 = vrot.slane %v217, %v225
  %v227 = vlaneseq
  %v228 = vshrl.u32 %v227, 7
  %v229 = vsub.s32 2, %v228
  %v230 = vrot.slane %v217, %v229
  %v231 = vlaneseq
  %v232 = vshrl.u32 %v231, 7
  %v233 = vsub.s32 3, %v232
  %v234 = vrot.slane %v217, %v233
  %v239 = vmul.f32 %v214, %v222
  %v240 = vmul.f32 %v213, %v226
  %v241 = vmul.f32 %v212, %v230
  %v242 = vmul.f32 %v215, %v234
  %243 = vrot.lane.b32.xlu0 %v23, 113
  %v244 = vpop.permute.xlu0 %243
  %245 = vrot.lane.b32.xlu0 %v27, 113
  %v246 = vpop.permute.xlu0 %245
  %247 = vrot.lane.b32.xlu0 %v25, 113
  %v248 = vpop.permute.xlu0 %247
  %249 = vrot.lane.b32.xlu0 %v30, 113
  %v250 = vpop.permute.xlu0 %249
  %vm251 = vcmp.lt.s32.totalorder %v51, 113
  %v252 = vsel %vm251, %v248, %v250
  %v253 = vsel %vm251, %v246, %v248
  %v254 = vsel %vm251, %v244, %v246
  %v255 = vsel %vm251, %v250, %v244
  %s256 = scalar_lea.vmem %s4, 6
  %v257 = vld [vmem:[%s256] ss:$8 sm:$0xf]
  %v259 = vlaneseq
  %v260 = vshrl.u32 %v259, 7
  %v261 = vsub.s32 0, %v260
  %v262 = vrot.slane %v257, %v261
  %v263 = vlaneseq
  %v264 = vshrl.u32 %v263, 7
  %v265 = vsub.s32 1, %v264
  %v266 = vrot.slane %v257, %v265
  %v267 = vlaneseq
  %v268 = vshrl.u32 %v267, 7
  %v269 = vsub.s32 2, %v268
  %v270 = vrot.slane %v257, %v269
  %v271 = vlaneseq
  %v272 = vshrl.u32 %v271, 7
  %v273 = vsub.s32 3, %v272
  %v274 = vrot.slane %v257, %v273
  %v279 = vmul.f32 %v254, %v262
  %v280 = vmul.f32 %v253, %v266
  %v281 = vmul.f32 %v252, %v270
  %v282 = vmul.f32 %v255, %v274
  %283 = vrot.lane.b32.xlu0 %v23, 112
  %v284 = vpop.permute.xlu0 %283
  %285 = vrot.lane.b32.xlu0 %v27, 112
  %v286 = vpop.permute.xlu0 %285
  %287 = vrot.lane.b32.xlu0 %v25, 112
  %v288 = vpop.permute.xlu0 %287
  %289 = vrot.lane.b32.xlu0 %v30, 112
  %v290 = vpop.permute.xlu0 %289
  %vm291 = vcmp.lt.s32.totalorder %v51, 112
  %v292 = vsel %vm291, %v288, %v290
  %v293 = vsel %vm291, %v286, %v288
  %v294 = vsel %vm291, %v284, %v286
  %v295 = vsel %vm291, %v290, %v284
  %s296 = scalar_lea.vmem %s4, 7
  %v297 = vld [vmem:[%s296] ss:$8 sm:$0xf]
  %v299 = vlaneseq
  %v300 = vshrl.u32 %v299, 7
  %v301 = vsub.s32 0, %v300
  %v302 = vrot.slane %v297, %v301
  %v303 = vlaneseq
  %v304 = vshrl.u32 %v303, 7
  %v305 = vsub.s32 1, %v304
  %v306 = vrot.slane %v297, %v305
  %v307 = vlaneseq
  %v308 = vshrl.u32 %v307, 7
  %v309 = vsub.s32 2, %v308
  %v310 = vrot.slane %v297, %v309
  %v311 = vlaneseq
  %v312 = vshrl.u32 %v311, 7
  %v313 = vsub.s32 3, %v312
  %v314 = vrot.slane %v297, %v313
  %v319 = vmul.f32 %v294, %v302
  %v320 = vmul.f32 %v293, %v306
  %v321 = vmul.f32 %v292, %v310
  %v322 = vmul.f32 %v295, %v314
  %323 = vrot.lane.b32.xlu0 %v23, 111
  %v324 = vpop.permute.xlu0 %323
  %325 = vrot.lane.b32.xlu0 %v27, 111
  %v326 = vpop.permute.xlu0 %325
  %327 = vrot.lane.b32.xlu0 %v25, 111
  %v328 = vpop.permute.xlu0 %327
  %329 = vrot.lane.b32.xlu0 %v30, 111
  %v330 = vpop.permute.xlu0 %329
  %vm331 = vcmp.lt.s32.totalorder %v51, 111
  %v332 = vsel %vm331, %v328, %v330
  %v333 = vsel %vm331, %v326, %v328
  %v334 = vsel %vm331, %v324, %v326
  %v335 = vsel %vm331, %v330, %v324
  %s336 = scalar_lea.vmem %s4, 40
  %v337 = vld [vmem:[%s336] ss:$8 sm:$0xf]
  %v339 = vlaneseq
  %v340 = vshrl.u32 %v339, 7
  %v341 = vsub.s32 0, %v340
  %v342 = vrot.slane %v337, %v341
  %v343 = vlaneseq
  %v344 = vshrl.u32 %v343, 7
  %v345 = vsub.s32 1, %v344
  %v346 = vrot.slane %v337, %v345
  %v347 = vlaneseq
  %v348 = vshrl.u32 %v347, 7
  %v349 = vsub.s32 2, %v348
  %v350 = vrot.slane %v337, %v349
  %v351 = vlaneseq
  %v352 = vshrl.u32 %v351, 7
  %v353 = vsub.s32 3, %v352
  %v354 = vrot.slane %v337, %v353
  %v359 = vmul.f32 %v334, %v342
  %v360 = vmul.f32 %v333, %v346
  %v361 = vmul.f32 %v332, %v350
  %v362 = vmul.f32 %v335, %v354
  %v367 = vrot.slane %v119, 4
  %v368 = vrot.slane %v120, 4
  %v369 = vrot.slane %v121, 4
  %v370 = vrot.slane %v122, 4
  %v379 = vrot.slane %v199, 4
  %v380 = vrot.slane %v200, 4
  %v381 = vrot.slane %v201, 4
  %v382 = vrot.slane %v202, 4
  %v391 = vrot.slane %v239, 4
  %v392 = vrot.slane %v240, 4
  %v393 = vrot.slane %v241, 4
  %v394 = vrot.slane %v242, 4
  %v403 = vrot.slane %v319, 4
  %v404 = vrot.slane %v320, 4
  %v405 = vrot.slane %v321, 4
  %v406 = vrot.slane %v322, 4
  %vm411 = vcmask 1043456
  %v412 = vsel %vm411, %v79, %v367
  %v413 = vsel %vm411, %v80, %v368
  %v414 = vsel %vm411, %v81, %v369
  %v415 = vsel %vm411, %v82, %v370
  %v416 = vsel %vm411, %v159, %v379
  %v417 = vsel %vm411, %v160, %v380
  %v418 = vsel %vm411, %v161, %v381
  %v419 = vsel %vm411, %v162, %v382
  %v420 = vsel %vm411, %v23, %v391
  %v421 = vsel %vm411, %v27, %v392
  %v422 = vsel %vm411, %v25, %v393
  %v423 = vsel %vm411, %v30, %v394
  %v424 = vsel %vm411, %v279, %v403
  %v425 = vsel %vm411, %v280, %v404
  %v426 = vsel %vm411, %v281, %v405
  %v427 = vsel %vm411, %v282, %v406
  %v428 = vsel %vm411, %v359, 1.0
  %v429 = vsel %vm411, %v360, 1.0
  %v430 = vsel %vm411, %v361, 1.0
  %v431 = vsel %vm411, %v362, 1.0
  %v432 = vpack.c.bf16 %v416, %v412
  %v433 = vpack.c.bf16 %v417, %v413
  %v434 = vpack.c.bf16 %v418, %v414
  %v435 = vpack.c.bf16 %v419, %v415
  %v436 = vpack.c.bf16 %v424, %v420
  %v437 = vpack.c.bf16 %v425, %v421
  %v438 = vpack.c.bf16 %v426, %v422
  %v439 = vpack.c.bf16 %v427, %v423
  %v440 = vpack.c.bf16 %v428, %v428
  %v441 = vpack.c.bf16 %v429, %v429
  %v442 = vpack.c.bf16 %v430, %v430
  %v443 = vpack.c.bf16 %v431, %v431
  %vm444 = vcmask 302080
  %v446 = vsel %vm444, %v41, 0
  %vm448 = vcmask 1041408
  %vm449 = vcmask 1042432
  %v450 = vsel %vm448, 4294967295, 65535
  %v451 = vsel %vm449, %v450, 0
  %v453 = vand.u32 %v440, %v451
  %v456 = vand.u32 %v441, %v451
  %v459 = vand.u32 %v442, %v451
  %v462 = vand.u32 %v443, %v451
  %464 = vmatprep.subr.bf16.mxu0 %v433
  %465 = vmatpush1.bf16.msra.mxu0 %v432
  %466 = vmatprep.subr.bf16.mxu0 %v437
  %467 = vmatpush1.bf16.msra.mxu0 %v436
  %468 = vmatprep.subr.bf16.mxu0 %v456
  %469 = vmatpush1.bf16.msra.mxu0 %v453
  %470 = vmatprep.subr.bf16.mxu0 0
  %471 = vmatpush1.bf16.msra.mxu0 0
  %472 = vmatprep.subr.bf16.mxu0 0
  %473 = vmatpush1.bf16.msra.mxu0 0
  %474 = vmatprep.subr.bf16.mxu0 0
  %475 = vmatpush1.bf16.msra.mxu0 0
  %476 = vmatprep.subr.bf16.mxu0 0
  %477 = vmatpush1.bf16.msra.mxu0 0
  %478 = vmatprep.subr.bf16.mxu0 0
  %479 = vmatpush1.bf16.msra.mxu0 0
  %480 = vmatprep.subr.bf16.mxu0 0
  %481 = vmatpush1.bf16.msra.mxu0 0
  %482 = vmatprep.subr.bf16.mxu0 0
  %483 = vmatpush1.bf16.msra.mxu0 0
  %484 = vmatprep.subr.bf16.mxu0 0
  %485 = vmatpush1.bf16.msra.mxu0 0
  %486 = vmatprep.subr.bf16.mxu0 0
  %487 = vmatpush1.bf16.msra.mxu0 0
  %488 = vmatprep.subr.bf16.mxu0 0
  %489 = vmatpush1.bf16.msra.mxu0 0
  %490 = vmatprep.subr.bf16.mxu0 0
  %491 = vmatpush1.bf16.msra.mxu0 0
  %492 = vmatprep.subr.bf16.mxu0 0
  %493 = vmatpush1.bf16.msra.mxu0 0
  %494 = vmatprep.subr.bf16.mxu0 0
  %495 = vmatpush1.bf16.msra.mxu0 0
  %496 = vmatprep.mubr.bf16.mxu0 0
  %497 = vmatmul.mubr.bf16.gmra.mrb[0].mxu0 %v446
  %v498 = vpop.f32.mrb[0].mxu0
  %v499 = vadd.f32 0.0, %v498
  %v500 = vpop.f32.mrb[0].mxu0
  %v501 = vadd.f32 0.0, %v500
  %v502 = vpop.f32.mrb[0].mxu0
  %v503 = vpop.f32.mrb[0].mxu0
  %504 = vdwg.mxu0
  %505 = vmatprep.subr.bf16.mxu0 %v435
  %506 = vmatpush1.bf16.msra.mxu0 %v434
  %507 = vmatprep.subr.bf16.mxu0 %v439
  %508 = vmatpush1.bf16.msra.mxu0 %v438
  %509 = vmatprep.subr.bf16.mxu0 %v462
  %510 = vmatpush1.bf16.msra.mxu0 %v459
  %511 = vmatprep.subr.bf16.mxu0 0
  %512 = vmatpush1.bf16.msra.mxu0 0
  %513 = vmatprep.subr.bf16.mxu0 0
  %514 = vmatpush1.bf16.msra.mxu0 0
  %515 = vmatprep.subr.bf16.mxu0 0
  %516 = vmatpush1.bf16.msra.mxu0 0
  %517 = vmatprep.subr.bf16.mxu0 0
  %518 = vmatpush1.bf16.msra.mxu0 0
  %519 = vmatprep.subr.bf16.mxu0 0
  %520 = vmatpush1.bf16.msra.mxu0 0
  %521 = vmatprep.subr.bf16.mxu0 0
  %522 = vmatpush1.bf16.msra.mxu0 0
  %523 = vmatprep.subr.bf16.mxu0 0
  %524 = vmatpush1.bf16.msra.mxu0 0
  %525 = vmatprep.subr.bf16.mxu0 0
  %526 = vmatpush1.bf16.msra.mxu0 0
  %527 = vmatprep.subr.bf16.mxu0 0
  %528 = vmatpush1.bf16.msra.mxu0 0
  %529 = vmatprep.subr.bf16.mxu0 0
  %530 = vmatpush1.bf16.msra.mxu0 0
  %531 = vmatprep.subr.bf16.mxu0 0
  %532 = vmatpush1.bf16.msra.mxu0 0
  %533 = vmatprep.subr.bf16.mxu0 0
  %534 = vmatpush1.bf16.msra.mxu0 0
  %535 = vmatprep.subr.bf16.mxu0 0
  %536 = vmatpush1.bf16.msra.mxu0 0
  %537 = vmatprep.mubr.bf16.mxu0 0
  %538 = vmatmul.mubr.bf16.gmra.mrb[0].mxu0 %v446
  %v539 = vpop.f32.mrb[0].mxu0
  %v540 = vadd.f32 0.0, %v539
  %v541 = vpop.f32.mrb[0].mxu0
  %v542 = vadd.f32 0.0, %v541
  %v543 = vpop.f32.mrb[0].mxu0
  %v544 = vpop.f32.mrb[0].mxu0
  %545 = vdwg.mxu0
  %v546 = vmax.f32 %v499, 0.0
  %v547 = vmax.f32 %v501, 0.0
  %v548 = vmax.f32 %v540, 0.0
  %v549 = vmax.f32 %v542, 0.0
  %v550 = vld [vmem:[%s2] sm:$0xc]
  %551 = vrot.lane.b32.xlu0 %v546, 17
  %v552 = vpop.permute.xlu0 %551
  %553 = vrot.lane.b32.xlu0 %v547, 17
  %v554 = vpop.permute.xlu0 %553
  %555 = vrot.lane.b32.xlu0 %v548, 17
  %v556 = vpop.permute.xlu0 %555
  %557 = vrot.lane.b32.xlu0 %v549, 17
  %v558 = vpop.permute.xlu0 %557
  %v559 = vsel %vm52, %v556, %v558
  %v560 = vsel %vm52, %v554, %v556
  %v561 = vsel %vm52, %v552, %v554
  %v562 = vsel %vm52, %v558, %v552
  %v563 = vmul.f32 %v562, %v62
  %v564 = vmul.f32 %v561, %v66
  %v565 = vmul.f32 %v560, %v70
  %v566 = vmul.f32 %v559, %v74
  %567 = vrot.lane.b32.xlu0 %v546, 16
  %v568 = vpop.permute.xlu0 %567
  %569 = vrot.lane.b32.xlu0 %v547, 16
  %v570 = vpop.permute.xlu0 %569
  %571 = vrot.lane.b32.xlu0 %v548, 16
  %v572 = vpop.permute.xlu0 %571
  %573 = vrot.lane.b32.xlu0 %v549, 16
  %v574 = vpop.permute.xlu0 %573
  %v575 = vsel %vm91, %v572, %v574
  %v576 = vsel %vm91, %v570, %v572
  %v577 = vsel %vm91, %v568, %v570
  %v578 = vsel %vm91, %v574, %v568
  %v579 = vmul.f32 %v578, %v102
  %v580 = vmul.f32 %v577, %v106
  %v581 = vmul.f32 %v576, %v110
  %v582 = vmul.f32 %v575, %v114
  %583 = vrot.lane.b32.xlu0 %v546, 15
  %v584 = vpop.permute.xlu0 %583
  %585 = vrot.lane.b32.xlu0 %v547, 15
  %v586 = vpop.permute.xlu0 %585
  %587 = vrot.lane.b32.xlu0 %v548, 15
  %v588 = vpop.permute.xlu0 %587
  %589 = vrot.lane.b32.xlu0 %v549, 15
  %v590 = vpop.permute.xlu0 %589
  %v591 = vsel %vm131, %v588, %v590
  %v592 = vsel %vm131, %v586, %v588
  %v593 = vsel %vm131, %v584, %v586
  %v594 = vsel %vm131, %v590, %v584
  %v595 = vmul.f32 %v594, %v142
  %v596 = vmul.f32 %v593, %v146
  %v597 = vmul.f32 %v592, %v150
  %v598 = vmul.f32 %v591, %v154
  %599 = vrot.lane.b32.xlu0 %v546, 1
  %v600 = vpop.permute.xlu0 %599
  %601 = vrot.lane.b32.xlu0 %v547, 1
  %v602 = vpop.permute.xlu0 %601
  %603 = vrot.lane.b32.xlu0 %v548, 1
  %v604 = vpop.permute.xlu0 %603
  %605 = vrot.lane.b32.xlu0 %v549, 1
  %v606 = vpop.permute.xlu0 %605
  %v607 = vsel %vm171, %v604, %v606
  %v608 = vsel %vm171, %v602, %v604
  %v609 = vsel %vm171, %v600, %v602
  %v610 = vsel %vm171, %v606, %v600
  %v611 = vmul.f32 %v610, %v182
  %v612 = vmul.f32 %v609, %v186
  %v613 = vmul.f32 %v608, %v190
  %v614 = vmul.f32 %v607, %v194
  %615 = vrot.lane.b32.xlu0 %v546, 127
  %v616 = vpop.permute.xlu0 %615
  %617 = vrot.lane.b32.xlu0 %v547, 127
  %v618 = vpop.permute.xlu0 %617
  %619 = vrot.lane.b32.xlu0 %v548, 127
  %v620 = vpop.permute.xlu0 %619
  %621 = vrot.lane.b32.xlu0 %v549, 127
  %v622 = vpop.permute.xlu0 %621
  %v623 = vsel %vm211, %v620, %v622
  %v624 = vsel %vm211, %v618, %v620
  %v625 = vsel %vm211, %v616, %v618
  %v626 = vsel %vm211, %v622, %v616
  %v627 = vmul.f32 %v625, %v222
  %v628 = vmul.f32 %v624, %v226
  %v629 = vmul.f32 %v623, %v230
  %v630 = vmul.f32 %v626, %v234
  %631 = vrot.lane.b32.xlu0 %v546, 113
  %v632 = vpop.permute.xlu0 %631
  %633 = vrot.lane.b32.xlu0 %v547, 113
  %v634 = vpop.permute.xlu0 %633
  %635 = vrot.lane.b32.xlu0 %v548, 113
  %v636 = vpop.permute.xlu0 %635
  %637 = vrot.lane.b32.xlu0 %v549, 113
  %v638 = vpop.permute.xlu0 %637
  %v639 = vsel %vm251, %v636, %v638
  %v640 = vsel %vm251, %v634, %v636
  %v641 = vsel %vm251, %v632, %v634
  %v642 = vsel %vm251, %v638, %v632
  %v643 = vmul.f32 %v641, %v262
  %v644 = vmul.f32 %v640, %v266
  %v645 = vmul.f32 %v639, %v270
  %v646 = vmul.f32 %v642, %v274
  %647 = vrot.lane.b32.xlu0 %v546, 112
  %v648 = vpop.permute.xlu0 %647
  %649 = vrot.lane.b32.xlu0 %v547, 112
  %v650 = vpop.permute.xlu0 %649
  %651 = vrot.lane.b32.xlu0 %v548, 112
  %v652 = vpop.permute.xlu0 %651
  %653 = vrot.lane.b32.xlu0 %v549, 112
  %v654 = vpop.permute.xlu0 %653
  %v655 = vsel %vm291, %v652, %v654
  %v656 = vsel %vm291, %v650, %v652
  %v657 = vsel %vm291, %v648, %v650
  %v658 = vsel %vm291, %v654, %v648
  %v659 = vmul.f32 %v657, %v302
  %v660 = vmul.f32 %v656, %v306
  %v661 = vmul.f32 %v655, %v310
  %v662 = vmul.f32 %v658, %v314
  %663 = vrot.lane.b32.xlu0 %v546, 111
  %v664 = vpop.permute.xlu0 %663
  %665 = vrot.lane.b32.xlu0 %v547, 111
  %v666 = vpop.permute.xlu0 %665
  %667 = vrot.lane.b32.xlu0 %v548, 111
  %v668 = vpop.permute.xlu0 %667
  %669 = vrot.lane.b32.xlu0 %v549, 111
  %v670 = vpop.permute.xlu0 %669
  %v671 = vsel %vm331, %v668, %v670
  %v672 = vsel %vm331, %v666, %v668
  %v673 = vsel %vm331, %v664, %v666
  %v674 = vsel %vm331, %v670, %v664
  %v675 = vmul.f32 %v673, %v342
  %v676 = vmul.f32 %v672, %v346
  %v677 = vmul.f32 %v671, %v350
  %v678 = vmul.f32 %v674, %v354
  %v683 = vrot.slane %v579, 4
  %v684 = vrot.slane %v580, 4
  %v685 = vrot.slane %v581, 4
  %v686 = vrot.slane %v582, 4
  %v695 = vrot.slane %v611, 4
  %v696 = vrot.slane %v612, 4
  %v697 = vrot.slane %v613, 4
  %v698 = vrot.slane %v614, 4
  %v707 = vrot.slane %v627, 4
  %v708 = vrot.slane %v628, 4
  %v709 = vrot.slane %v629, 4
  %v710 = vrot.slane %v630, 4
  %v719 = vrot.slane %v659, 4
  %v720 = vrot.slane %v660, 4
  %v721 = vrot.slane %v661, 4
  %v722 = vrot.slane %v662, 4
  %v727 = vsel %vm411, %v563, %v683
  %v728 = vsel %vm411, %v564, %v684
  %v729 = vsel %vm411, %v565, %v685
  %v730 = vsel %vm411, %v566, %v686
  %v731 = vsel %vm411, %v595, %v695
  %v732 = vsel %vm411, %v596, %v696
  %v733 = vsel %vm411, %v597, %v697
  %v734 = vsel %vm411, %v598, %v698
  %v735 = vsel %vm411, %v546, %v707
  %v736 = vsel %vm411, %v547, %v708
  %v737 = vsel %vm411, %v548, %v709
  %v738 = vsel %vm411, %v549, %v710
  %v739 = vsel %vm411, %v643, %v719
  %v740 = vsel %vm411, %v644, %v720
  %v741 = vsel %vm411, %v645, %v721
  %v742 = vsel %vm411, %v646, %v722
  %v743 = vsel %vm411, %v675, 1.0
  %v744 = vsel %vm411, %v676, 1.0
  %v745 = vsel %vm411, %v677, 1.0
  %v746 = vsel %vm411, %v678, 1.0
  %v747 = vpack.c.bf16 %v731, %v727
  %v748 = vpack.c.bf16 %v732, %v728
  %v749 = vpack.c.bf16 %v733, %v729
  %v750 = vpack.c.bf16 %v734, %v730
  %v751 = vpack.c.bf16 %v739, %v735
  %v752 = vpack.c.bf16 %v740, %v736
  %v753 = vpack.c.bf16 %v741, %v737
  %v754 = vpack.c.bf16 %v742, %v738
  %v755 = vpack.c.bf16 %v743, %v743
  %v756 = vpack.c.bf16 %v744, %v744
  %v757 = vpack.c.bf16 %v745, %v745
  %v758 = vpack.c.bf16 %v746, %v746
  %v760 = vunpack.c.l.b16 %v550
  %v761 = vpack.c.b16 %v760, %v760
  %v762 = vrot.slane %v761, 2
  %v764 = vsel %vm444, %v762, 0
  %v767 = vand.u32 %v755, %v451
  %v770 = vand.u32 %v756, %v451
  %v773 = vand.u32 %v757, %v451
  %v776 = vand.u32 %v758, %v451
  %778 = vmatprep.subr.bf16.mxu0 %v748
  %779 = vmatpush1.bf16.msra.mxu0 %v747
  %780 = vmatprep.subr.bf16.mxu0 %v752
  %781 = vmatpush1.bf16.msra.mxu0 %v751
  %782 = vmatprep.subr.bf16.mxu0 %v770
  %783 = vmatpush1.bf16.msra.mxu0 %v767
  %784 = vmatprep.subr.bf16.mxu0 0
  %785 = vmatpush1.bf16.msra.mxu0 0
  %786 = vmatprep.subr.bf16.mxu0 0
  %787 = vmatpush1.bf16.msra.mxu0 0
  %788 = vmatprep.subr.bf16.mxu0 0
  %789 = vmatpush1.bf16.msra.mxu0 0
  %790 = vmatprep.subr.bf16.mxu0 0
  %791 = vmatpush1.bf16.msra.mxu0 0
  %792 = vmatprep.subr.bf16.mxu0 0
  %793 = vmatpush1.bf16.msra.mxu0 0
  %794 = vmatprep.subr.bf16.mxu0 0
  %795 = vmatpush1.bf16.msra.mxu0 0
  %796 = vmatprep.subr.bf16.mxu0 0
  %797 = vmatpush1.bf16.msra.mxu0 0
  %798 = vmatprep.subr.bf16.mxu0 0
  %799 = vmatpush1.bf16.msra.mxu0 0
  %800 = vmatprep.subr.bf16.mxu0 0
  %801 = vmatpush1.bf16.msra.mxu0 0
  %802 = vmatprep.subr.bf16.mxu0 0
  %803 = vmatpush1.bf16.msra.mxu0 0
  %804 = vmatprep.subr.bf16.mxu0 0
  %805 = vmatpush1.bf16.msra.mxu0 0
  %806 = vmatprep.subr.bf16.mxu0 0
  %807 = vmatpush1.bf16.msra.mxu0 0
  %808 = vmatprep.subr.bf16.mxu0 0
  %809 = vmatpush1.bf16.msra.mxu0 0
  %810 = vmatprep.mubr.bf16.mxu0 0
  %811 = vmatmul.mubr.bf16.gmra.mrb[0].mxu0 %v764
  %v812 = vpop.f32.mrb[0].mxu0
  %v813 = vadd.f32 %v23, %v812
  %v814 = vpop.f32.mrb[0].mxu0
  %v815 = vadd.f32 %v27, %v814
  %v816 = vpop.f32.mrb[0].mxu0
  %v817 = vpop.f32.mrb[0].mxu0
  %818 = vdwg.mxu0
  %819 = vmatprep.subr.bf16.mxu0 %v750
  %820 = vmatpush1.bf16.msra.mxu0 %v749
  %821 = vmatprep.subr.bf16.mxu0 %v754
  %822 = vmatpush1.bf16.msra.mxu0 %v753
  %823 = vmatprep.subr.bf16.mxu0 %v776
  %824 = vmatpush1.bf16.msra.mxu0 %v773
  %825 = vmatprep.subr.bf16.mxu0 0
  %826 = vmatpush1.bf16.msra.mxu0 0
  %827 = vmatprep.subr.bf16.mxu0 0
  %828 = vmatpush1.bf16.msra.mxu0 0
  %829 = vmatprep.subr.bf16.mxu0 0
  %830 = vmatpush1.bf16.msra.mxu0 0
  %831 = vmatprep.subr.bf16.mxu0 0
  %832 = vmatpush1.bf16.msra.mxu0 0
  %833 = vmatprep.subr.bf16.mxu0 0
  %834 = vmatpush1.bf16.msra.mxu0 0
  %835 = vmatprep.subr.bf16.mxu0 0
  %836 = vmatpush1.bf16.msra.mxu0 0
  %837 = vmatprep.subr.bf16.mxu0 0
  %838 = vmatpush1.bf16.msra.mxu0 0
  %839 = vmatprep.subr.bf16.mxu0 0
  %840 = vmatpush1.bf16.msra.mxu0 0
  %841 = vmatprep.subr.bf16.mxu0 0
  %842 = vmatpush1.bf16.msra.mxu0 0
  %843 = vmatprep.subr.bf16.mxu0 0
  %844 = vmatpush1.bf16.msra.mxu0 0
  %845 = vmatprep.subr.bf16.mxu0 0
  %846 = vmatpush1.bf16.msra.mxu0 0
  %847 = vmatprep.subr.bf16.mxu0 0
  %848 = vmatpush1.bf16.msra.mxu0 0
  %849 = vmatprep.subr.bf16.mxu0 0
  %850 = vmatpush1.bf16.msra.mxu0 0
  %851 = vmatprep.mubr.bf16.mxu0 0
  %852 = vmatmul.mubr.bf16.gmra.mrb[0].mxu0 %v764
  %v853 = vpop.f32.mrb[0].mxu0
  %v854 = vadd.f32 %v25, %v853
  %v855 = vpop.f32.mrb[0].mxu0
  %v856 = vadd.f32 %v30, %v855
  %v857 = vpop.f32.mrb[0].mxu0
  %v858 = vpop.f32.mrb[0].mxu0
  %859 = vdwg.mxu0
  %v860 = vmax.f32 %v813, 0.0
  %v861 = vmax.f32 %v815, 0.0
  %v862 = vmax.f32 %v854, 0.0
  %v863 = vmax.f32 %v856, 0.0
  %v864 = vld [vmem:[%s2 + $0x8] sm:$0x3]
  %865 = vrot.lane.b32.xlu0 %v860, 17
  %v866 = vpop.permute.xlu0 %865
  %867 = vrot.lane.b32.xlu0 %v861, 17
  %v868 = vpop.permute.xlu0 %867
  %869 = vrot.lane.b32.xlu0 %v862, 17
  %v870 = vpop.permute.xlu0 %869
  %871 = vrot.lane.b32.xlu0 %v863, 17
  %v872 = vpop.permute.xlu0 %871
  %v873 = vsel %vm52, %v870, %v872
  %v874 = vsel %vm52, %v868, %v870
  %v875 = vsel %vm52, %v866, %v868
  %v876 = vsel %vm52, %v872, %v866
  %v877 = vmul.f32 %v876, %v62
  %v878 = vmul.f32 %v875, %v66
  %v879 = vmul.f32 %v874, %v70
  %v880 = vmul.f32 %v873, %v74
  %881 = vrot.lane.b32.xlu0 %v860, 16
  %v882 = vpop.permute.xlu0 %881
  %883 = vrot.lane.b32.xlu0 %v861, 16
  %v884 = vpop.permute.xlu0 %883
  %885 = vrot.lane.b32.xlu0 %v862, 16
  %v886 = vpop.permute.xlu0 %885
  %887 = vrot.lane.b32.xlu0 %v863, 16
  %v888 = vpop.permute.xlu0 %887
  %v889 = vsel %vm91, %v886, %v888
  %v890 = vsel %vm91, %v884, %v886
  %v891 = vsel %vm91, %v882, %v884
  %v892 = vsel %vm91, %v888, %v882
  %v893 = vmul.f32 %v892, %v102
  %v894 = vmul.f32 %v891, %v106
  %v895 = vmul.f32 %v890, %v110
  %v896 = vmul.f32 %v889, %v114
  %897 = vrot.lane.b32.xlu0 %v860, 15
  %v898 = vpop.permute.xlu0 %897
  %899 = vrot.lane.b32.xlu0 %v861, 15
  %v900 = vpop.permute.xlu0 %899
  %901 = vrot.lane.b32.xlu0 %v862, 15
  %v902 = vpop.permute.xlu0 %901
  %903 = vrot.lane.b32.xlu0 %v863, 15
  %v904 = vpop.permute.xlu0 %903
  %v905 = vsel %vm131, %v902, %v904
  %v906 = vsel %vm131, %v900, %v902
  %v907 = vsel %vm131, %v898, %v900
  %v908 = vsel %vm131, %v904, %v898
  %v909 = vmul.f32 %v908, %v142
  %v910 = vmul.f32 %v907, %v146
  %v911 = vmul.f32 %v906, %v150
  %v912 = vmul.f32 %v905, %v154
  %913 = vrot.lane.b32.xlu0 %v860, 1
  %v914 = vpop.permute.xlu0 %913
  %915 = vrot.lane.b32.xlu0 %v861, 1
  %v916 = vpop.permute.xlu0 %915
  %917 = vrot.lane.b32.xlu0 %v862, 1
  %v918 = vpop.permute.xlu0 %917
  %919 = vrot.lane.b32.xlu0 %v863, 1
  %v920 = vpop.permute.xlu0 %919
  %v921 = vsel %vm171, %v918, %v920
  %v922 = vsel %vm171, %v916, %v918
  %v923 = vsel %vm171, %v914, %v916
  %v924 = vsel %vm171, %v920, %v914
  %v925 = vmul.f32 %v924, %v182
  %v926 = vmul.f32 %v923, %v186
  %v927 = vmul.f32 %v922, %v190
  %v928 = vmul.f32 %v921, %v194
  %929 = vrot.lane.b32.xlu0 %v860, 127
  %v930 = vpop.permute.xlu0 %929
  %931 = vrot.lane.b32.xlu0 %v861, 127
  %v932 = vpop.permute.xlu0 %931
  %933 = vrot.lane.b32.xlu0 %v862, 127
  %v934 = vpop.permute.xlu0 %933
  %935 = vrot.lane.b32.xlu0 %v863, 127
  %v936 = vpop.permute.xlu0 %935
  %v937 = vsel %vm211, %v934, %v936
  %v938 = vsel %vm211, %v932, %v934
  %v939 = vsel %vm211, %v930, %v932
  %v940 = vsel %vm211, %v936, %v930
  %v941 = vmul.f32 %v939, %v222
  %v942 = vmul.f32 %v938, %v226
  %v943 = vmul.f32 %v937, %v230
  %v944 = vmul.f32 %v940, %v234
  %945 = vrot.lane.b32.xlu0 %v860, 113
  %v946 = vpop.permute.xlu0 %945
  %947 = vrot.lane.b32.xlu0 %v861, 113
  %v948 = vpop.permute.xlu0 %947
  %949 = vrot.lane.b32.xlu0 %v862, 113
  %v950 = vpop.permute.xlu0 %949
  %951 = vrot.lane.b32.xlu0 %v863, 113
  %v952 = vpop.permute.xlu0 %951
  %v953 = vsel %vm251, %v950, %v952
  %v954 = vsel %vm251, %v948, %v950
  %v955 = vsel %vm251, %v946, %v948
  %v956 = vsel %vm251, %v952, %v946
  %v957 = vmul.f32 %v955, %v262
  %v958 = vmul.f32 %v954, %v266
  %v959 = vmul.f32 %v953, %v270
  %v960 = vmul.f32 %v956, %v274
  %961 = vrot.lane.b32.xlu0 %v860, 112
  %v962 = vpop.permute.xlu0 %961
  %963 = vrot.lane.b32.xlu0 %v861, 112
  %v964 = vpop.permute.xlu0 %963
  %965 = vrot.lane.b32.xlu0 %v862, 112
  %v966 = vpop.permute.xlu0 %965
  %967 = vrot.lane.b32.xlu0 %v863, 112
  %v968 = vpop.permute.xlu0 %967
  %v969 = vsel %vm291, %v966, %v968
  %v970 = vsel %vm291, %v964, %v966
  %v971 = vsel %vm291, %v962, %v964
  %v972 = vsel %vm291, %v968, %v962
  %v973 = vmul.f32 %v971, %v302
  %v974 = vmul.f32 %v970, %v306
  %v975 = vmul.f32 %v969, %v310
  %v976 = vmul.f32 %v972, %v314
  %977 = vrot.lane.b32.xlu0 %v860, 111
  %v978 = vpop.permute.xlu0 %977
  %979 = vrot.lane.b32.xlu0 %v861, 111
  %v980 = vpop.permute.xlu0 %979
  %981 = vrot.lane.b32.xlu0 %v862, 111
  %v982 = vpop.permute.xlu0 %981
  %983 = vrot.lane.b32.xlu0 %v863, 111
  %v984 = vpop.permute.xlu0 %983
  %v985 = vsel %vm331, %v982, %v984
  %v986 = vsel %vm331, %v980, %v982
  %v987 = vsel %vm331, %v978, %v980
  %v988 = vsel %vm331, %v984, %v978
  %v989 = vmul.f32 %v987, %v342
  %v990 = vmul.f32 %v986, %v346
  %v991 = vmul.f32 %v985, %v350
  %v992 = vmul.f32 %v988, %v354
  %v997 = vrot.slane %v893, 4
  %v998 = vrot.slane %v894, 4
  %v999 = vrot.slane %v895, 4
  %v1000 = vrot.slane %v896, 4
  %v1009 = vrot.slane %v925, 4
  %v1010 = vrot.slane %v926, 4
  %v1011 = vrot.slane %v927, 4
  %v1012 = vrot.slane %v928, 4
  %v1021 = vrot.slane %v941, 4
  %v1022 = vrot.slane %v942, 4
  %v1023 = vrot.slane %v943, 4
  %v1024 = vrot.slane %v944, 4
  %v1033 = vrot.slane %v973, 4
  %v1034 = vrot.slane %v974, 4
  %v1035 = vrot.slane %v975, 4
  %v1036 = vrot.slane %v976, 4
  %v1041 = vsel %vm411, %v877, %v997
  %v1042 = vsel %vm411, %v878, %v998
  %v1043 = vsel %vm411, %v879, %v999
  %v1044 = vsel %vm411, %v880, %v1000
  %v1045 = vsel %vm411, %v909, %v1009
  %v1046 = vsel %vm411, %v910, %v1010
  %v1047 = vsel %vm411, %v911, %v1011
  %v1048 = vsel %vm411, %v912, %v1012
  %v1049 = vsel %vm411, %v860, %v1021
  %v1050 = vsel %vm411, %v861, %v1022
  %v1051 = vsel %vm411, %v862, %v1023
  %v1052 = vsel %vm411, %v863, %v1024
  %v1053 = vsel %vm411, %v957, %v1033
  %v1054 = vsel %vm411, %v958, %v1034
  %v1055 = vsel %vm411, %v959, %v1035
  %v1056 = vsel %vm411, %v960, %v1036
  %v1057 = vsel %vm411, %v989, 1.0
  %v1058 = vsel %vm411, %v990, 1.0
  %v1059 = vsel %vm411, %v991, 1.0
  %v1060 = vsel %vm411, %v992, 1.0
  %v1061 = vpack.c.bf16 %v1045, %v1041
  %v1062 = vpack.c.bf16 %v1046, %v1042
  %v1063 = vpack.c.bf16 %v1047, %v1043
  %v1064 = vpack.c.bf16 %v1048, %v1044
  %v1065 = vpack.c.bf16 %v1053, %v1049
  %v1066 = vpack.c.bf16 %v1054, %v1050
  %v1067 = vpack.c.bf16 %v1055, %v1051
  %v1068 = vpack.c.bf16 %v1056, %v1052
  %v1069 = vpack.c.bf16 %v1057, %v1057
  %v1070 = vpack.c.bf16 %v1058, %v1058
  %v1071 = vpack.c.bf16 %v1059, %v1059
  %v1072 = vpack.c.bf16 %v1060, %v1060
  %v1074 = vsel %vm444, %v864, 0
  %v1077 = vand.u32 %v1069, %v451
  %v1080 = vand.u32 %v1070, %v451
  %v1083 = vand.u32 %v1071, %v451
  %v1086 = vand.u32 %v1072, %v451
  %1088 = vmatprep.subr.bf16.mxu0 %v1062
  %1089 = vmatpush1.bf16.msra.mxu0 %v1061
  %1090 = vmatprep.subr.bf16.mxu0 %v1066
  %1091 = vmatpush1.bf16.msra.mxu0 %v1065
  %1092 = vmatprep.subr.bf16.mxu0 %v1080
  %1093 = vmatpush1.bf16.msra.mxu0 %v1077
  %1094 = vmatprep.subr.bf16.mxu0 0
  %1095 = vmatpush1.bf16.msra.mxu0 0
  %1096 = vmatprep.subr.bf16.mxu0 0
  %1097 = vmatpush1.bf16.msra.mxu0 0
  %1098 = vmatprep.subr.bf16.mxu0 0
  %1099 = vmatpush1.bf16.msra.mxu0 0
  %1100 = vmatprep.subr.bf16.mxu0 0
  %1101 = vmatpush1.bf16.msra.mxu0 0
  %1102 = vmatprep.subr.bf16.mxu0 0
  %1103 = vmatpush1.bf16.msra.mxu0 0
  %1104 = vmatprep.subr.bf16.mxu0 0
  %1105 = vmatpush1.bf16.msra.mxu0 0
  %1106 = vmatprep.subr.bf16.mxu0 0
  %1107 = vmatpush1.bf16.msra.mxu0 0
  %1108 = vmatprep.subr.bf16.mxu0 0
  %1109 = vmatpush1.bf16.msra.mxu0 0
  %1110 = vmatprep.subr.bf16.mxu0 0
  %1111 = vmatpush1.bf16.msra.mxu0 0
  %1112 = vmatprep.subr.bf16.mxu0 0
  %1113 = vmatpush1.bf16.msra.mxu0 0
  %1114 = vmatprep.subr.bf16.mxu0 0
  %1115 = vmatpush1.bf16.msra.mxu0 0
  %1116 = vmatprep.subr.bf16.mxu0 0
  %1117 = vmatpush1.bf16.msra.mxu0 0
  %1118 = vmatprep.subr.bf16.mxu0 0
  %1119 = vmatpush1.bf16.msra.mxu0 0
  %1120 = vmatprep.mubr.bf16.mxu0 0
  %1121 = vmatmul.mubr.bf16.gmra.mrb[0].mxu0 %v1074
  %v1122 = vpop.f32.mrb[0].mxu0
  %v1123 = vadd.f32 0.0, %v1122
  %v1124 = vpop.f32.mrb[0].mxu0
  %v1125 = vadd.f32 0.0, %v1124
  %v1126 = vpop.f32.mrb[0].mxu0
  %v1127 = vpop.f32.mrb[0].mxu0
  %1128 = vdwg.mxu0
  %1129 = vmatprep.subr.bf16.mxu0 %v1064
  %1130 = vmatpush1.bf16.msra.mxu0 %v1063
  %1131 = vmatprep.subr.bf16.mxu0 %v1068
  %1132 = vmatpush1.bf16.msra.mxu0 %v1067
  %1133 = vmatprep.subr.bf16.mxu0 %v1086
  %1134 = vmatpush1.bf16.msra.mxu0 %v1083
  %1135 = vmatprep.subr.bf16.mxu0 0
  %1136 = vmatpush1.bf16.msra.mxu0 0
  %1137 = vmatprep.subr.bf16.mxu0 0
  %1138 = vmatpush1.bf16.msra.mxu0 0
  %1139 = vmatprep.subr.bf16.mxu0 0
  %1140 = vmatpush1.bf16.msra.mxu0 0
  %1141 = vmatprep.subr.bf16.mxu0 0
  %1142 = vmatpush1.bf16.msra.mxu0 0
  %1143 = vmatprep.subr.bf16.mxu0 0
  %1144 = vmatpush1.bf16.msra.mxu0 0
  %1145 = vmatprep.subr.bf16.mxu0 0
  %1146 = vmatpush1.bf16.msra.mxu0 0
  %1147 = vmatprep.subr.bf16.mxu0 0
  %1148 = vmatpush1.bf16.msra.mxu0 0
  %1149 = vmatprep.subr.bf16.mxu0 0
  %1150 = vmatpush1.bf16.msra.mxu0 0
  %1151 = vmatprep.subr.bf16.mxu0 0
  %1152 = vmatpush1.bf16.msra.mxu0 0
  %1153 = vmatprep.subr.bf16.mxu0 0
  %1154 = vmatpush1.bf16.msra.mxu0 0
  %1155 = vmatprep.subr.bf16.mxu0 0
  %1156 = vmatpush1.bf16.msra.mxu0 0
  %1157 = vmatprep.subr.bf16.mxu0 0
  %1158 = vmatpush1.bf16.msra.mxu0 0
  %1159 = vmatprep.subr.bf16.mxu0 0
  %1160 = vmatpush1.bf16.msra.mxu0 0
  %1161 = vmatprep.mubr.bf16.mxu0 0
  %1162 = vmatmul.mubr.bf16.gmra.mrb[0].mxu0 %v1074
  %v1163 = vpop.f32.mrb[0].mxu0
  %v1164 = vadd.f32 0.0, %v1163
  %v1165 = vpop.f32.mrb[0].mxu0
  %v1166 = vadd.f32 0.0, %v1165
  %v1167 = vpop.f32.mrb[0].mxu0
  %v1168 = vpop.f32.mrb[0].mxu0
  %1169 = vdwg.mxu0
  %v1170 = vmax.f32 %v1123, 0.0
  %v1171 = vmax.f32 %v1125, 0.0
  %v1172 = vmax.f32 %v1164, 0.0
  %v1173 = vmax.f32 %v1166, 0.0
  %v1174 = vld [vmem:[%s2 + $0x8] sm:$0xc]
  %1175 = vrot.lane.b32.xlu0 %v1170, 17
  %v1176 = vpop.permute.xlu0 %1175
  %1177 = vrot.lane.b32.xlu0 %v1171, 17
  %v1178 = vpop.permute.xlu0 %1177
  %1179 = vrot.lane.b32.xlu0 %v1172, 17
  %v1180 = vpop.permute.xlu0 %1179
  %1181 = vrot.lane.b32.xlu0 %v1173, 17
  %v1182 = vpop.permute.xlu0 %1181
  %v1183 = vsel %vm52, %v1180, %v1182
  %v1184 = vsel %vm52, %v1178, %v1180
  %v1185 = vsel %vm52, %v1176, %v1178
  %v1186 = vsel %vm52, %v1182, %v1176
  %v1187 = vmul.f32 %v1186, %v62
  %v1188 = vmul.f32 %v1185, %v66
  %v1189 = vmul.f32 %v1184, %v70
  %v1190 = vmul.f32 %v1183, %v74
  %1191 = vrot.lane.b32.xlu0 %v1170, 16
  %v1192 = vpop.permute.xlu0 %1191
  %1193 = vrot.lane.b32.xlu0 %v1171, 16
  %v1194 = vpop.permute.xlu0 %1193
  %1195 = vrot.lane.b32.xlu0 %v1172, 16
  %v1196 = vpop.permute.xlu0 %1195
  %1197 = vrot.lane.b32.xlu0 %v1173, 16
  %v1198 = vpop.permute.xlu0 %1197
  %v1199 = vsel %vm91, %v1196, %v1198
  %v1200 = vsel %vm91, %v1194, %v1196
  %v1201 = vsel %vm91, %v1192, %v1194
  %v1202 = vsel %vm91, %v1198, %v1192
  %v1203 = vmul.f32 %v1202, %v102
  %v1204 = vmul.f32 %v1201, %v106
  %v1205 = vmul.f32 %v1200, %v110
  %v1206 = vmul.f32 %v1199, %v114
  %1207 = vrot.lane.b32.xlu0 %v1170, 15
  %v1208 = vpop.permute.xlu0 %1207
  %1209 = vrot.lane.b32.xlu0 %v1171, 15
  %v1210 = vpop.permute.xlu0 %1209
  %1211 = vrot.lane.b32.xlu0 %v1172, 15
  %v1212 = vpop.permute.xlu0 %1211
  %1213 = vrot.lane.b32.xlu0 %v1173, 15
  %v1214 = vpop.permute.xlu0 %1213
  %v1215 = vsel %vm131, %v1212, %v1214
  %v1216 = vsel %vm131, %v1210, %v1212
  %v1217 = vsel %vm131, %v1208, %v1210
  %v1218 = vsel %vm131, %v1214, %v1208
  %v1219 = vmul.f32 %v1218, %v142
  %v1220 = vmul.f32 %v1217, %v146
  %v1221 = vmul.f32 %v1216, %v150
  %v1222 = vmul.f32 %v1215, %v154
  %1223 = vrot.lane.b32.xlu0 %v1170, 1
  %v1224 = vpop.permute.xlu0 %1223
  %1225 = vrot.lane.b32.xlu0 %v1171, 1
  %v1226 = vpop.permute.xlu0 %1225
  %1227 = vrot.lane.b32.xlu0 %v1172, 1
  %v1228 = vpop.permute.xlu0 %1227
  %1229 = vrot.lane.b32.xlu0 %v1173, 1
  %v1230 = vpop.permute.xlu0 %1229
  %v1231 = vsel %vm171, %v1228, %v1230
  %v1232 = vsel %vm171, %v1226, %v1228
  %v1233 = vsel %vm171, %v1224, %v1226
  %v1234 = vsel %vm171, %v1230, %v1224
  %v1235 = vmul.f32 %v1234, %v182
  %v1236 = vmul.f32 %v1233, %v186
  %v1237 = vmul.f32 %v1232, %v190
  %v1238 = vmul.f32 %v1231, %v194
  %1239 = vrot.lane.b32.xlu0 %v1170, 127
  %v1240 = vpop.permute.xlu0 %1239
  %1241 = vrot.lane.b32.xlu0 %v1171, 127
  %v1242 = vpop.permute.xlu0 %1241
  %1243 = vrot.lane.b32.xlu0 %v1172, 127
  %v1244 = vpop.permute.xlu0 %1243
  %1245 = vrot.lane.b32.xlu0 %v1173, 127
  %v1246 = vpop.permute.xlu0 %1245
  %v1247 = vsel %vm211, %v1244, %v1246
  %v1248 = vsel %vm211, %v1242, %v1244
  %v1249 = vsel %vm211, %v1240, %v1242
  %v1250 = vsel %vm211, %v1246, %v1240
  %v1251 = vmul.f32 %v1249, %v222
  %v1252 = vmul.f32 %v1248, %v226
  %v1253 = vmul.f32 %v1247, %v230
  %v1254 = vmul.f32 %v1250, %v234
  %1255 = vrot.lane.b32.xlu0 %v1170, 113
  %v1256 = vpop.permute.xlu0 %1255
  %1257 = vrot.lane.b32.xlu0 %v1171, 113
  %v1258 = vpop.permute.xlu0 %1257
  %1259 = vrot.lane.b32.xlu0 %v1172, 113
  %v1260 = vpop.permute.xlu0 %1259
  %1261 = vrot.lane.b32.xlu0 %v1173, 113
  %v1262 = vpop.permute.xlu0 %1261
  %v1263 = vsel %vm251, %v1260, %v1262
  %v1264 = vsel %vm251, %v1258, %v1260
  %v1265 = vsel %vm251, %v1256, %v1258
  %v1266 = vsel %vm251, %v1262, %v1256
  %v1267 = vmul.f32 %v1265, %v262
  %v1268 = vmul.f32 %v1264, %v266
  %v1269 = vmul.f32 %v1263, %v270
  %v1270 = vmul.f32 %v1266, %v274
  %1271 = vrot.lane.b32.xlu0 %v1170, 112
  %v1272 = vpop.permute.xlu0 %1271
  %1273 = vrot.lane.b32.xlu0 %v1171, 112
  %v1274 = vpop.permute.xlu0 %1273
  %1275 = vrot.lane.b32.xlu0 %v1172, 112
  %v1276 = vpop.permute.xlu0 %1275
  %1277 = vrot.lane.b32.xlu0 %v1173, 112
  %v1278 = vpop.permute.xlu0 %1277
  %v1279 = vsel %vm291, %v1276, %v1278
  %v1280 = vsel %vm291, %v1274, %v1276
  %v1281 = vsel %vm291, %v1272, %v1274
  %v1282 = vsel %vm291, %v1278, %v1272
  %v1283 = vmul.f32 %v1281, %v302
  %v1284 = vmul.f32 %v1280, %v306
  %v1285 = vmul.f32 %v1279, %v310
  %v1286 = vmul.f32 %v1282, %v314
  %1287 = vrot.lane.b32.xlu0 %v1170, 111
  %v1288 = vpop.permute.xlu0 %1287
  %1289 = vrot.lane.b32.xlu0 %v1171, 111
  %v1290 = vpop.permute.xlu0 %1289
  %1291 = vrot.lane.b32.xlu0 %v1172, 111
  %v1292 = vpop.permute.xlu0 %1291
  %1293 = vrot.lane.b32.xlu0 %v1173, 111
  %v1294 = vpop.permute.xlu0 %1293
  %v1295 = vsel %vm331, %v1292, %v1294
  %v1296 = vsel %vm331, %v1290, %v1292
  %v1297 = vsel %vm331, %v1288, %v1290
  %v1298 = vsel %vm331, %v1294, %v1288
  %v1299 = vmul.f32 %v1297, %v342
  %v1300 = vmul.f32 %v1296, %v346
  %v1301 = vmul.f32 %v1295, %v350
  %v1302 = vmul.f32 %v1298, %v354
  %v1307 = vrot.slane %v1203, 4
  %v1308 = vrot.slane %v1204, 4
  %v1309 = vrot.slane %v1205, 4
  %v1310 = vrot.slane %v1206, 4
  %v1319 = vrot.slane %v1235, 4
  %v1320 = vrot.slane %v1236, 4
  %v1321 = vrot.slane %v1237, 4
  %v1322 = vrot.slane %v1238, 4
  %v1331 = vrot.slane %v1251, 4
  %v1332 = vrot.slane %v1252, 4
  %v1333 = vrot.slane %v1253, 4
  %v1334 = vrot.slane %v1254, 4
  %v1343 = vrot.slane %v1283, 4
  %v1344 = vrot.slane %v1284, 4
  %v1345 = vrot.slane %v1285, 4
  %v1346 = vrot.slane %v1286, 4
  %v1351 = vsel %vm411, %v1187, %v1307
  %v1352 = vsel %vm411, %v1188, %v1308
  %v1353 = vsel %vm411, %v1189, %v1309
  %v1354 = vsel %vm411, %v1190, %v1310
  %v1355 = vsel %vm411, %v1219, %v1319
  %v1356 = vsel %vm411, %v1220, %v1320
  %v1357 = vsel %vm411, %v1221, %v1321
  %v1358 = vsel %vm411, %v1222, %v1322
  %v1359 = vsel %vm411, %v1170, %v1331
  %v1360 = vsel %vm411, %v1171, %v1332
  %v1361 = vsel %vm411, %v1172, %v1333
  %v1362 = vsel %vm411, %v1173, %v1334
  %v1363 = vsel %vm411, %v1267, %v1343
  %v1364 = vsel %vm411, %v1268, %v1344
  %v1365 = vsel %vm411, %v1269, %v1345
  %v1366 = vsel %vm411, %v1270, %v1346
  %v1367 = vsel %vm411, %v1299, 1.0
  %v1368 = vsel %vm411, %v1300, 1.0
  %v1369 = vsel %vm411, %v1301, 1.0
  %v1370 = vsel %vm411, %v1302, 1.0
  %v1371 = vpack.c.bf16 %v1355, %v1351
  %v1372 = vpack.c.bf16 %v1356, %v1352
  %v1373 = vpack.c.bf16 %v1357, %v1353
  %v1374 = vpack.c.bf16 %v1358, %v1354
  %v1375 = vpack.c.bf16 %v1363, %v1359
  %v1376 = vpack.c.bf16 %v1364, %v1360
  %v1377 = vpack.c.bf16 %v1365, %v1361
  %v1378 = vpack.c.bf16 %v1366, %v1362
  %v1379 = vpack.c.bf16 %v1367, %v1367
  %v1380 = vpack.c.bf16 %v1368, %v1368
  %v1381 = vpack.c.bf16 %v1369, %v1369
  %v1382 = vpack.c.bf16 %v1370, %v1370
  %v1384 = vunpack.c.l.b16 %v1174
  %v1385 = vpack.c.b16 %v1384, %v1384
  %v1386 = vrot.slane %v1385, 2
  %v1388 = vsel %vm444, %v1386, 0
  %v1391 = vand.u32 %v1379, %v451
  %v1394 = vand.u32 %v1380, %v451
  %v1397 = vand.u32 %v1381, %v451
  %v1400 = vand.u32 %v1382, %v451
  %1402 = vmatprep.subr.bf16.mxu0 %v1372
  %1403 = vmatpush1.bf16.msra.mxu0 %v1371
  %1404 = vmatprep.subr.bf16.mxu0 %v1376
  %1405 = vmatpush1.bf16.msra.mxu0 %v1375
  %1406 = vmatprep.subr.bf16.mxu0 %v1394
  %1407 = vmatpush1.bf16.msra.mxu0 %v1391
  %1408 = vmatprep.subr.bf16.mxu0 0
  %1409 = vmatpush1.bf16.msra.mxu0 0
  %1410 = vmatprep.subr.bf16.mxu0 0
  %1411 = vmatpush1.bf16.msra.mxu0 0
  %1412 = vmatprep.subr.bf16.mxu0 0
  %1413 = vmatpush1.bf16.msra.mxu0 0
  %1414 = vmatprep.subr.bf16.mxu0 0
  %1415 = vmatpush1.bf16.msra.mxu0 0
  %1416 = vmatprep.subr.bf16.mxu0 0
  %1417 = vmatpush1.bf16.msra.mxu0 0
  %1418 = vmatprep.subr.bf16.mxu0 0
  %1419 = vmatpush1.bf16.msra.mxu0 0
  %1420 = vmatprep.subr.bf16.mxu0 0
  %1421 = vmatpush1.bf16.msra.mxu0 0
  %1422 = vmatprep.subr.bf16.mxu0 0
  %1423 = vmatpush1.bf16.msra.mxu0 0
  %1424 = vmatprep.subr.bf16.mxu0 0
  %1425 = vmatpush1.bf16.msra.mxu0 0
  %1426 = vmatprep.subr.bf16.mxu0 0
  %1427 = vmatpush1.bf16.msra.mxu0 0
  %1428 = vmatprep.subr.bf16.mxu0 0
  %1429 = vmatpush1.bf16.msra.mxu0 0
  %1430 = vmatprep.subr.bf16.mxu0 0
  %1431 = vmatpush1.bf16.msra.mxu0 0
  %1432 = vmatprep.subr.bf16.mxu0 0
  %1433 = vmatpush1.bf16.msra.mxu0 0
  %1434 = vmatprep.mubr.bf16.mxu0 0
  %1435 = vmatmul.mubr.bf16.gmra.mrb[0].mxu0 %v1388
  %v1436 = vpop.f32.mrb[0].mxu0
  %v1437 = vadd.f32 %v860, %v1436
  %v1438 = vpop.f32.mrb[0].mxu0
  %v1439 = vadd.f32 %v861, %v1438
  %v1440 = vpop.f32.mrb[0].mxu0
  %v1441 = vpop.f32.mrb[0].mxu0
  %1442 = vdwg.mxu0
  %1443 = vmatprep.subr.bf16.mxu0 %v1374
  %1444 = vmatpush1.bf16.msra.mxu0 %v1373
  %1445 = vmatprep.subr.bf16.mxu0 %v1378
  %1446 = vmatpush1.bf16.msra.mxu0 %v1377
  %1447 = vmatprep.subr.bf16.mxu0 %v1400
  %1448 = vmatpush1.bf16.msra.mxu0 %v1397
  %1449 = vmatprep.subr.bf16.mxu0 0
  %1450 = vmatpush1.bf16.msra.mxu0 0
  %1451 = vmatprep.subr.bf16.mxu0 0
  %1452 = vmatpush1.bf16.msra.mxu0 0
  %1453 = vmatprep.subr.bf16.mxu0 0
  %1454 = vmatpush1.bf16.msra.mxu0 0
  %1455 = vmatprep.subr.bf16.mxu0 0
  %1456 = vmatpush1.bf16.msra.mxu0 0
  %1457 = vmatprep.subr.bf16.mxu0 0
  %1458 = vmatpush1.bf16.msra.mxu0 0
  %1459 = vmatprep.subr.bf16.mxu0 0
  %1460 = vmatpush1.bf16.msra.mxu0 0
  %1461 = vmatprep.subr.bf16.mxu0 0
  %1462 = vmatpush1.bf16.msra.mxu0 0
  %1463 = vmatprep.subr.bf16.mxu0 0
  %1464 = vmatpush1.bf16.msra.mxu0 0
  %1465 = vmatprep.subr.bf16.mxu0 0
  %1466 = vmatpush1.bf16.msra.mxu0 0
  %1467 = vmatprep.subr.bf16.mxu0 0
  %1468 = vmatpush1.bf16.msra.mxu0 0
  %1469 = vmatprep.subr.bf16.mxu0 0
  %1470 = vmatpush1.bf16.msra.mxu0 0
  %1471 = vmatprep.subr.bf16.mxu0 0
  %1472 = vmatpush1.bf16.msra.mxu0 0
  %1473 = vmatprep.subr.bf16.mxu0 0
  %1474 = vmatpush1.bf16.msra.mxu0 0
  %1475 = vmatprep.mubr.bf16.mxu0 0
  %1476 = vmatmul.mubr.bf16.gmra.mrb[0].mxu0 %v1388
  %v1477 = vpop.f32.mrb[0].mxu0
  %v1478 = vadd.f32 %v862, %v1477
  %v1479 = vpop.f32.mrb[0].mxu0
  %v1480 = vadd.f32 %v863, %v1479
  %v1481 = vpop.f32.mrb[0].mxu0
  %v1482 = vpop.f32.mrb[0].mxu0
  %1483 = vdwg.mxu0
  %v1484 = vmax.f32 %v1437, 0.0
  %v1485 = vmax.f32 %v1439, 0.0
  %v1486 = vmax.f32 %v1478, 0.0
  %v1487 = vmax.f32 %v1480, 0.0
  %v1488 = vld [vmem:[%s2 + $0x10] sm:$0xf]
  %1489 = vrot.lane.b32.xlu0 %v40, 9
  %v1490 = vpop.permute.xlu0 %1489
  %v1491 = vld [vmem:[%s4 + $0x20] ss:$0 sm:$0xff]
  %v1492 = vmul.f32 %v1490, %v1491
  %1493 = vrot.lane.b32.xlu0 %v40, 8
  %v1494 = vpop.permute.xlu0 %1493
  %v1495 = vld [vmem:[%s4 + $0x21] ss:$0 sm:$0xff]
  %v1496 = vmul.f32 %v1494, %v1495
  %1497 = vrot.lane.b32.xlu0 %v40, 7
  %v1498 = vpop.permute.xlu0 %1497
  %v1499 = vld [vmem:[%s4 + $0x22] ss:$0 sm:$0xff]
  %v1500 = vmul.f32 %v1498, %v1499
  %1501 = vrot.lane.b32.xlu0 %v40, 1
  %v1502 = vpop.permute.xlu0 %1501
  %v1503 = vld [vmem:[%s4 + $0x23] ss:$0 sm:$0xff]
  %v1504 = vmul.f32 %v1502, %v1503
  %1505 = vrot.lane.b32.xlu0 %v40, 127
  %v1506 = vpop.permute.xlu0 %1505
  %v1507 = vld [vmem:[%s4 + $0x25] ss:$0 sm:$0xff]
  %v1508 = vmul.f32 %v1506, %v1507
  %1509 = vrot.lane.b32.xlu0 %v40, 121
  %v1510 = vpop.permute.xlu0 %1509
  %v1511 = vld [vmem:[%s4 + $0x26] ss:$0 sm:$0xff]
  %v1512 = vmul.f32 %v1510, %v1511
  %1513 = vrot.lane.b32.xlu0 %v40, 120
  %v1514 = vpop.permute.xlu0 %1513
  %v1515 = vld [vmem:[%s4 + $0x27] ss:$0 sm:$0xff]
  %v1516 = vmul.f32 %v1514, %v1515
  %1517 = vrot.lane.b32.xlu0 %v40, 119
  %v1518 = vpop.permute.xlu0 %1517
  %v1519 = vld [vmem:[%s4 + $0x48] ss:$0 sm:$0xff]
  %v1520 = vmul.f32 %v1518, %v1519
  %v1521 = vpack.c.bf16 %v1496, %v1492
  %v1522 = vpack.c.bf16 %v1504, %v1500
  %v1523 = vpack.c.bf16 %v1508, %v40
  %v1524 = vpack.c.bf16 %v1516, %v1512
  %v1525 = vpack.c.bf16 1.0, %v1520
  %vm1526 = vcmask 596992
  %v1528 = vsel %vm1526, %v1488, 0
  %vm1530 = vcmask 1044480
  %v1531 = vsel %vm411, 4294967295, 65535
  %v1532 = vsel %vm1530, %v1531, 0
  %v1534 = vand.u32 %v1525, %v1532
  %1536 = vmatprep.subr.bf16.mxu0 0
  %1537 = vmatpush1.bf16.msra.mxu0 %v1521
  %1538 = vmatprep.subr.bf16.mxu0 0
  %1539 = vmatpush1.bf16.msra.mxu0 %v1522
  %1540 = vmatprep.subr.bf16.mxu0 0
  %1541 = vmatpush1.bf16.msra.mxu0 %v1523
  %1542 = vmatprep.subr.bf16.mxu0 0
  %1543 = vmatpush1.bf16.msra.mxu0 %v1524
  %1544 = vmatprep.subr.bf16.mxu0 0
  %1545 = vmatpush1.bf16.msra.mxu0 %v1534
  %1546 = vmatprep.subr.bf16.mxu0 0
  %1547 = vmatpush1.bf16.msra.mxu0 0
  %1548 = vmatprep.subr.bf16.mxu0 0
  %1549 = vmatpush1.bf16.msra.mxu0 0
  %1550 = vmatprep.subr.bf16.mxu0 0
  %1551 = vmatpush1.bf16.msra.mxu0 0
  %1552 = vmatprep.subr.bf16.mxu0 0
  %1553 = vmatpush1.bf16.msra.mxu0 0
  %1554 = vmatprep.subr.bf16.mxu0 0
  %1555 = vmatpush1.bf16.msra.mxu0 0
  %1556 = vmatprep.subr.bf16.mxu0 0
  %1557 = vmatpush1.bf16.msra.mxu0 0
  %1558 = vmatprep.subr.bf16.mxu0 0
  %1559 = vmatpush1.bf16.msra.mxu0 0
  %1560 = vmatprep.subr.bf16.mxu0 0
  %1561 = vmatpush1.bf16.msra.mxu0 0
  %1562 = vmatprep.subr.bf16.mxu0 0
  %1563 = vmatpush1.bf16.msra.mxu0 0
  %1564 = vmatprep.subr.bf16.mxu0 0
  %1565 = vmatpush1.bf16.msra.mxu0 0
  %1566 = vmatprep.subr.bf16.mxu0 0
  %1567 = vmatpush1.bf16.msra.mxu0 0
  %1568 = vmatprep.mubr.bf16.mxu0 0
  %1569 = vmatmul.mubr.bf16.gmra.mrb[0].mxu0 %v1528
  %v1570 = vpop.f32.mrb[0].mxu0
  %v1571 = vadd.f32 0.0, %v1570
  %v1572 = vpop.f32.mrb[0].mxu0
  %v1573 = vpop.f32.mrb[0].mxu0
  %v1574 = vpop.f32.mrb[0].mxu0
  %1575 = vdwg.mxu0
  %v1576 = vmax.f32 %v1571, 0.0
  %v1577 = vld [vmem:[%s2 + $0x18] sm:$0xf]
  %1578 = vrot.lane.b32.xlu0 %v1576, 9
  %v1579 = vpop.permute.xlu0 %1578
  %v1580 = vmul.f32 %v1579, %v1491
  %1581 = vrot.lane.b32.xlu0 %v1576, 8
  %v1582 = vpop.permute.xlu0 %1581
  %v1583 = vmul.f32 %v1582, %v1495
  %1584 = vrot.lane.b32.xlu0 %v1576, 7
  %v1585 = vpop.permute.xlu0 %1584
  %v1586 = vmul.f32 %v1585, %v1499
  %1587 = vrot.lane.b32.xlu0 %v1576, 1
  %v1588 = vpop.permute.xlu0 %1587
  %v1589 = vmul.f32 %v1588, %v1503
  %1590 = vrot.lane.b32.xlu0 %v1576, 127
  %v1591 = vpop.permute.xlu0 %1590
  %v1592 = vmul.f32 %v1591, %v1507
  %1593 = vrot.lane.b32.xlu0 %v1576, 121
  %v1594 = vpop.permute.xlu0 %1593
  %v1595 = vmul.f32 %v1594, %v1511
  %1596 = vrot.lane.b32.xlu0 %v1576, 120
  %v1597 = vpop.permute.xlu0 %1596
  %v1598 = vmul.f32 %v1597, %v1515
  %1599 = vrot.lane.b32.xlu0 %v1576, 119
  %v1600 = vpop.permute.xlu0 %1599
  %v1601 = vmul.f32 %v1600, %v1519
  %v1602 = vpack.c.bf16 %v1583, %v1580
  %v1603 = vpack.c.bf16 %v1589, %v1586
  %v1604 = vpack.c.bf16 %v1592, %v1576
  %v1605 = vpack.c.bf16 %v1598, %v1595
  %v1606 = vpack.c.bf16 1.0, %v1601
  %v1608 = vsel %vm1526, %v1577, 0
  %v1611 = vand.u32 %v1606, %v1532
  %1613 = vmatprep.subr.bf16.mxu0 0
  %1614 = vmatpush1.bf16.msra.mxu0 %v1602
  %1615 = vmatprep.subr.bf16.mxu0 0
  %1616 = vmatpush1.bf16.msra.mxu0 %v1603
  %1617 = vmatprep.subr.bf16.mxu0 0
  %1618 = vmatpush1.bf16.msra.mxu0 %v1604
  %1619 = vmatprep.subr.bf16.mxu0 0
  %1620 = vmatpush1.bf16.msra.mxu0 %v1605
  %1621 = vmatprep.subr.bf16.mxu0 0
  %1622 = vmatpush1.bf16.msra.mxu0 %v1611
  %1623 = vmatprep.subr.bf16.mxu0 0
  %1624 = vmatpush1.bf16.msra.mxu0 0
  %1625 = vmatprep.subr.bf16.mxu0 0
  %1626 = vmatpush1.bf16.msra.mxu0 0
  %1627 = vmatprep.subr.bf16.mxu0 0
  %1628 = vmatpush1.bf16.msra.mxu0 0
  %1629 = vmatprep.subr.bf16.mxu0 0
  %1630 = vmatpush1.bf16.msra.mxu0 0
  %1631 = vmatprep.subr.bf16.mxu0 0
  %1632 = vmatpush1.bf16.msra.mxu0 0
  %1633 = vmatprep.subr.bf16.mxu0 0
  %1634 = vmatpush1.bf16.msra.mxu0 0
  %1635 = vmatprep.subr.bf16.mxu0 0
  %1636 = vmatpush1.bf16.msra.mxu0 0
  %1637 = vmatprep.subr.bf16.mxu0 0
  %1638 = vmatpush1.bf16.msra.mxu0 0
  %1639 = vmatprep.subr.bf16.mxu0 0
  %1640 = vmatpush1.bf16.msra.mxu0 0
  %1641 = vmatprep.subr.bf16.mxu0 0
  %1642 = vmatpush1.bf16.msra.mxu0 0
  %1643 = vmatprep.subr.bf16.mxu0 0
  %1644 = vmatpush1.bf16.msra.mxu0 0
  %1645 = vmatprep.mubr.bf16.mxu0 0
  %1646 = vmatmul.mubr.bf16.gmra.mrb[0].mxu0 %v1608
  %v1647 = vpop.f32.mrb[0].mxu0
  %v1648 = vadd.f32 %v40, %v1647
  %v1649 = vpop.f32.mrb[0].mxu0
  %v1650 = vpop.f32.mrb[0].mxu0
  %v1651 = vpop.f32.mrb[0].mxu0
  %1652 = vdwg.mxu0
  %v1653 = vmax.f32 %v1648, 0.0
  %v1654 = vld [vmem:[%s2 + $0x20] sm:$0xf]
  %1655 = vrot.lane.b32.xlu0 %v1653, 9
  %v1656 = vpop.permute.xlu0 %1655
  %v1657 = vmul.f32 %v1656, %v1491
  %1658 = vrot.lane.b32.xlu0 %v1653, 8
  %v1659 = vpop.permute.xlu0 %1658
  %v1660 = vmul.f32 %v1659, %v1495
  %1661 = vrot.lane.b32.xlu0 %v1653, 7
  %v1662 = vpop.permute.xlu0 %1661
  %v1663 = vmul.f32 %v1662, %v1499
  %1664 = vrot.lane.b32.xlu0 %v1653, 1
  %v1665 = vpop.permute.xlu0 %1664
  %v1666 = vmul.f32 %v1665, %v1503
  %1667 = vrot.lane.b32.xlu0 %v1653, 127
  %v1668 = vpop.permute.xlu0 %1667
  %v1669 = vmul.f32 %v1668, %v1507
  %1670 = vrot.lane.b32.xlu0 %v1653, 121
  %v1671 = vpop.permute.xlu0 %1670
  %v1672 = vmul.f32 %v1671, %v1511
  %1673 = vrot.lane.b32.xlu0 %v1653, 120
  %v1674 = vpop.permute.xlu0 %1673
  %v1675 = vmul.f32 %v1674, %v1515
  %1676 = vrot.lane.b32.xlu0 %v1653, 119
  %v1677 = vpop.permute.xlu0 %1676
  %v1678 = vmul.f32 %v1677, %v1519
  %v1679 = vpack.c.bf16 %v1660, %v1657
  %v1680 = vpack.c.bf16 %v1666, %v1663
  %v1681 = vpack.c.bf16 %v1669, %v1653
  %v1682 = vpack.c.bf16 %v1675, %v1672
  %v1683 = vpack.c.bf16 1.0, %v1678
  %v1685 = vsel %vm1526, %v1654, 0
  %v1688 = vand.u32 %v1683, %v1532
  %1690 = vmatprep.subr.bf16.mxu0 0
  %1691 = vmatpush1.bf16.msra.mxu0 %v1679
  %1692 = vmatprep.subr.bf16.mxu0 0
  %1693 = vmatpush1.bf16.msra.mxu0 %v1680
  %1694 = vmatprep.subr.bf16.mxu0 0
  %1695 = vmatpush1.bf16.msra.mxu0 %v1681
  %1696 = vmatprep.subr.bf16.mxu0 0
  %1697 = vmatpush1.bf16.msra.mxu0 %v1682
  %1698 = vmatprep.subr.bf16.mxu0 0
  %1699 = vmatpush1.bf16.msra.mxu0 %v1688
  %1700 = vmatprep.subr.bf16.mxu0 0
  %1701 = vmatpush1.bf16.msra.mxu0 0
  %1702 = vmatprep.subr.bf16.mxu0 0
  %1703 = vmatpush1.bf16.msra.mxu0 0
  %1704 = vmatprep.subr.bf16.mxu0 0
  %1705 = vmatpush1.bf16.msra.mxu0 0
  %1706 = vmatprep.subr.bf16.mxu0 0
  %1707 = vmatpush1.bf16.msra.mxu0 0
  %1708 = vmatprep.subr.bf16.mxu0 0
  %1709 = vmatpush1.bf16.msra.mxu0 0
  %1710 = vmatprep.subr.bf16.mxu0 0
  %1711 = vmatpush1.bf16.msra.mxu0 0
  %1712 = vmatprep.subr.bf16.mxu0 0
  %1713 = vmatpush1.bf16.msra.mxu0 0
  %1714 = vmatprep.subr.bf16.mxu0 0
  %1715 = vmatpush1.bf16.msra.mxu0 0
  %1716 = vmatprep.subr.bf16.mxu0 0
  %1717 = vmatpush1.bf16.msra.mxu0 0
  %1718 = vmatprep.subr.bf16.mxu0 0
  %1719 = vmatpush1.bf16.msra.mxu0 0
  %1720 = vmatprep.subr.bf16.mxu0 0
  %1721 = vmatpush1.bf16.msra.mxu0 0
  %1722 = vmatprep.mubr.bf16.mxu0 0
  %1723 = vmatmul.mubr.bf16.gmra.mrb[0].mxu0 %v1685
  %v1724 = vpop.f32.mrb[0].mxu0
  %v1725 = vadd.f32 0.0, %v1724
  %v1726 = vpop.f32.mrb[0].mxu0
  %v1727 = vpop.f32.mrb[0].mxu0
  %v1728 = vpop.f32.mrb[0].mxu0
  %1729 = vdwg.mxu0
  %v1730 = vmax.f32 %v1725, 0.0
  %v1731 = vld [vmem:[%s2 + $0x28] sm:$0xf]
  %1732 = vrot.lane.b32.xlu0 %v1730, 9
  %v1733 = vpop.permute.xlu0 %1732
  %v1734 = vmul.f32 %v1733, %v1491
  %1735 = vrot.lane.b32.xlu0 %v1730, 8
  %v1736 = vpop.permute.xlu0 %1735
  %v1737 = vmul.f32 %v1736, %v1495
  %1738 = vrot.lane.b32.xlu0 %v1730, 7
  %v1739 = vpop.permute.xlu0 %1738
  %v1740 = vmul.f32 %v1739, %v1499
  %1741 = vrot.lane.b32.xlu0 %v1730, 1
  %v1742 = vpop.permute.xlu0 %1741
  %v1743 = vmul.f32 %v1742, %v1503
  %1744 = vrot.lane.b32.xlu0 %v1730, 127
  %v1745 = vpop.permute.xlu0 %1744
  %v1746 = vmul.f32 %v1745, %v1507
  %1747 = vrot.lane.b32.xlu0 %v1730, 121
  %v1748 = vpop.permute.xlu0 %1747
  %v1749 = vmul.f32 %v1748, %v1511
  %1750 = vrot.lane.b32.xlu0 %v1730, 120
  %v1751 = vpop.permute.xlu0 %1750
  %v1752 = vmul.f32 %v1751, %v1515
  %1753 = vrot.lane.b32.xlu0 %v1730, 119
  %v1754 = vpop.permute.xlu0 %1753
  %v1755 = vmul.f32 %v1754, %v1519
  %v1756 = vpack.c.bf16 %v1737, %v1734
  %v1757 = vpack.c.bf16 %v1743, %v1740
  %v1758 = vpack.c.bf16 %v1746, %v1730
  %v1759 = vpack.c.bf16 %v1752, %v1749
  %v1760 = vpack.c.bf16 1.0, %v1755
  %v1762 = vsel %vm1526, %v1731, 0
  %v1765 = vand.u32 %v1760, %v1532
  %1767 = vmatprep.subr.bf16.mxu0 0
  %1768 = vmatpush1.bf16.msra.mxu0 %v1756
  %1769 = vmatprep.subr.bf16.mxu0 0
  %1770 = vmatpush1.bf16.msra.mxu0 %v1757
  %1771 = vmatprep.subr.bf16.mxu0 0
  %1772 = vmatpush1.bf16.msra.mxu0 %v1758
  %1773 = vmatprep.subr.bf16.mxu0 0
  %1774 = vmatpush1.bf16.msra.mxu0 %v1759
  %1775 = vmatprep.subr.bf16.mxu0 0
  %1776 = vmatpush1.bf16.msra.mxu0 %v1765
  %1777 = vmatprep.subr.bf16.mxu0 0
  %1778 = vmatpush1.bf16.msra.mxu0 0
  %1779 = vmatprep.subr.bf16.mxu0 0
  %1780 = vmatpush1.bf16.msra.mxu0 0
  %1781 = vmatprep.subr.bf16.mxu0 0
  %1782 = vmatpush1.bf16.msra.mxu0 0
  %1783 = vmatprep.subr.bf16.mxu0 0
  %1784 = vmatpush1.bf16.msra.mxu0 0
  %1785 = vmatprep.subr.bf16.mxu0 0
  %1786 = vmatpush1.bf16.msra.mxu0 0
  %1787 = vmatprep.subr.bf16.mxu0 0
  %1788 = vmatpush1.bf16.msra.mxu0 0
  %1789 = vmatprep.subr.bf16.mxu0 0
  %1790 = vmatpush1.bf16.msra.mxu0 0
  %1791 = vmatprep.subr.bf16.mxu0 0
  %1792 = vmatpush1.bf16.msra.mxu0 0
  %1793 = vmatprep.subr.bf16.mxu0 0
  %1794 = vmatpush1.bf16.msra.mxu0 0
  %1795 = vmatprep.subr.bf16.mxu0 0
  %1796 = vmatpush1.bf16.msra.mxu0 0
  %1797 = vmatprep.subr.bf16.mxu0 0
  %1798 = vmatpush1.bf16.msra.mxu0 0
  %1799 = vmatprep.mubr.bf16.mxu0 0
  %1800 = vmatmul.mubr.bf16.gmra.mrb[0].mxu0 %v1762
  %v1801 = vpop.f32.mrb[0].mxu0
  %v1802 = vadd.f32 %v1653, %v1801
  %v1803 = vpop.f32.mrb[0].mxu0
  %v1804 = vpop.f32.mrb[0].mxu0
  %v1805 = vpop.f32.mrb[0].mxu0
  %1806 = vdwg.mxu0
  %v1807 = vmax.f32 %v1802, 0.0
  %v1808 = vld [vmem:[%s2 + $0x30] sm:$0x3]
  %v1809 = vpack.c.bf16 1.0, %v1807
  %vm1810 = vcmask 72704
  %v1812 = vsel %vm1810, %v1808, 0
  %v1815 = vand.u32 %v1809, %v1532
  %1817 = vmatprep.subr.bf16.mxu0 0
  %1818 = vmatpush1.bf16.msra.mxu0 %v1815
  %1819 = vmatprep.subr.bf16.mxu0 0
  %1820 = vmatpush1.bf16.msra.mxu0 0
  %1821 = vmatprep.subr.bf16.mxu0 0
  %1822 = vmatpush1.bf16.msra.mxu0 0
  %1823 = vmatprep.subr.bf16.mxu0 0
  %1824 = vmatpush1.bf16.msra.mxu0 0
  %1825 = vmatprep.subr.bf16.mxu0 0
  %1826 = vmatpush1.bf16.msra.mxu0 0
  %1827 = vmatprep.subr.bf16.mxu0 0
  %1828 = vmatpush1.bf16.msra.mxu0 0
  %1829 = vmatprep.subr.bf16.mxu0 0
  %1830 = vmatpush1.bf16.msra.mxu0 0
  %1831 = vmatprep.subr.bf16.mxu0 0
  %1832 = vmatpush1.bf16.msra.mxu0 0
  %1833 = vmatprep.subr.bf16.mxu0 0
  %1834 = vmatpush1.bf16.msra.mxu0 0
  %1835 = vmatprep.subr.bf16.mxu0 0
  %1836 = vmatpush1.bf16.msra.mxu0 0
  %1837 = vmatprep.subr.bf16.mxu0 0
  %1838 = vmatpush1.bf16.msra.mxu0 0
  %1839 = vmatprep.subr.bf16.mxu0 0
  %1840 = vmatpush1.bf16.msra.mxu0 0
  %1841 = vmatprep.subr.bf16.mxu0 0
  %1842 = vmatpush1.bf16.msra.mxu0 0
  %1843 = vmatprep.subr.bf16.mxu0 0
  %1844 = vmatpush1.bf16.msra.mxu0 0
  %1845 = vmatprep.subr.bf16.mxu0 0
  %1846 = vmatpush1.bf16.msra.mxu0 0
  %1847 = vmatprep.subr.bf16.mxu0 0
  %1848 = vmatpush1.bf16.msra.mxu0 0
  %1849 = vmatprep.mubr.bf16.mxu0 0
  %1850 = vmatmul.mubr.bf16.gmra.mrb[0].mxu0 %v1812
  %v1851 = vpop.f32.mrb[0].mxu0
  %v1852 = vadd.f32 0.0, %v1851
  %v1853 = vpop.f32.mrb[0].mxu0
  %v1854 = vpop.f32.mrb[0].mxu0
  %v1855 = vpop.f32.mrb[0].mxu0
  %1856 = vdwg.mxu0
  %v1857 = vld [vmem:[%s2 + $0x40] sm:$0xff]
  %v1858 = vld [vmem:[%s2 + $0x48] sm:$0xff]
  %v1859 = vld [vmem:[%s2 + $0x50] sm:$0xff]
  %v1860 = vld [vmem:[%s2 + $0x58] sm:$0xff]
  %v1861 = vld [vmem:[%s2 + $0x60] sm:$0xff]
  %v1862 = vld [vmem:[%s2 + $0x68] sm:$0xff]
  %v1863 = vld [vmem:[%s2 + $0x70] sm:$0xff]
  %v1864 = vld [vmem:[%s2 + $0x78] sm:$0xff]
  %v1865 = vpack.c.bf16 %v1852, %v1852
  %v1874 = vunpack.c.l.b16 %v1857
  %v1875 = vunpack.c.h.b16 %v1857
  %v1876 = vunpack.c.l.b16 %v1858
  %v1877 = vunpack.c.h.b16 %v1858
  %v1878 = vunpack.c.l.b16 %v1859
  %v1879 = vunpack.c.h.b16 %v1859
  %v1880 = vunpack.c.l.b16 %v1860
  %v1881 = vunpack.c.h.b16 %v1860
  %v1882 = vunpack.c.l.b16 %v1861
  %v1883 = vunpack.c.h.b16 %v1861
  %v1884 = vunpack.c.l.b16 %v1862
  %v1885 = vunpack.c.h.b16 %v1862
  %v1886 = vunpack.c.l.b16 %v1863
  %v1887 = vunpack.c.h.b16 %v1863
  %v1888 = vunpack.c.l.b16 %v1864
  %v1889 = vunpack.c.h.b16 %v1864
  %v1890 = vpack.c.b16 %v1876, %v1874
  %v1891 = vpack.c.b16 %v1877, %v1875
  %v1892 = vpack.c.b16 %v1880, %v1878
  %v1893 = vpack.c.b16 %v1881, %v1879
  %v1894 = vpack.c.b16 %v1884, %v1882
  %v1895 = vpack.c.b16 %v1885, %v1883
  %v1896 = vpack.c.b16 %v1888, %v1886
  %v1897 = vpack.c.b16 %v1889, %v1887
  %v1907 = vsel %vm39, %v1865, 0
  %1909 = vmatprep.subr.bf16.mxu0 %v1891
  %1910 = vmatpush1.bf16.msra.mxu0 %v1890
  %1911 = vmatprep.subr.bf16.mxu0 %v1893
  %1912 = vmatpush1.bf16.msra.mxu0 %v1892
  %1913 = vmatprep.subr.bf16.mxu0 %v1895
  %1914 = vmatpush1.bf16.msra.mxu0 %v1894
  %1915 = vmatprep.subr.bf16.mxu0 %v1897
  %1916 = vmatpush1.bf16.msra.mxu0 %v1896
  %1917 = vmatprep.subr.bf16.mxu0 0
  %1918 = vmatpush1.bf16.msra.mxu0 0
  %1919 = vmatprep.subr.bf16.mxu0 0
  %1920 = vmatpush1.bf16.msra.mxu0 0
  %1921 = vmatprep.subr.bf16.mxu0 0
  %1922 = vmatpush1.bf16.msra.mxu0 0
  %1923 = vmatprep.subr.bf16.mxu0 0
  %1924 = vmatpush1.bf16.msra.mxu0 0
  %1925 = vmatprep.subr.bf16.mxu0 0
  %1926 = vmatpush1.bf16.msra.mxu0 0
  %1927 = vmatprep.subr.bf16.mxu0 0
  %1928 = vmatpush1.bf16.msra.mxu0 0
  %1929 = vmatprep.subr.bf16.mxu0 0
  %1930 = vmatpush1.bf16.msra.mxu0 0
  %1931 = vmatprep.subr.bf16.mxu0 0
  %1932 = vmatpush1.bf16.msra.mxu0 0
  %1933 = vmatprep.subr.bf16.mxu0 0
  %1934 = vmatpush1.bf16.msra.mxu0 0
  %1935 = vmatprep.subr.bf16.mxu0 0
  %1936 = vmatpush1.bf16.msra.mxu0 0
  %1937 = vmatprep.subr.bf16.mxu0 0
  %1938 = vmatpush1.bf16.msra.mxu0 0
  %1939 = vmatprep.subr.bf16.mxu0 0
  %1940 = vmatpush1.bf16.msra.mxu0 0
  %1941 = vmatprep.mubr.bf16.mxu0 0
  %1942 = vmatmul.mubr.bf16.gmra.mrb[0].mxu0 %v1907
  %v1943 = vpop.f32.mrb[0].mxu0
  %v1944 = vadd.f32 0.0, %v1943
  %v1945 = vpop.f32.mrb[0].mxu0
  %v1946 = vadd.f32 0.0, %v1945
  %v1947 = vpop.f32.mrb[0].mxu0
  %v1948 = vpop.f32.mrb[0].mxu0
  %1949 = vdwg.mxu0
  %1951 = vrot.lane.b32.xlu0 %v1865, 64
  %v1952 = vpop.permute.xlu0 %1951
  %v1954 = vsel %vm39, %v1952, 0
  %1956 = vmatprep.subr.bf16.mxu0 %v1891
  %1957 = vmatpush1.bf16.msra.mxu0 %v1890
  %1958 = vmatprep.subr.bf16.mxu0 %v1893
  %1959 = vmatpush1.bf16.msra.mxu0 %v1892
  %1960 = vmatprep.subr.bf16.mxu0 %v1895
  %1961 = vmatpush1.bf16.msra.mxu0 %v1894
  %1962 = vmatprep.subr.bf16.mxu0 %v1897
  %1963 = vmatpush1.bf16.msra.mxu0 %v1896
  %1964 = vmatprep.subr.bf16.mxu0 0
  %1965 = vmatpush1.bf16.msra.mxu0 0
  %1966 = vmatprep.subr.bf16.mxu0 0
  %1967 = vmatpush1.bf16.msra.mxu0 0
  %1968 = vmatprep.subr.bf16.mxu0 0
  %1969 = vmatpush1.bf16.msra.mxu0 0
  %1970 = vmatprep.subr.bf16.mxu0 0
  %1971 = vmatpush1.bf16.msra.mxu0 0
  %1972 = vmatprep.subr.bf16.mxu0 0
  %1973 = vmatpush1.bf16.msra.mxu0 0
  %1974 = vmatprep.subr.bf16.mxu0 0
  %1975 = vmatpush1.bf16.msra.mxu0 0
  %1976 = vmatprep.subr.bf16.mxu0 0
  %1977 = vmatpush1.bf16.msra.mxu0 0
  %1978 = vmatprep.subr.bf16.mxu0 0
  %1979 = vmatpush1.bf16.msra.mxu0 0
  %1980 = vmatprep.subr.bf16.mxu0 0
  %1981 = vmatpush1.bf16.msra.mxu0 0
  %1982 = vmatprep.subr.bf16.mxu0 0
  %1983 = vmatpush1.bf16.msra.mxu0 0
  %1984 = vmatprep.subr.bf16.mxu0 0
  %1985 = vmatpush1.bf16.msra.mxu0 0
  %1986 = vmatprep.subr.bf16.mxu0 0
  %1987 = vmatpush1.bf16.msra.mxu0 0
  %1988 = vmatprep.mubr.bf16.mxu0 0
  %1989 = vmatmul.mubr.bf16.gmra.mrb[0].mxu0 %v1954
  %v1990 = vpop.f32.mrb[0].mxu0
  %v1991 = vadd.f32 0.0, %v1990
  %v1992 = vpop.f32.mrb[0].mxu0
  %v1993 = vadd.f32 0.0, %v1992
  %v1994 = vpop.f32.mrb[0].mxu0
  %v1995 = vpop.f32.mrb[0].mxu0
  %1996 = vdwg.mxu0
  %v1997 = vadd.f32 %v1484, %v1944
  %v1998 = vadd.f32 %v1485, %v1946
  %v1999 = vadd.f32 %v1486, %v1991
  %v2000 = vadd.f32 %v1487, %v1993
  %v2001 = vmax.f32 %v1997, 0.0
  %v2002 = vmax.f32 %v1998, 0.0
  %v2003 = vmax.f32 %v1999, 0.0
  %v2004 = vmax.f32 %v2000, 0.0
  %v2007 = vcombine.low %v2001, %v2002
  %2009 = vst [vmem:[%s5] sm:$0xff] %v2007
  %v2012 = vcombine.low %v2003, %v2004
  %s2014 = scalar_lea.vmem %s5, 8
  %2015 = vst [vmem:[%s2014] sm:$0xff] %v2012
  %v2016 = vld [vmem:[%s2 + $0x30] sm:$0xc]
  %v2017 = vld [vmem:[%s2 + $0x38] sm:$0x3]
  %2018 = vrot.lane.b32.xlu0 %v1484, 17
  %v2019 = vpop.permute.xlu0 %2018
  %2020 = vrot.lane.b32.xlu0 %v1485, 17
  %v2021 = vpop.permute.xlu0 %2020
  %2022 = vrot.lane.b32.xlu0 %v1486, 17
  %v2023 = vpop.permute.xlu0 %2022
  %2024 = vrot.lane.b32.xlu0 %v1487, 17
  %v2025 = vpop.permute.xlu0 %2024
  %v2026 = vsel %vm52, %v2023, %v2025
  %v2027 = vsel %vm52, %v2021, %v2023
  %v2028 = vsel %vm52, %v2019, %v2021
  %v2029 = vsel %vm52, %v2025, %v2019
  %v2030 = vld [vmem:[%s4] ss:$8 sm:$0xf]
  %v2032 = vlaneseq
  %v2033 = vshrl.u32 %v2032, 7
  %v2034 = vsub.s32 0, %v2033
  %v2035 = vrot.slane %v2030, %v2034
  %v2036 = vlaneseq
  %v2037 = vshrl.u32 %v2036, 7
  %v2038 = vsub.s32 1, %v2037
  %v2039 = vrot.slane %v2030, %v2038
  %v2040 = vlaneseq
  %v2041 = vshrl.u32 %v2040, 7
  %v2042 = vsub.s32 2, %v2041
  %v2043 = vrot.slane %v2030, %v2042
  %v2044 = vlaneseq
  %v2045 = vshrl.u32 %v2044, 7
  %v2046 = vsub.s32 3, %v2045
  %v2047 = vrot.slane %v2030, %v2046
  %v2052 = vmul.f32 %v2029, %v2035
  %v2053 = vmul.f32 %v2028, %v2039
  %v2054 = vmul.f32 %v2027, %v2043
  %v2055 = vmul.f32 %v2026, %v2047
  %2056 = vrot.lane.b32.xlu0 %v1484, 16
  %v2057 = vpop.permute.xlu0 %2056
  %2058 = vrot.lane.b32.xlu0 %v1485, 16
  %v2059 = vpop.permute.xlu0 %2058
  %2060 = vrot.lane.b32.xlu0 %v1486, 16
  %v2061 = vpop.permute.xlu0 %2060
  %2062 = vrot.lane.b32.xlu0 %v1487, 16
  %v2063 = vpop.permute.xlu0 %2062
  %v2064 = vsel %vm91, %v2061, %v2063
  %v2065 = vsel %vm91, %v2059, %v2061
  %v2066 = vsel %vm91, %v2057, %v2059
  %v2067 = vsel %vm91, %v2063, %v2057
  %v2068 = vld [vmem:[%s96] ss:$8 sm:$0xf]
  %v2070 = vlaneseq
  %v2071 = vshrl.u32 %v2070, 7
  %v2072 = vsub.s32 0, %v2071
  %v2073 = vrot.slane %v2068, %v2072
  %v2074 = vlaneseq
  %v2075 = vshrl.u32 %v2074, 7
  %v2076 = vsub.s32 1, %v2075
  %v2077 = vrot.slane %v2068, %v2076
  %v2078 = vlaneseq
  %v2079 = vshrl.u32 %v2078, 7
  %v2080 = vsub.s32 2, %v2079
  %v2081 = vrot.slane %v2068, %v2080
  %v2082 = vlaneseq
  %v2083 = vshrl.u32 %v2082, 7
  %v2084 = vsub.s32 3, %v2083
  %v2085 = vrot.slane %v2068, %v2084
  %v2090 = vmul.f32 %v2067, %v2073
  %v2091 = vmul.f32 %v2066, %v2077
  %v2092 = vmul.f32 %v2065, %v2081
  %v2093 = vmul.f32 %v2064, %v2085
  %2094 = vrot.lane.b32.xlu0 %v1484, 15
  %v2095 = vpop.permute.xlu0 %2094
  %2096 = vrot.lane.b32.xlu0 %v1485, 15
  %v2097 = vpop.permute.xlu0 %2096
  %2098 = vrot.lane.b32.xlu0 %v1486, 15
  %v2099 = vpop.permute.xlu0 %2098
  %2100 = vrot.lane.b32.xlu0 %v1487, 15
  %v2101 = vpop.permute.xlu0 %2100
  %v2102 = vsel %vm131, %v2099, %v2101
  %v2103 = vsel %vm131, %v2097, %v2099
  %v2104 = vsel %vm131, %v2095, %v2097
  %v2105 = vsel %vm131, %v2101, %v2095
  %v2106 = vld [vmem:[%s136] ss:$8 sm:$0xf]
  %v2108 = vlaneseq
  %v2109 = vshrl.u32 %v2108, 7
  %v2110 = vsub.s32 0, %v2109
  %v2111 = vrot.slane %v2106, %v2110
  %v2112 = vlaneseq
  %v2113 = vshrl.u32 %v2112, 7
  %v2114 = vsub.s32 1, %v2113
  %v2115 = vrot.slane %v2106, %v2114
  %v2116 = vlaneseq
  %v2117 = vshrl.u32 %v2116, 7
  %v2118 = vsub.s32 2, %v2117
  %v2119 = vrot.slane %v2106, %v2118
  %v2120 = vlaneseq
  %v2121 = vshrl.u32 %v2120, 7
  %v2122 = vsub.s32 3, %v2121
  %v2123 = vrot.slane %v2106, %v2122
  %v2128 = vmul.f32 %v2105, %v2111
  %v2129 = vmul.f32 %v2104, %v2115
  %v2130 = vmul.f32 %v2103, %v2119
  %v2131 = vmul.f32 %v2102, %v2123
  %2132 = vrot.lane.b32.xlu0 %v1484, 1
  %v2133 = vpop.permute.xlu0 %2132
  %2134 = vrot.lane.b32.xlu0 %v1485, 1
  %v2135 = vpop.permute.xlu0 %2134
  %2136 = vrot.lane.b32.xlu0 %v1486, 1
  %v2137 = vpop.permute.xlu0 %2136
  %2138 = vrot.lane.b32.xlu0 %v1487, 1
  %v2139 = vpop.permute.xlu0 %2138
  %v2140 = vsel %vm171, %v2137, %v2139
  %v2141 = vsel %vm171, %v2135, %v2137
  %v2142 = vsel %vm171, %v2133, %v2135
  %v2143 = vsel %vm171, %v2139, %v2133
  %v2144 = vld [vmem:[%s176] ss:$8 sm:$0xf]
  %v2146 = vlaneseq
  %v2147 = vshrl.u32 %v2146, 7
  %v2148 = vsub.s32 0, %v2147
  %v2149 = vrot.slane %v2144, %v2148
  %v2150 = vlaneseq
  %v2151 = vshrl.u32 %v2150, 7
  %v2152 = vsub.s32 1, %v2151
  %v2153 = vrot.slane %v2144, %v2152
  %v2154 = vlaneseq
  %v2155 = vshrl.u32 %v2154, 7
  %v2156 = vsub.s32 2, %v2155
  %v2157 = vrot.slane %v2144, %v2156
  %v2158 = vlaneseq
  %v2159 = vshrl.u32 %v2158, 7
  %v2160 = vsub.s32 3, %v2159
  %v2161 = vrot.slane %v2144, %v2160
  %v2166 = vmul.f32 %v2143, %v2149
  %v2167 = vmul.f32 %v2142, %v2153
  %v2168 = vmul.f32 %v2141, %v2157
  %v2169 = vmul.f32 %v2140, %v2161
  %2170 = vrot.lane.b32.xlu0 %v1484, 127
  %v2171 = vpop.permute.xlu0 %2170
  %2172 = vrot.lane.b32.xlu0 %v1485, 127
  %v2173 = vpop.permute.xlu0 %2172
  %2174 = vrot.lane.b32.xlu0 %v1486, 127
  %v2175 = vpop.permute.xlu0 %2174
  %2176 = vrot.lane.b32.xlu0 %v1487, 127
  %v2177 = vpop.permute.xlu0 %2176
  %v2178 = vsel %vm211, %v2175, %v2177
  %v2179 = vsel %vm211, %v2173, %v2175
  %v2180 = vsel %vm211, %v2171, %v2173
  %v2181 = vsel %vm211, %v2177, %v2171
  %v2182 = vld [vmem:[%s216] ss:$8 sm:$0xf]
  %v2184 = vlaneseq
  %v2185 = vshrl.u32 %v2184, 7
  %v2186 = vsub.s32 0, %v2185
  %v2187 = vrot.slane %v2182, %v2186
  %v2188 = vlaneseq
  %v2189 = vshrl.u32 %v2188, 7
  %v2190 = vsub.s32 1, %v2189
  %v2191 = vrot.slane %v2182, %v2190
  %v2192 = vlaneseq
  %v2193 = vshrl.u32 %v2192, 7
  %v2194 = vsub.s32 2, %v2193
  %v2195 = vrot.slane %v2182, %v2194
  %v2196 = vlaneseq
  %v2197 = vshrl.u32 %v2196, 7
  %v2198 = vsub.s32 3, %v2197
  %v2199 = vrot.slane %v2182, %v2198
  %v2204 = vmul.f32 %v2180, %v2187
  %v2205 = vmul.f32 %v2179, %v2191
  %v2206 = vmul.f32 %v2178, %v2195
  %v2207 = vmul.f32 %v2181, %v2199
  %2208 = vrot.lane.b32.xlu0 %v1484, 113
  %v2209 = vpop.permute.xlu0 %2208
  %2210 = vrot.lane.b32.xlu0 %v1485, 113
  %v2211 = vpop.permute.xlu0 %2210
  %2212 = vrot.lane.b32.xlu0 %v1486, 113
  %v2213 = vpop.permute.xlu0 %2212
  %2214 = vrot.lane.b32.xlu0 %v1487, 113
  %v2215 = vpop.permute.xlu0 %2214
  %v2216 = vsel %vm251, %v2213, %v2215
  %v2217 = vsel %vm251, %v2211, %v2213
  %v2218 = vsel %vm251, %v2209, %v2211
  %v2219 = vsel %vm251, %v2215, %v2209
  %v2220 = vld [vmem:[%s256] ss:$8 sm:$0xf]
  %v2222 = vlaneseq
  %v2223 = vshrl.u32 %v2222, 7
  %v2224 = vsub.s32 0, %v2223
  %v2225 = vrot.slane %v2220, %v2224
  %v2226 = vlaneseq
  %v2227 = vshrl.u32 %v2226, 7
  %v2228 = vsub.s32 1, %v2227
  %v2229 = vrot.slane %v2220, %v2228
  %v2230 = vlaneseq
  %v2231 = vshrl.u32 %v2230, 7
  %v2232 = vsub.s32 2, %v2231
  %v2233 = vrot.slane %v2220, %v2232
  %v2234 = vlaneseq
  %v2235 = vshrl.u32 %v2234, 7
  %v2236 = vsub.s32 3, %v2235
  %v2237 = vrot.slane %v2220, %v2236
  %v2242 = vmul.f32 %v2218, %v2225
  %v2243 = vmul.f32 %v2217, %v2229
  %v2244 = vmul.f32 %v2216, %v2233
  %v2245 = vmul.f32 %v2219, %v2237
  %2246 = vrot.lane.b32.xlu0 %v1484, 112
  %v2247 = vpop.permute.xlu0 %2246
  %2248 = vrot.lane.b32.xlu0 %v1485, 112
  %v2249 = vpop.permute.xlu0 %2248
  %2250 = vrot.lane.b32.xlu0 %v1486, 112
  %v2251 = vpop.permute.xlu0 %2250
  %2252 = vrot.lane.b32.xlu0 %v1487, 112
  %v2253 = vpop.permute.xlu0 %2252
  %v2254 = vsel %vm291, %v2251, %v2253
  %v2255 = vsel %vm291, %v2249, %v2251
  %v2256 = vsel %vm291, %v2247, %v2249
  %v2257 = vsel %vm291, %v2253, %v2247
  %v2258 = vld [vmem:[%s296] ss:$8 sm:$0xf]
  %v2260 = vlaneseq
  %v2261 = vshrl.u32 %v2260, 7
  %v2262 = vsub.s32 0, %v2261
  %v2263 = vrot.slane %v2258, %v2262
  %v2264 = vlaneseq
  %v2265 = vshrl.u32 %v2264, 7
  %v2266 = vsub.s32 1, %v2265
  %v2267 = vrot.slane %v2258, %v2266
  %v2268 = vlaneseq
  %v2269 = vshrl.u32 %v2268, 7
  %v2270 = vsub.s32 2, %v2269
  %v2271 = vrot.slane %v2258, %v2270
  %v2272 = vlaneseq
  %v2273 = vshrl.u32 %v2272, 7
  %v2274 = vsub.s32 3, %v2273
  %v2275 = vrot.slane %v2258, %v2274
  %v2280 = vmul.f32 %v2256, %v2263
  %v2281 = vmul.f32 %v2255, %v2267
  %v2282 = vmul.f32 %v2254, %v2271
  %v2283 = vmul.f32 %v2257, %v2275
  %2284 = vrot.lane.b32.xlu0 %v1484, 111
  %v2285 = vpop.permute.xlu0 %2284
  %2286 = vrot.lane.b32.xlu0 %v1485, 111
  %v2287 = vpop.permute.xlu0 %2286
  %2288 = vrot.lane.b32.xlu0 %v1486, 111
  %v2289 = vpop.permute.xlu0 %2288
  %2290 = vrot.lane.b32.xlu0 %v1487, 111
  %v2291 = vpop.permute.xlu0 %2290
  %v2292 = vsel %vm331, %v2289, %v2291
  %v2293 = vsel %vm331, %v2287, %v2289
  %v2294 = vsel %vm331, %v2285, %v2287
  %v2295 = vsel %vm331, %v2291, %v2285
  %v2296 = vld [vmem:[%s336] ss:$8 sm:$0xf]
  %v2298 = vlaneseq
  %v2299 = vshrl.u32 %v2298, 7
  %v2300 = vsub.s32 0, %v2299
  %v2301 = vrot.slane %v2296, %v2300
  %v2302 = vlaneseq
  %v2303 = vshrl.u32 %v2302, 7
  %v2304 = vsub.s32 1, %v2303
  %v2305 = vrot.slane %v2296, %v2304
  %v2306 = vlaneseq
  %v2307 = vshrl.u32 %v2306, 7
  %v2308 = vsub.s32 2, %v2307
  %v2309 = vrot.slane %v2296, %v2308
  %v2310 = vlaneseq
  %v2311 = vshrl.u32 %v2310, 7
  %v2312 = vsub.s32 3, %v2311
  %v2313 = vrot.slane %v2296, %v2312
  %v2318 = vmul.f32 %v2294, %v2301
  %v2319 = vmul.f32 %v2293, %v2305
  %v2320 = vmul.f32 %v2292, %v2309
  %v2321 = vmul.f32 %v2295, %v2313
  %v2326 = vrot.slane %v2090, 4
  %v2327 = vrot.slane %v2091, 4
  %v2328 = vrot.slane %v2092, 4
  %v2329 = vrot.slane %v2093, 4
  %v2338 = vrot.slane %v2166, 4
  %v2339 = vrot.slane %v2167, 4
  %v2340 = vrot.slane %v2168, 4
  %v2341 = vrot.slane %v2169, 4
  %v2350 = vrot.slane %v2204, 4
  %v2351 = vrot.slane %v2205, 4
  %v2352 = vrot.slane %v2206, 4
  %v2353 = vrot.slane %v2207, 4
  %v2362 = vrot.slane %v2280, 4
  %v2363 = vrot.slane %v2281, 4
  %v2364 = vrot.slane %v2282, 4
  %v2365 = vrot.slane %v2283, 4
  %v2370 = vsel %vm411, %v2052, %v2326
  %v2371 = vsel %vm411, %v2053, %v2327
  %v2372 = vsel %vm411, %v2054, %v2328
  %v2373 = vsel %vm411, %v2055, %v2329
  %v2374 = vsel %vm411, %v2128, %v2338
  %v2375 = vsel %vm411, %v2129, %v2339
  %v2376 = vsel %vm411, %v2130, %v2340
  %v2377 = vsel %vm411, %v2131, %v2341
  %v2378 = vsel %vm411, %v1484, %v2350
  %v2379 = vsel %vm411, %v1485, %v2351
  %v2380 = vsel %vm411, %v1486, %v2352
  %v2381 = vsel %vm411, %v1487, %v2353
  %v2382 = vsel %vm411, %v2242, %v2362
  %v2383 = vsel %vm411, %v2243, %v2363
  %v2384 = vsel %vm411, %v2244, %v2364
  %v2385 = vsel %vm411, %v2245, %v2365
  %v2386 = vsel %vm411, %v2318, 1.0
  %v2387 = vsel %vm411, %v2319, 1.0
  %v2388 = vsel %vm411, %v2320, 1.0
  %v2389 = vsel %vm411, %v2321, 1.0
  %v2390 = vpack.c.bf16 %v2374, %v2370
  %v2391 = vpack.c.bf16 %v2375, %v2371
  %v2392 = vpack.c.bf16 %v2376, %v2372
  %v2393 = vpack.c.bf16 %v2377, %v2373
  %v2394 = vpack.c.bf16 %v2382, %v2378
  %v2395 = vpack.c.bf16 %v2383, %v2379
  %v2396 = vpack.c.bf16 %v2384, %v2380
  %v2397 = vpack.c.bf16 %v2385, %v2381
  %v2398 = vpack.c.bf16 %v2386, %v2386
  %v2399 = vpack.c.bf16 %v2387, %v2387
  %v2400 = vpack.c.bf16 %v2388, %v2388
  %v2401 = vpack.c.bf16 %v2389, %v2389
  %v2404 = vunpack.c.l.b16 %v2016
  %v2405 = vunpack.c.l.b16 %v2017
  %v2406 = vpack.c.b16 %v2405, %v2404
  %v2407 = vrot.slane %v2406, 2
  %v2409 = vsel %vm444, %v2407, 0
  %v2412 = vand.u32 %v2398, %v451
  %v2415 = vand.u32 %v2399, %v451
  %v2418 = vand.u32 %v2400, %v451
  %v2421 = vand.u32 %v2401, %v451
  %2423 = vmatprep.subr.bf16.mxu0 %v2391
  %2424 = vmatpush1.bf16.msra.mxu0 %v2390
  %2425 = vmatprep.subr.bf16.mxu0 %v2395
  %2426 = vmatpush1.bf16.msra.mxu0 %v2394
  %2427 = vmatprep.subr.bf16.mxu0 %v2415
  %2428 = vmatpush1.bf16.msra.mxu0 %v2412
  %2429 = vmatprep.subr.bf16.mxu0 0
  %2430 = vmatpush1.bf16.msra.mxu0 0
  %2431 = vmatprep.subr.bf16.mxu0 0
  %2432 = vmatpush1.bf16.msra.mxu0 0
  %2433 = vmatprep.subr.bf16.mxu0 0
  %2434 = vmatpush1.bf16.msra.mxu0 0
  %2435 = vmatprep.subr.bf16.mxu0 0
  %2436 = vmatpush1.bf16.msra.mxu0 0
  %2437 = vmatprep.subr.bf16.mxu0 0
  %2438 = vmatpush1.bf16.msra.mxu0 0
  %2439 = vmatprep.subr.bf16.mxu0 0
  %2440 = vmatpush1.bf16.msra.mxu0 0
  %2441 = vmatprep.subr.bf16.mxu0 0
  %2442 = vmatpush1.bf16.msra.mxu0 0
  %2443 = vmatprep.subr.bf16.mxu0 0
  %2444 = vmatpush1.bf16.msra.mxu0 0
  %2445 = vmatprep.subr.bf16.mxu0 0
  %2446 = vmatpush1.bf16.msra.mxu0 0
  %2447 = vmatprep.subr.bf16.mxu0 0
  %2448 = vmatpush1.bf16.msra.mxu0 0
  %2449 = vmatprep.subr.bf16.mxu0 0
  %2450 = vmatpush1.bf16.msra.mxu0 0
  %2451 = vmatprep.subr.bf16.mxu0 0
  %2452 = vmatpush1.bf16.msra.mxu0 0
  %2453 = vmatprep.subr.bf16.mxu0 0
  %2454 = vmatpush1.bf16.msra.mxu0 0
  %2455 = vmatprep.mubr.bf16.mxu0 0
  %2456 = vmatmul.mubr.bf16.gmra.mrb[0].mxu0 %v2409
  %v2457 = vpop.f32.mrb[0].mxu0
  %v2458 = vadd.f32 0.0, %v2457
  %v2459 = vpop.f32.mrb[0].mxu0
  %v2460 = vadd.f32 0.0, %v2459
  %v2461 = vpop.f32.mrb[0].mxu0
  %v2462 = vpop.f32.mrb[0].mxu0
  %2463 = vdwg.mxu0
  %2464 = vmatprep.subr.bf16.mxu0 %v2393
  %2465 = vmatpush1.bf16.msra.mxu0 %v2392
  %2466 = vmatprep.subr.bf16.mxu0 %v2397
  %2467 = vmatpush1.bf16.msra.mxu0 %v2396
  %2468 = vmatprep.subr.bf16.mxu0 %v2421
  %2469 = vmatpush1.bf16.msra.mxu0 %v2418
  %2470 = vmatprep.subr.bf16.mxu0 0
  %2471 = vmatpush1.bf16.msra.mxu0 0
  %2472 = vmatprep.subr.bf16.mxu0 0
  %2473 = vmatpush1.bf16.msra.mxu0 0
  %2474 = vmatprep.subr.bf16.mxu0 0
  %2475 = vmatpush1.bf16.msra.mxu0 0
  %2476 = vmatprep.subr.bf16.mxu0 0
  %2477 = vmatpush1.bf16.msra.mxu0 0
  %2478 = vmatprep.subr.bf16.mxu0 0
  %2479 = vmatpush1.bf16.msra.mxu0 0
  %2480 = vmatprep.subr.bf16.mxu0 0
  %2481 = vmatpush1.bf16.msra.mxu0 0
  %2482 = vmatprep.subr.bf16.mxu0 0
  %2483 = vmatpush1.bf16.msra.mxu0 0
  %2484 = vmatprep.subr.bf16.mxu0 0
  %2485 = vmatpush1.bf16.msra.mxu0 0
  %2486 = vmatprep.subr.bf16.mxu0 0
  %2487 = vmatpush1.bf16.msra.mxu0 0
  %2488 = vmatprep.subr.bf16.mxu0 0
  %2489 = vmatpush1.bf16.msra.mxu0 0
  %2490 = vmatprep.subr.bf16.mxu0 0
  %2491 = vmatpush1.bf16.msra.mxu0 0
  %2492 = vmatprep.subr.bf16.mxu0 0
  %2493 = vmatpush1.bf16.msra.mxu0 0
  %2494 = vmatprep.subr.bf16.mxu0 0
  %2495 = vmatpush1.bf16.msra.mxu0 0
  %2496 = vmatprep.mubr.bf16.mxu0 0
  %2497 = vmatmul.mubr.bf16.gmra.mrb[0].mxu0 %v2409
  %v2498 = vpop.f32.mrb[0].mxu0
  %v2499 = vadd.f32 0.0, %v2498
  %v2500 = vpop.f32.mrb[0].mxu0
  %v2501 = vadd.f32 0.0, %v2500
  %v2502 = vpop.f32.mrb[0].mxu0
  %v2503 = vpop.f32.mrb[0].mxu0
  %2504 = vdwg.mxu0
  %v2505 = vld [vmem:[%s3] sm:$0xf]
  %v2506 = vld [vmem:[%s3 + $0x4] sm:$0xf]
  %v2507 = vld [vmem:[%s3 + $0x8] sm:$0xf]
  %v2508 = vld [vmem:[%s3 + $0xc] sm:$0xf]
  %v2509 = vld [vmem:[%s3 + $0x10] sm:$0xf]
  %v2510 = vld [vmem:[%s3 + $0x14] sm:$0xf]
  %v2511 = vld [vmem:[%s3 + $0x18] sm:$0xf]
  %v2512 = vld [vmem:[%s3 + $0x1c] sm:$0xf]
  %v2513 = vld [vmem:[%s3 + $0x20] sm:$0xf]
  %v2514 = vld [vmem:[%s3 + $0x24] sm:$0xf]
  %v2515 = vld [vmem:[%s3 + $0x28] sm:$0xf]
  %v2516 = vld [vmem:[%s3 + $0x2c] sm:$0xf]
  %v2517 = vld [vmem:[%s3 + $0x30] sm:$0xf]
  %v2518 = vld [vmem:[%s3 + $0x34] sm:$0xf]
  %v2519 = vld [vmem:[%s3 + $0x38] sm:$0xf]
  %v2520 = vld [vmem:[%s3 + $0x3c] sm:$0xf]
  %v2521 = vld [vmem:[%s3 + $0x40] sm:$0xf]
  %v2522 = vld [vmem:[%s3 + $0x44] sm:$0xf]
  %v2523 = vld [vmem:[%s3 + $0x48] sm:$0xf]
  %v2524 = vld [vmem:[%s3 + $0x4c] sm:$0xf]
  %v2525 = vld [vmem:[%s3 + $0x50] sm:$0xf]
  %v2526 = vld [vmem:[%s3 + $0x54] sm:$0xf]
  %v2527 = vld [vmem:[%s3 + $0x58] sm:$0xf]
  %v2528 = vld [vmem:[%s3 + $0x5c] sm:$0xf]
  %v2529 = vld [vmem:[%s3 + $0x60] sm:$0xf]
  %v2530 = vld [vmem:[%s3 + $0x64] sm:$0xf]
  %v2531 = vld [vmem:[%s3 + $0x68] sm:$0xf]
  %v2532 = vld [vmem:[%s3 + $0x6c] sm:$0xf]
  %v2533 = vld [vmem:[%s3 + $0x70] sm:$0xf]
  %v2534 = vld [vmem:[%s3 + $0x74] sm:$0xf]
  %v2535 = vld [vmem:[%s3 + $0x78] sm:$0xf]
  %v2536 = vld [vmem:[%s3 + $0x7c] sm:$0xf]
  %v2537 = vpack.c.bf16 %v2458, %v2458
  %v2538 = vpack.c.bf16 %v2460, %v2460
  %v2571 = vunpack.c.l.b16 %v2505
  %v2572 = vunpack.c.l.b16 %v2506
  %v2573 = vunpack.c.l.b16 %v2507
  %v2574 = vunpack.c.l.b16 %v2508
  %v2575 = vunpack.c.l.b16 %v2509
  %v2576 = vunpack.c.l.b16 %v2510
  %v2577 = vunpack.c.l.b16 %v2511
  %v2578 = vunpack.c.l.b16 %v2512
  %v2579 = vunpack.c.l.b16 %v2513
  %v2580 = vunpack.c.l.b16 %v2514
  %v2581 = vunpack.c.l.b16 %v2515
  %v2582 = vunpack.c.l.b16 %v2516
  %v2583 = vunpack.c.l.b16 %v2517
  %v2584 = vunpack.c.l.b16 %v2518
  %v2585 = vunpack.c.l.b16 %v2519
  %v2586 = vunpack.c.l.b16 %v2520
  %v2587 = vunpack.c.l.b16 %v2521
  %v2588 = vunpack.c.l.b16 %v2522
  %v2589 = vunpack.c.l.b16 %v2523
  %v2590 = vunpack.c.l.b16 %v2524
  %v2591 = vunpack.c.l.b16 %v2525
  %v2592 = vunpack.c.l.b16 %v2526
  %v2593 = vunpack.c.l.b16 %v2527
  %v2594 = vunpack.c.l.b16 %v2528
  %v2595 = vunpack.c.l.b16 %v2529
  %v2596 = vunpack.c.l.b16 %v2530
  %v2597 = vunpack.c.l.b16 %v2531
  %v2598 = vunpack.c.l.b16 %v2532
  %v2599 = vunpack.c.l.b16 %v2533
  %v2600 = vunpack.c.l.b16 %v2534
  %v2601 = vunpack.c.l.b16 %v2535
  %v2602 = vunpack.c.l.b16 %v2536
  %v2603 = vpack.c.b16 %v2572, %v2571
  %v2604 = vpack.c.b16 %v2574, %v2573
  %v2605 = vpack.c.b16 %v2576, %v2575
  %v2606 = vpack.c.b16 %v2578, %v2577
  %v2607 = vpack.c.b16 %v2580, %v2579
  %v2608 = vpack.c.b16 %v2582, %v2581
  %v2609 = vpack.c.b16 %v2584, %v2583
  %v2610 = vpack.c.b16 %v2586, %v2585
  %v2611 = vpack.c.b16 %v2588, %v2587
  %v2612 = vpack.c.b16 %v2590, %v2589
  %v2613 = vpack.c.b16 %v2592, %v2591
  %v2614 = vpack.c.b16 %v2594, %v2593
  %v2615 = vpack.c.b16 %v2596, %v2595
  %v2616 = vpack.c.b16 %v2598, %v2597
  %v2617 = vpack.c.b16 %v2600, %v2599
  %v2618 = vpack.c.b16 %v2602, %v2601
  %2635 = vmatprep.subr.bf16.mxu0 0
  %2636 = vmatpush1.bf16.msra.mxu0 %v2603
  %2637 = vmatprep.subr.bf16.mxu0 0
  %2638 = vmatpush1.bf16.msra.mxu0 %v2604
  %2639 = vmatprep.subr.bf16.mxu0 0
  %2640 = vmatpush1.bf16.msra.mxu0 %v2605
  %2641 = vmatprep.subr.bf16.mxu0 0
  %2642 = vmatpush1.bf16.msra.mxu0 %v2606
  %2643 = vmatprep.subr.bf16.mxu0 0
  %2644 = vmatpush1.bf16.msra.mxu0 %v2607
  %2645 = vmatprep.subr.bf16.mxu0 0
  %2646 = vmatpush1.bf16.msra.mxu0 %v2608
  %2647 = vmatprep.subr.bf16.mxu0 0
  %2648 = vmatpush1.bf16.msra.mxu0 %v2609
  %2649 = vmatprep.subr.bf16.mxu0 0
  %2650 = vmatpush1.bf16.msra.mxu0 %v2610
  %2651 = vmatprep.subr.bf16.mxu0 0
  %2652 = vmatpush1.bf16.msra.mxu0 %v2611
  %2653 = vmatprep.subr.bf16.mxu0 0
  %2654 = vmatpush1.bf16.msra.mxu0 %v2612
  %2655 = vmatprep.subr.bf16.mxu0 0
  %2656 = vmatpush1.bf16.msra.mxu0 %v2613
  %2657 = vmatprep.subr.bf16.mxu0 0
  %2658 = vmatpush1.bf16.msra.mxu0 %v2614
  %2659 = vmatprep.subr.bf16.mxu0 0
  %2660 = vmatpush1.bf16.msra.mxu0 %v2615
  %2661 = vmatprep.subr.bf16.mxu0 0
  %2662 = vmatpush1.bf16.msra.mxu0 %v2616
  %2663 = vmatprep.subr.bf16.mxu0 0
  %2664 = vmatpush1.bf16.msra.mxu0 %v2617
  %2665 = vmatprep.subr.bf16.mxu0 0
  %2666 = vmatpush1.bf16.msra.mxu0 %v2618
  %2667 = vmatprep.mubr.bf16.mxu0 %v2538
  %2668 = vmatmul.mubr.bf16.gmra.mrb[0].mxu0 %v2537
  %v2669 = vpop.f32.mrb[0].mxu0
  %v2670 = vadd.f32 0.0, %v2669
  %v2671 = vpop.f32.mrb[0].mxu0
  %v2672 = vpop.f32.mrb[0].mxu0
  %v2673 = vpop.f32.mrb[0].mxu0
  %2674 = vdwg.mxu0
  %v2675 = vpack.c.bf16 %v2499, %v2499
  %v2676 = vpack.c.bf16 %v2501, %v2501
  %2677 = vmatprep.subr.bf16.mxu0 0
  %2678 = vmatpush1.bf16.msra.mxu0 %v2603
  %2679 = vmatprep.subr.bf16.mxu0 0
  %2680 = vmatpush1.bf16.msra.mxu0 %v2604
  %2681 = vmatprep.subr.bf16.mxu0 0
  %2682 = vmatpush1.bf16.msra.mxu0 %v2605
  %2683 = vmatprep.subr.bf16.mxu0 0
  %2684 = vmatpush1.bf16.msra.mxu0 %v2606
  %2685 = vmatprep.subr.bf16.mxu0 0
  %2686 = vmatpush1.bf16.msra.mxu0 %v2607
  %2687 = vmatprep.subr.bf16.mxu0 0
  %2688 = vmatpush1.bf16.msra.mxu0 %v2608
  %2689 = vmatprep.subr.bf16.mxu0 0
  %2690 = vmatpush1.bf16.msra.mxu0 %v2609
  %2691 = vmatprep.subr.bf16.mxu0 0
  %2692 = vmatpush1.bf16.msra.mxu0 %v2610
  %2693 = vmatprep.subr.bf16.mxu0 0
  %2694 = vmatpush1.bf16.msra.mxu0 %v2611
  %2695 = vmatprep.subr.bf16.mxu0 0
  %2696 = vmatpush1.bf16.msra.mxu0 %v2612
  %2697 = vmatprep.subr.bf16.mxu0 0
  %2698 = vmatpush1.bf16.msra.mxu0 %v2613
  %2699 = vmatprep.subr.bf16.mxu0 0
  %2700 = vmatpush1.bf16.msra.mxu0 %v2614
  %2701 = vmatprep.subr.bf16.mxu0 0
  %2702 = vmatpush1.bf16.msra.mxu0 %v2615
  %2703 = vmatprep.subr.bf16.mxu0 0
  %2704 = vmatpush1.bf16.msra.mxu0 %v2616
  %2705 = vmatprep.subr.bf16.mxu0 0
  %2706 = vmatpush1.bf16.msra.mxu0 %v2617
  %2707 = vmatprep.subr.bf16.mxu0 0
  %2708 = vmatpush1.bf16.msra.mxu0 %v2618
  %2709 = vmatprep.mubr.bf16.mxu0 %v2676
  %2710 = vmatmul.mubr.bf16.gmra.mrb[0].mxu0 %v2675
  %v2711 = vpop.f32.mrb[0].mxu0
  %v2712 = vadd.f32 0.0, %v2711
  %v2713 = vpop.f32.mrb[0].mxu0
  %v2714 = vpop.f32.mrb[0].mxu0
  %v2715 = vpop.f32.mrb[0].mxu0
  %2716 = vdwg.mxu0
  %2718 = vrot.lane.b32.xlu0 %v2712, 64
  %v2719 = vpop.permute.xlu0 %2718
  %v2721 = vsel %vm39, %v2670, %v2719
  %v2722 = vadd.f32 %v2721, %v1807
  %v2723 = vmax.f32 %v2722, 0.0
  %2724 = vst.msk [vmem:[%s6] sm:$0xff] %vm39, %v2723
  %2726 = vrot.lane.b32.xlu0 %v2723, 64
  %v2727 = vpop.permute.xlu0 %2726
  %s2729 = scalar_lea.vmem %s6, 8
  %2730 = vst.msk [vmem:[%s2729] sm:$0xff] %vm39, %v2727
  // Predicated region
  $region22: #{_lambda_.1} parent=0 // pred_check
    _
  $region23: #{_lambda_.1} parent=0 // pred_check_branch
    %2732 = sbr.rel (0) target = $region25
  $region24: #{_lambda_.1} parent=0 // pred_region
    _
  $region25: #{_lambda_.1} parent=0 // pred_fallthru
    _
  // Predicated region
  $region26: #{_lambda_.1} parent=0 // pred_check
    _
  $region27: #{_lambda_.1} parent=0 // pred_check_branch
    %2734 = sbr.rel (0) target = $region29
  $region28: #{_lambda_.1} parent=0 // pred_region
    _
  $region29: #{_lambda_.1} parent=0 // pred_fallthru
    _
  // Predicated region
  $region30: #{_lambda_.1} parent=0 // pred_check
    _
  $region31: #{_lambda_.1} parent=0 // pred_check_branch
    %2736 = sbr.rel (0) target = $region33
  $region32: #{_lambda_.1} parent=0 // pred_region
    _
  $region33: #{_lambda_.1} parent=0 // pred_fallthru
    _
  // Predicated region
  $region34: #{_lambda_.1} parent=0 // pred_check
    _
  $region35: #{_lambda_.1} parent=0 // pred_check_branch
    %2738 = sbr.rel (0) target = $region37
  $region36: #{_lambda_.1} parent=0 // pred_region
    _
  $region37: #{_lambda_.1} parent=0 // pred_fallthru
    _

</llo_original>
